<compile_context>
chip_gen: v5e
topology: v5e:2x2
jax: 0.10.0
libtpu: 0.0.40
codegen_flags: <defaults>
</compile_context>

<pallas_src>
import jax
import jax.numpy as jnp
from jax.experimental import pallas as pl
from jax.experimental.pallas import tpu as pltpu

HIDDEN = 50


def pde_mlp_kernel(t_ref, r_ref, w1_ref, b1_ref, w2_ref, b2_ref, w3_ref, b3_ref,
                   o_ref):
    # t, r: (1, TM)   w1: (50, 2)  b1: (50, 1)
    # w2: (50, 50)    b2: (50, 1)  w3: (1, 50)  b3: (1, 1)   out: (1, TM)
    t = t_ref[...]
    r = r_ref[...]
    w1 = w1_ref[...]

    # Layer 1: K=2 contraction done as VPU broadcast FMAs (skip the MXU).
    # (50,1)*(1,TM) + (50,1)*(1,TM) + (50,1) -> (50, TM); lane-dense sin.
    h1 = jnp.sin(w1[:, 0:1] * t + w1[:, 1:2] * r + b1_ref[...])

    # Layer 2: 50x50 matmul on the MXU, f32 accumulation, lane-dense sin.
    h2 = jnp.sin(
        jnp.dot(w2_ref[...], h1, preferred_element_type=jnp.float32)
        + b2_ref[...]
    )

    # Layer 3: (1,50) @ (50,TM) -> (1, TM); unmasked lane-dense store.
    o_ref[...] = (
        jnp.dot(w3_ref[...], h2, preferred_element_type=jnp.float32)
        + b3_ref[...]
    )


def _round_up(x, m):
    return ((x + m - 1) // m) * m


def pde_model_forward(t, r, params, *, tm=1024):
    """t, r: (N, 1) float32. Returns (N, 1) float32.

    params = (w1, b1, w2, b2, w3, b3) in torch nn.Linear layout:
      w1 (50, 2), b1 (50, 1), w2 (50, 50), b2 (50, 1), w3 (1, 50), b3 (1, 1)
    """
    w1, b1, w2, b2, w3, b3 = params
    n = t.shape[0]

    # Tile size: multiple of 128, never larger than needed for small batches.
    tm = min(tm, _round_up(n, 128))
    n_pad = _round_up(n, tm)
    grid = (n_pad // tm,)

    # (N,1) -> (1,N) row layout, pad batch (lane axis) to a multiple of tm.
    t_row = jnp.pad(t.reshape(1, n), ((0, 0), (0, n_pad - n)))
    r_row = jnp.pad(r.reshape(1, n), ((0, 0), (0, n_pad - n)))

    batch_spec = pl.BlockSpec((1, tm), lambda i: (0, i))

    def const_spec(shape):
        # Resident weights/biases: constant block index -> fetched once.
        return pl.BlockSpec(shape, lambda i: (0, 0))

    in_specs = [
        batch_spec,                       # t  (1, n_pad)
        batch_spec,                       # r  (1, n_pad)
        const_spec((HIDDEN, 2)),          # w1
        const_spec((HIDDEN, 1)),          # b1
        const_spec((HIDDEN, HIDDEN)),     # w2
        const_spec((HIDDEN, 1)),          # b2
        const_spec((1, HIDDEN)),          # w3
        const_spec((1, 1)),               # b3
    ]
    out_specs = pl.BlockSpec((1, tm), lambda i: (0, i))

    weight_bytes = sum(int(p.size) * 4 for p in params)
    cost = pl.CostEstimate(
        flops=2 * (2 * HIDDEN + HIDDEN * HIDDEN + HIDDEN) * n_pad,
        transcendentals=2 * HIDDEN * n_pad,
        bytes_accessed=12 * n_pad + weight_bytes,
    )

    out_row = pl.pallas_call(
        pde_mlp_kernel,
        out_shape=jax.ShapeDtypeStruct((1, n_pad), jnp.float32),
        grid=grid,
        in_specs=in_specs,
        out_specs=out_specs,
        compiler_params=pltpu.CompilerParams(
            dimension_semantics=("parallel",),
        ),
        cost_estimate=cost,
    )(t_row, r_row, w1, b1, w2, b2, w3, b3)

    # (1, n_pad) -> (N, 1)
    return out_row[0, :n].reshape(n, 1)


def init_params(key):
    """Torch nn.Linear default init: U(-1/sqrt(fan_in), 1/sqrt(fan_in)),
    weights in (out_features, in_features) layout, biases as column vectors."""
    def linear(key, fan_in, fan_out):
        kw, kb = jax.random.split(key)
        bound = 1.0 / jnp.sqrt(fan_in)
        w = jax.random.uniform(kw, (fan_out, fan_in), jnp.float32, -bound, bound)
        b = jax.random.uniform(kb, (fan_out, 1), jnp.float32, -bound, bound)
        return w, b

    k1, k2, k3 = jax.random.split(key, 3)
    w1, b1 = linear(k1, 2, HIDDEN)
    w2, b2 = linear(k2, HIDDEN, HIDDEN)
    w3, b3 = linear(k3, HIDDEN, 1)
    return (w1, b1, w2, b2, w3, b3)


if __name__ == "__main__":
    key = jax.random.PRNGKey(0)
    kp, kt, kr = jax.random.split(key, 3)

    params = init_params(kp)

    # Small shapes for the demo; also exercise a non-multiple-of-128 batch.
    N = 200
    t = jax.random.uniform(kt, (N, 1), jnp.float32)
    r = jax.random.uniform(kr, (N, 1), jnp.float32)

    out = pde_model_forward(t, r, params)
    jax.block_until_ready(out)

    # Pure-JAX reference (matches torch: x @ W^T + b)
    w1, b1, w2, b2, w3, b3 = params
    x = jnp.concatenate([t, r], axis=1)
    ref = jnp.sin(x @ w1.T + b1.T)
    ref = jnp.sin(ref @ w2.T + b2.T)
    ref = ref @ w3.T + b3.T

    assert out.shape == (N, 1)
    assert jnp.allclose(out, ref, atol=1e-5, rtol=1e-5), (
        float(jnp.max(jnp.abs(out - ref)))
    )

    # TODO(synk): for PINN training (jax.grad through this forward), add a
    # custom_vjp or rely on XLA fallback; the fused kernel has no free VJP.
    print("KERNEL_OK")
</pallas_src>

<mosaic_0001>
module attributes {stable_mosaic.version = 11 : i64} {
  func.func @pde_mlp_kernel(%arg0: i32, %arg1: memref<1x256xf32, #tpu.memory_space<vmem>>, %arg2: memref<1x256xf32, #tpu.memory_space<vmem>>, %arg3: memref<50x2xf32, #tpu.memory_space<vmem>>, %arg4: memref<50x1xf32, #tpu.memory_space<vmem>>, %arg5: memref<50x50xf32, #tpu.memory_space<vmem>>, %arg6: memref<50x1xf32, #tpu.memory_space<vmem>>, %arg7: memref<1x50xf32, #tpu.memory_space<vmem>>, %arg8: memref<1x1xf32, #tpu.memory_space<vmem>>, %arg9: memref<1x256xf32, #tpu.memory_space<vmem>>) attributes {dimension_semantics = [#tpu.dimension_semantics<parallel>], iteration_bounds = array<i64: 1>, scalar_prefetch = 0 : i64, scratch_operands = 0 : i64, tpu.core_type = #tpu.core_type<tc>, window_params = [{transform_indices = @transform_0, window_bounds = array<i64: 1, 256>}, {transform_indices = @transform_1, window_bounds = array<i64: 1, 256>}, {pipeline_mode = #tpu.pipeline_mode<synchronous>, transform_indices = @transform_2, window_bounds = array<i64: 50, 2>}, {pipeline_mode = #tpu.pipeline_mode<synchronous>, transform_indices = @transform_3, window_bounds = array<i64: 50, 1>}, {pipeline_mode = #tpu.pipeline_mode<synchronous>, transform_indices = @transform_4, window_bounds = array<i64: 50, 50>}, {pipeline_mode = #tpu.pipeline_mode<synchronous>, transform_indices = @transform_5, window_bounds = array<i64: 50, 1>}, {pipeline_mode = #tpu.pipeline_mode<synchronous>, transform_indices = @transform_6, window_bounds = array<i64: 1, 50>}, {pipeline_mode = #tpu.pipeline_mode<synchronous>, transform_indices = @transform_7, window_bounds = array<i64: 1, 1>}, {transform_indices = @transform_8, window_bounds = array<i64: 1, 256>}]} {
    %c0 = arith.constant 0 : index
    %c0_0 = arith.constant 0 : index
    %0 = vector.load %arg1[%c0, %c0_0] : memref<1x256xf32, #tpu.memory_space<vmem>>, vector<1x256xf32>
    %c0_1 = arith.constant 0 : index
    %c0_2 = arith.constant 0 : index
    %1 = vector.load %arg2[%c0_1, %c0_2] : memref<1x256xf32, #tpu.memory_space<vmem>>, vector<1x256xf32>
    %c0_3 = arith.constant 0 : index
    %c0_4 = arith.constant 0 : index
    %2 = vector.load %arg3[%c0_3, %c0_4] : memref<50x2xf32, #tpu.memory_space<vmem>>, vector<50x2xf32>
    %3 = vector.extract_strided_slice %2 {offsets = [0, 0], sizes = [50, 1], strides = [1, 1]} : vector<50x2xf32> to vector<50x1xf32>
    %4 = vector.broadcast %3 : vector<50x1xf32> to vector<50x256xf32>
    %5 = vector.broadcast %0 : vector<1x256xf32> to vector<50x256xf32>
    %6 = arith.mulf %4, %5 : vector<50x256xf32>
    %7 = vector.extract_strided_slice %2 {offsets = [0, 1], sizes = [50, 1], strides = [1, 1]} : vector<50x2xf32> to vector<50x1xf32>
    %8 = vector.broadcast %7 : vector<50x1xf32> to vector<50x256xf32>
    %9 = vector.broadcast %1 : vector<1x256xf32> to vector<50x256xf32>
    %10 = arith.mulf %8, %9 : vector<50x256xf32>
    %11 = arith.addf %6, %10 : vector<50x256xf32>
    %c0_5 = arith.constant 0 : index
    %c0_6 = arith.constant 0 : index
    %12 = vector.load %arg4[%c0_5, %c0_6] : memref<50x1xf32, #tpu.memory_space<vmem>>, vector<50x1xf32>
    %13 = vector.broadcast %12 : vector<50x1xf32> to vector<50x256xf32>
    %14 = arith.addf %11, %13 : vector<50x256xf32>
    %15 = math.sin %14 : vector<50x256xf32>
    %c0_7 = arith.constant 0 : index
    %c0_8 = arith.constant 0 : index
    %16 = vector.load %arg5[%c0_7, %c0_8] : memref<50x50xf32, #tpu.memory_space<vmem>>, vector<50x50xf32>
    %cst = arith.constant dense<0.000000e+00> : vector<50x256xf32>
    %17 = tpu.matmul %16, %15, %cst {dimension_numbers = #tpu.dot_dimension_numbers<[1], [0], [0], [1], [0, 0, 1, 1], [], []>} : vector<50x50xf32>, vector<50x256xf32>, vector<50x256xf32> -> vector<50x256xf32>
    %c0_9 = arith.constant 0 : index
    %c0_10 = arith.constant 0 : index
    %18 = vector.load %arg6[%c0_9, %c0_10] : memref<50x1xf32, #tpu.memory_space<vmem>>, vector<50x1xf32>
    %19 = vector.broadcast %18 : vector<50x1xf32> to vector<50x256xf32>
    %20 = arith.addf %17, %19 : vector<50x256xf32>
    %21 = math.sin %20 : vector<50x256xf32>
    %c0_11 = arith.constant 0 : index
    %c0_12 = arith.constant 0 : index
    %22 = vector.load %arg7[%c0_11, %c0_12] : memref<1x50xf32, #tpu.memory_space<vmem>>, vector<1x50xf32>
    %cst_13 = arith.constant dense<0.000000e+00> : vector<1x256xf32>
    %23 = tpu.matmul %22, %21, %cst_13 {dimension_numbers = #tpu.dot_dimension_numbers<[1], [0], [0], [1], [0, 0, 1, 1], [], []>} : vector<1x50xf32>, vector<50x256xf32>, vector<1x256xf32> -> vector<1x256xf32>
    %c0_14 = arith.constant 0 : index
    %c0_15 = arith.constant 0 : index
    %24 = vector.load %arg8[%c0_14, %c0_15] : memref<1x1xf32, #tpu.memory_space<vmem>>, vector<1x1xf32>
    %25 = vector.broadcast %24 : vector<1x1xf32> to vector<1x256xf32>
    %26 = arith.addf %23, %25 : vector<1x256xf32>
    %c0_16 = arith.constant 0 : index
    %c0_17 = arith.constant 0 : index
    %27 = vector.load %arg9[%c0_16, %c0_17] : memref<1x256xf32, #tpu.memory_space<vmem>>, vector<1x256xf32>
    tpu.vector_store %arg9[%c0_16, %c0_17], %26 {strides = array<i32>} : memref<1x256xf32, #tpu.memory_space<vmem>>, vector<1x256xf32>,
    return
  }
  func.func @transform_0(%arg0: i32) -> (i32, i32) {
    %c0_i32 = arith.constant 0 : i32
    %c0_i32_0 = arith.constant 0 : i32
    return %c0_i32, %arg0 : i32, i32
  }
  func.func @transform_1(%arg0: i32) -> (i32, i32) {
    %c0_i32 = arith.constant 0 : i32
    %c0_i32_0 = arith.constant 0 : i32
    return %c0_i32, %arg0 : i32, i32
  }
  func.func @transform_2(%arg0: i32) -> (i32, i32) {
    %c0_i32 = arith.constant 0 : i32
    %c0_i32_0 = arith.constant 0 : i32
    %c0_i32_1 = arith.constant 0 : i32
    return %c0_i32, %c0_i32_0 : i32, i32
  }
  func.func @transform_3(%arg0: i32) -> (i32, i32) {
    %c0_i32 = arith.constant 0 : i32
    %c0_i32_0 = arith.constant 0 : i32
    %c0_i32_1 = arith.constant 0 : i32
    return %c0_i32, %c0_i32_0 : i32, i32
  }
  func.func @transform_4(%arg0: i32) -> (i32, i32) {
    %c0_i32 = arith.constant 0 : i32
    %c0_i32_0 = arith.constant 0 : i32
    %c0_i32_1 = arith.constant 0 : i32
    return %c0_i32, %c0_i32_0 : i32, i32
  }
  func.func @transform_5(%arg0: i32) -> (i32, i32) {
    %c0_i32 = arith.constant 0 : i32
    %c0_i32_0 = arith.constant 0 : i32
    %c0_i32_1 = arith.constant 0 : i32
    return %c0_i32, %c0_i32_0 : i32, i32
  }
  func.func @transform_6(%arg0: i32) -> (i32, i32) {
    %c0_i32 = arith.constant 0 : i32
    %c0_i32_0 = arith.constant 0 : i32
    %c0_i32_1 = arith.constant 0 : i32
    return %c0_i32, %c0_i32_0 : i32, i32
  }
  func.func @transform_7(%arg0: i32) -> (i32, i32) {
    %c0_i32 = arith.constant 0 : i32
    %c0_i32_0 = arith.constant 0 : i32
    %c0_i32_1 = arith.constant 0 : i32
    return %c0_i32, %c0_i32_0 : i32, i32
  }
  func.func @transform_8(%arg0: i32) -> (i32, i32) {
    %c0_i32 = arith.constant 0 : i32
    %c0_i32_0 = arith.constant 0 : i32
    return %c0_i32, %arg0 : i32, i32
  }
}

</mosaic_0001>

<llo_original>
// kernel: tpu_custom_call.1
$region0: #{tpu_custom_call.1}
  #allocation0 [shape = 'u32[]', space=smem, size = 0x4, offset = 0x4, fixed_abs, tag = 'smem constant byte address 0x4 - core index']
  #allocation1 [shape = 'u32[72,128]{1,0:T(1,128)}', space=vmem, size = 0x9000, scoped, tag = 'internal scratch']
  #allocation2 [shape = 'f32[1,1]{1,0:T(1,128)S(1)}', space=vmem, size = 0x200, scoped, tag = 'scoped memory for tpu_custom_call.1']
  %s0 = inlined_call_operand.vmem [shape: f32[1,256], index: 0, kind: input, shape index: {}]
  %s1 = inlined_call_operand.vmem [shape: f32[1,256], index: 1, kind: input, shape index: {}]
  %s2 = inlined_call_operand.vmem [shape: f32[50,2], index: 2, kind: input, shape index: {}]
  %s3 = inlined_call_operand.vmem [shape: f32[50,1], index: 3, kind: input, shape index: {}]
  %s4 = inlined_call_operand.vmem [shape: f32[50,50], index: 4, kind: input, shape index: {}]
  %s5 = inlined_call_operand.vmem [shape: f32[50,1], index: 5, kind: input, shape index: {}]
  %s6 = inlined_call_operand.vmem [shape: f32[1,50], index: 6, kind: input, shape index: {}]
  %s7 = inlined_call_operand.<no memory space> [shape: f32[1,1], index: 7, kind: input, shape index: {}]
  %s8 = inlined_call_operand.hbm [shape: f32[1,256], index: 8, kind: output, shape index: {}]
  %s9 = sld [smem:[#allocation0]]
  $region42: #{tpu_custom_call.1} parent=0
    _
  %s11 = ssub.s32 1, %s9
  %s12 = scalar_select 0, %s11, %s9
  %v13 = vstv %s7
  %14 = vst [vmem:[#allocation2] sm:$0x1] %v13
  $region1: #{tpu_custom_call.1} parent=0
    #allocation3 [shape = 'u8[1024]{0}', space=vmem, size = 0x400, scoped, tag = 'output window, operand 0, single buffered']
    #allocation4 [shape = 's32[1]{0}', space=sflag, size = 0x4, scoped, tag = 'scoped memory for tpu_custom_call.1']
    %15 = vsyncpa [#allocation4], 0
    // Predicated region
    $region2: #{tpu_custom_call.1} parent=1 // pred_check
      _
    $region3: #{tpu_custom_call.1} parent=1 // pred_check_branch
      %17 = sbr.rel (0) target = $region5
    $region4: #{tpu_custom_call.1} parent=1 // pred_region
      _
    $region5: #{tpu_custom_call.1} parent=1 // pred_fallthru
      _
    // Predicated region
    $region6: #{tpu_custom_call.1} parent=1 // pred_check
      _
    $region7: #{tpu_custom_call.1} parent=1 // pred_check_branch
      %19 = sbr.rel (0) target = $region9
    $region8: #{tpu_custom_call.1} parent=1 // pred_region
      _
    $region9: #{tpu_custom_call.1} parent=1 // pred_fallthru
      _
    // Predicated region
    $region10: #{tpu_custom_call.1} parent=1 // pred_check
      _
    $region11: #{tpu_custom_call.1} parent=1 // pred_check_branch
      %21 = sbr.rel (0) target = $region13
    $region12: #{tpu_custom_call.1} parent=1 // pred_region
      _
    $region13: #{tpu_custom_call.1} parent=1 // pred_fallthru
      _
    // Predicated region
    $region14: #{tpu_custom_call.1} parent=1 // pred_check
      _
    $region15: #{tpu_custom_call.1} parent=1 // pred_check_branch
      %23 = sbr.rel (0) target = $region17
    $region16: #{tpu_custom_call.1} parent=1 // pred_region
      _
    $region17: #{tpu_custom_call.1} parent=1 // pred_fallthru
      _
    // Predicated region
    $region18: #{tpu_custom_call.1} parent=1 // pred_check
      _
    $region19: #{tpu_custom_call.1} parent=1 // pred_check_branch
      %25 = sbr.rel (0) target = $region21
    $region20: #{tpu_custom_call.1} parent=1 // pred_region
      _
    $region21: #{tpu_custom_call.1} parent=1 // pred_fallthru
      _
    // Predicated region
    $region22: #{tpu_custom_call.1} parent=1 // pred_check
      _
    $region23: #{tpu_custom_call.1} parent=1 // pred_check_branch
      %27 = sbr.rel (0) target = $region25
    $region24: #{tpu_custom_call.1} parent=1 // pred_region
      _
    $region25: #{tpu_custom_call.1} parent=1 // pred_fallthru
      _
    // Predicated region
    $region26: #{tpu_custom_call.1} parent=1 // pred_check
      _
    $region27: #{tpu_custom_call.1} parent=1 // pred_check_branch
      %29 = sbr.rel (0) target = $region29
    $region28: #{tpu_custom_call.1} parent=1 // pred_region
      _
    $region29: #{tpu_custom_call.1} parent=1 // pred_fallthru
      _
    // Predicated region
    $region30: #{tpu_custom_call.1} parent=1 // pred_check
      _
    $region31: #{tpu_custom_call.1} parent=1 // pred_check_branch
      %31 = sbr.rel (0) target = $region33
    $region32: #{tpu_custom_call.1} parent=1 // pred_region
      _
    $region33: #{tpu_custom_call.1} parent=1 // pred_fallthru
      _
    %v32 = vld [vmem:[%s0] sm:$0x3]
    %v33 = vld [vmem:[%s1] sm:$0x3]
    %v34 = vld [vmem:[%s2] sm:$0xff]
    %v35 = vld [vmem:[%s2 + $0x8] sm:$0xff]
    %v36 = vld [vmem:[%s2 + $0x10] sm:$0xff]
    %v37 = vld [vmem:[%s2 + $0x18] sm:$0xff]
    %v38 = vld [vmem:[%s2 + $0x20] sm:$0xff]
    %v39 = vld [vmem:[%s2 + $0x28] sm:$0xff]
    %v40 = vld [vmem:[%s2 + $0x30] sm:$0x3]
    %42 = vset.pattern.permute.xlu0 0
    %43 = vperm.xlu0 %42, %v34
    %v44 = vpop.permute.xlu0 %43
    %47 = vset.pattern.permute.xlu0 0
    %48 = vperm.xlu0 %47, %v35
    %v49 = vpop.permute.xlu0 %48
    %52 = vset.pattern.permute.xlu0 0
    %53 = vperm.xlu0 %52, %v36
    %v54 = vpop.permute.xlu0 %53
    %57 = vset.pattern.permute.xlu0 0
    %58 = vperm.xlu0 %57, %v37
    %v59 = vpop.permute.xlu0 %58
    %62 = vset.pattern.permute.xlu0 0
    %63 = vperm.xlu0 %62, %v38
    %v64 = vpop.permute.xlu0 %63
    %67 = vset.pattern.permute.xlu0 0
    %68 = vperm.xlu0 %67, %v39
    %v69 = vpop.permute.xlu0 %68
    %72 = vset.pattern.permute.xlu0 0
    %73 = vperm.xlu0 %72, %v40
    %v74 = vpop.permute.xlu0 %73
    %v77 = vperm.slane %v32, 0
    %v78 = vperm.slane %v32, 1
    %v81 = vmul.f32 %v44, %v77
    %v82 = vmul.f32 %v44, %v78
    %v83 = vmul.f32 %v49, %v77
    %v84 = vmul.f32 %v49, %v78
    %v85 = vmul.f32 %v54, %v77
    %v86 = vmul.f32 %v54, %v78
    %v87 = vmul.f32 %v59, %v77
    %v88 = vmul.f32 %v59, %v78
    %v89 = vmul.f32 %v64, %v77
    %v90 = vmul.f32 %v64, %v78
    %v91 = vmul.f32 %v69, %v77
    %v92 = vmul.f32 %v69, %v78
    %v93 = vmul.f32 %v74, %v77
    %v94 = vmul.f32 %v74, %v78
    %95 = vset.pattern.permute.xlu0 1
    %96 = vperm.xlu0 %95, %v34
    %v97 = vpop.permute.xlu0 %96
    %99 = vset.pattern.permute.xlu0 1
    %100 = vperm.xlu0 %99, %v35
    %v101 = vpop.permute.xlu0 %100
    %103 = vset.pattern.permute.xlu0 1
    %104 = vperm.xlu0 %103, %v36
    %v105 = vpop.permute.xlu0 %104
    %107 = vset.pattern.permute.xlu0 1
    %108 = vperm.xlu0 %107, %v37
    %v109 = vpop.permute.xlu0 %108
    %111 = vset.pattern.permute.xlu0 1
    %112 = vperm.xlu0 %111, %v38
    %v113 = vpop.permute.xlu0 %112
    %115 = vset.pattern.permute.xlu0 1
    %116 = vperm.xlu0 %115, %v39
    %v117 = vpop.permute.xlu0 %116
    %119 = vset.pattern.permute.xlu0 1
    %120 = vperm.xlu0 %119, %v40
    %v121 = vpop.permute.xlu0 %120
    %v124 = vperm.slane %v33, 0
    %v125 = vperm.slane %v33, 1
    %v128 = vmul.f32 %v97, %v124
    %v129 = vmul.f32 %v97, %v125
    %v130 = vmul.f32 %v101, %v124
    %v131 = vmul.f32 %v101, %v125
    %v132 = vmul.f32 %v105, %v124
    %v133 = vmul.f32 %v105, %v125
    %v134 = vmul.f32 %v109, %v124
    %v135 = vmul.f32 %v109, %v125
    %v136 = vmul.f32 %v113, %v124
    %v137 = vmul.f32 %v113, %v125
    %v138 = vmul.f32 %v117, %v124
    %v139 = vmul.f32 %v117, %v125
    %v140 = vmul.f32 %v121, %v124
    %v141 = vmul.f32 %v121, %v125
    %v142 = vadd.f32 %v81, %v128
    %v143 = vadd.f32 %v82, %v129
    %v144 = vadd.f32 %v83, %v130
    %v145 = vadd.f32 %v84, %v131
    %v146 = vadd.f32 %v85, %v132
    %v147 = vadd.f32 %v86, %v133
    %v148 = vadd.f32 %v87, %v134
    %v149 = vadd.f32 %v88, %v135
    %v150 = vadd.f32 %v89, %v136
    %v151 = vadd.f32 %v90, %v137
    %v152 = vadd.f32 %v91, %v138
    %v153 = vadd.f32 %v92, %v139
    %v154 = vadd.f32 %v93, %v140
    %v155 = vadd.f32 %v94, %v141
    %v156 = vld [vmem:[%s3] sm:$0xff]
    %v157 = vld [vmem:[%s3 + $0x8] sm:$0xff]
    %v158 = vld [vmem:[%s3 + $0x10] sm:$0xff]
    %v159 = vld [vmem:[%s3 + $0x18] sm:$0xff]
    %v160 = vld [vmem:[%s3 + $0x20] sm:$0xff]
    %v161 = vld [vmem:[%s3 + $0x28] sm:$0xff]
    %v162 = vld [vmem:[%s3 + $0x30] sm:$0x3]
    %164 = vset.pattern.permute.xlu0 0
    %165 = vperm.xlu0 %164, %v156
    %v166 = vpop.permute.xlu0 %165
    %169 = vset.pattern.permute.xlu0 0
    %170 = vperm.xlu0 %169, %v157
    %v171 = vpop.permute.xlu0 %170
    %174 = vset.pattern.permute.xlu0 0
    %175 = vperm.xlu0 %174, %v158
    %v176 = vpop.permute.xlu0 %175
    %179 = vset.pattern.permute.xlu0 0
    %180 = vperm.xlu0 %179, %v159
    %v181 = vpop.permute.xlu0 %180
    %184 = vset.pattern.permute.xlu0 0
    %185 = vperm.xlu0 %184, %v160
    %v186 = vpop.permute.xlu0 %185
    %189 = vset.pattern.permute.xlu0 0
    %190 = vperm.xlu0 %189, %v161
    %v191 = vpop.permute.xlu0 %190
    %194 = vset.pattern.permute.xlu0 0
    %195 = vperm.xlu0 %194, %v162
    %v196 = vpop.permute.xlu0 %195
    %v198 = vadd.f32 %v142, %v166
    %v199 = vadd.f32 %v143, %v166
    %v200 = vadd.f32 %v144, %v171
    %v201 = vadd.f32 %v145, %v171
    %v202 = vadd.f32 %v146, %v176
    %v203 = vadd.f32 %v147, %v176
    %v204 = vadd.f32 %v148, %v181
    %v205 = vadd.f32 %v149, %v181
    %v206 = vadd.f32 %v150, %v186
    %v207 = vadd.f32 %v151, %v186
    %v208 = vadd.f32 %v152, %v191
    %v209 = vadd.f32 %v153, %v191
    %v210 = vadd.f32 %v154, %v196
    %v211 = vadd.f32 %v155, %v196
    %v212 = vand.u32 2147483647, %v198
    %vm213 = vcmp.le.f32.partialorder %v212, 0.7853982
    %vm214 = vcmp.lt.s32.totalorder %v198, 0
    %v215 = vand.u32 %v198, 2139095040
    %v216 = vshrl.u32 %v215, 23
    %v217 = vsub.s32 %v216, 127
    %v218 = vand.u32 2147483647, %v198
    %v219 = vand.u32 %v218, 8388607
    %v220 = vor.u32 %v219, 8388608
    %v221 = vsub.s32 0, %v220
    %v222 = vadd.s32 %v217, 1
    %vm223 = vcmp.gt.s32.totalorder %v222, 0
    %v224 = vsel %vm223, %v222, 0
    %v225 = vshrl.u32 %v224, 5
    %v226 = vand.u32 %v224, 31
    %v227 = vsub.s32 32, %v226
    %v228 = vshrl.u32 683565275, %v227
    %v229 = vshll.u32 683565275, %v226
    %v230 = vshrl.u32 2475754826, %v227
    %v231 = vor.u32 %v229, %v230
    %v232 = vshll.u32 2475754826, %v226
    %v233 = vshrl.u32 2131351028, %v227
    %v234 = vor.u32 %v232, %v233
    %v235 = vshll.u32 2131351028, %v226
    %v236 = vshrl.u32 2102212464, %v227
    %v237 = vor.u32 %v235, %v236
    %v238 = vshll.u32 2102212464, %v226
    %v239 = vshrl.u32 920167782, %v227
    %v240 = vor.u32 %v238, %v239
    %v241 = vshll.u32 920167782, %v226
    %v242 = vshrl.u32 1326507024, %v227
    %v243 = vor.u32 %v241, %v242
    %vm244 = vcmp.lt.s32.totalorder %v225, 1
    %vm245 = vcmp.lt.s32.totalorder %v225, 2
    %vm246 = vcmp.lt.s32.totalorder %v225, 3
    %vm247 = vcmp.lt.s32.totalorder %v225, 4
    %v248 = vsel %vm244, %v228, %v231
    %v249 = vsel %vm247, %v237, 2102212464
    %v250 = vsel %vm246, %v234, %v249
    %v251 = vsel %vm245, %v248, %v250
    %v252 = vsel %vm244, %v231, %v234
    %v253 = vsel %vm247, %v240, 920167782
    %v254 = vsel %vm246, %v237, %v253
    %v255 = vsel %vm245, %v252, %v254
    %v256 = vsel %vm244, %v234, %v237
    %v257 = vsel %vm247, %v243, 1326507024
    %v258 = vsel %vm246, %v240, %v257
    %v259 = vsel %vm245, %v256, %v258
    %v260 = vshll.u32 %v220, 8
    %v261 = vand.u32 %v260, 65535
    %v262 = vshrl.u32 %v260, 16
    %v263 = vand.u32 %v259, 65535
    %v264 = vshrl.u32 %v259, 16
    %v265 = vmul.u32 %v261, %v263
    %v266 = vmul.u32 %v261, %v264
    %v267 = vmul.u32 %v262, %v263
    %v268 = vmul.u32 %v262, %v264
    %v269 = vshll.u32 %v266, 16
    %v270 = vshrl.u32 %v266, 16
    %v271 = vshll.u32 %v267, 16
    %v272 = vshrl.u32 %v267, 16
    %vm273 = vc.u32 %v265, %v269
    %v274 = vsel %vm273, 1, 0
    %v275 = vadd.s32 %v265, %v269
    %v276 = vadd.s32 %v268, %v274
    %vm277 = vc.u32 %v275, %v271
    %v278 = vsel %vm277, 1, 0
    %v279 = vadd.s32 %v275, %v271
    %v280 = vadd.s32 %v276, %v278
    %v281 = vadd.s32 %v280, %v270
    %v282 = vadd.s32 %v281, %v272
    %v283 = vand.u32 %v260, 65535
    %v284 = vshrl.u32 %v260, 16
    %v285 = vand.u32 %v255, 65535
    %v286 = vshrl.u32 %v255, 16
    %v287 = vmul.u32 %v283, %v285
    %v288 = vmul.u32 %v283, %v286
    %v289 = vmul.u32 %v284, %v285
    %v290 = vmul.u32 %v284, %v286
    %v291 = vshll.u32 %v288, 16
    %v292 = vshrl.u32 %v288, 16
    %v293 = vshll.u32 %v289, 16
    %v294 = vshrl.u32 %v289, 16
    %vm295 = vc.u32 %v287, %v291
    %v296 = vsel %vm295, 1, 0
    %v297 = vadd.s32 %v287, %v291
    %v298 = vadd.s32 %v290, %v296
    %vm299 = vc.u32 %v297, %v293
    %v300 = vsel %vm299, 1, 0
    %v301 = vadd.s32 %v297, %v293
    %v302 = vadd.s32 %v298, %v300
    %v303 = vadd.s32 %v302, %v292
    %v304 = vadd.s32 %v303, %v294
    %v305 = vmul.u32 %v260, %v251
    %v306 = vadd.s32 %v282, %v301
    %vm307 = vc.u32 %v282, %v301
    %v308 = vadd.s32 %v304, 1
    %v309 = vsel %vm307, %v308, %v304
    %v310 = vadd.s32 %v305, %v309
    %v311 = vadd.s32 %v310, 536870912
    %v312 = vshrl.u32 %v311, 30
    %v313 = vshll.u32 %v312, 30
    %v314 = vsub.s32 %v310, %v313
    %vm315 = vcmp.lt.s32.totalorder %v314, 0
    %v316 = vsub.s32 0, %v314
    %v317 = vsel %vm315, %v316, %v314
    %v318 = vclz %v317
    %v319 = vsub.s32 %v318, 2
    %vm320 = vcmp.gt.s32.totalorder 0, %v319
    %v321 = vsel %vm320, 0, %v319
    %v322 = vsub.s32 32, %v321
    %v323 = vshll.u32 %v314, %v321
    %v324 = vshrl.u32 %v306, %v322
    %v325 = vor.u32 %v323, %v324
    %v326 = vsub.s32 4294967266, %v321
    %v327 = vadd.s32 %v326, 127
    %v328 = vshll.u32 %v327, 23
    %v329 = vor.u32 4788187, %v328
    %v330 = vand.u32 2147483647, %v329
    %v332 = vcvt.s32.f32 %v325
    %v333 = vmul.f32 %v332, %v330
    %v334 = vxor.u32 %v333, 2147483648
    %v335 = vsel %vm214, %v334, %v333
    %v336 = vsub.s32 4, %v312
    %v337 = vsel %vm214, %v336, %v312
    %v338 = vsel %vm213, %v198, %v335
    %v339 = vsel %vm213, 0, %v337
    %v340 = vmul.f32 %v338, %v338
    %v341 = vmul.f32 %v340, -0.001358992
    %v342 = vadd.f32 %v341, 0.041655596
    %v343 = vmul.f32 %v340, %v342
    %v344 = vadd.f32 %v343, -0.4999988
    %v345 = vmul.f32 %v340, %v344
    %v346 = vadd.f32 1.0, %v345
    %v347 = vmul.f32 %v338, %v338
    %v348 = vmul.f32 %v347, -0.00019511016
    %v349 = vadd.f32 %v348, 0.008332121
    %v350 = vmul.f32 %v347, %v349
    %v351 = vadd.f32 %v350, -0.16666654
    %v352 = vmul.f32 %v347, %v351
    %v353 = vadd.f32 %v352, 1.0
    %v354 = vmul.f32 %v353, %v338
    %vm355 = vweird.f32 %v198
    %v356 = vadd.s32 %v339, 3
    %v357 = vand.u32 %v356, 3
    %vm358 = vcmp.lt.s32.totalorder %v357, 2
    %vm359 = vcmp.eq.s32.totalorder %v357, 0
    %v360 = vxor.u32 %v354, 2147483648
    %v361 = vsel %vm359, %v346, %v360
    %vm362 = vcmp.eq.s32.totalorder %v357, 2
    %v363 = vxor.u32 %v346, 2147483648
    %v364 = vsel %vm362, %v363, %v354
    %v365 = vsel %vm358, %v361, %v364
    %v366 = vsel %vm355, nan, %v365
    %v367 = vand.u32 2147483647, %v199
    %vm368 = vcmp.le.f32.partialorder %v367, 0.7853982
    %vm369 = vcmp.lt.s32.totalorder %v199, 0
    %v370 = vand.u32 %v199, 2139095040
    %v371 = vshrl.u32 %v370, 23
    %v372 = vsub.s32 %v371, 127
    %v373 = vand.u32 2147483647, %v199
    %v374 = vand.u32 %v373, 8388607
    %v375 = vor.u32 %v374, 8388608
    %v376 = vsub.s32 0, %v375
    %v377 = vadd.s32 %v372, 1
    %vm378 = vcmp.gt.s32.totalorder %v377, 0
    %v379 = vsel %vm378, %v377, 0
    %v380 = vshrl.u32 %v379, 5
    %v381 = vand.u32 %v379, 31
    %v382 = vsub.s32 32, %v381
    %v383 = vshrl.u32 683565275, %v382
    %v384 = vshll.u32 683565275, %v381
    %v385 = vshrl.u32 2475754826, %v382
    %v386 = vor.u32 %v384, %v385
    %v387 = vshll.u32 2475754826, %v381
    %v388 = vshrl.u32 2131351028, %v382
    %v389 = vor.u32 %v387, %v388
    %v390 = vshll.u32 2131351028, %v381
    %v391 = vshrl.u32 2102212464, %v382
    %v392 = vor.u32 %v390, %v391
    %v393 = vshll.u32 2102212464, %v381
    %v394 = vshrl.u32 920167782, %v382
    %v395 = vor.u32 %v393, %v394
    %v396 = vshll.u32 920167782, %v381
    %v397 = vshrl.u32 1326507024, %v382
    %v398 = vor.u32 %v396, %v397
    %vm399 = vcmp.lt.s32.totalorder %v380, 1
    %vm400 = vcmp.lt.s32.totalorder %v380, 2
    %vm401 = vcmp.lt.s32.totalorder %v380, 3
    %vm402 = vcmp.lt.s32.totalorder %v380, 4
    %v403 = vsel %vm399, %v383, %v386
    %v404 = vsel %vm402, %v392, 2102212464
    %v405 = vsel %vm401, %v389, %v404
    %v406 = vsel %vm400, %v403, %v405
    %v407 = vsel %vm399, %v386, %v389
    %v408 = vsel %vm402, %v395, 920167782
    %v409 = vsel %vm401, %v392, %v408
    %v410 = vsel %vm400, %v407, %v409
    %v411 = vsel %vm399, %v389, %v392
    %v412 = vsel %vm402, %v398, 1326507024
    %v413 = vsel %vm401, %v395, %v412
    %v414 = vsel %vm400, %v411, %v413
    %v415 = vshll.u32 %v375, 8
    %v416 = vand.u32 %v415, 65535
    %v417 = vshrl.u32 %v415, 16
    %v418 = vand.u32 %v414, 65535
    %v419 = vshrl.u32 %v414, 16
    %v420 = vmul.u32 %v416, %v418
    %v421 = vmul.u32 %v416, %v419
    %v422 = vmul.u32 %v417, %v418
    %v423 = vmul.u32 %v417, %v419
    %v424 = vshll.u32 %v421, 16
    %v425 = vshrl.u32 %v421, 16
    %v426 = vshll.u32 %v422, 16
    %v427 = vshrl.u32 %v422, 16
    %vm428 = vc.u32 %v420, %v424
    %v429 = vsel %vm428, 1, 0
    %v430 = vadd.s32 %v420, %v424
    %v431 = vadd.s32 %v423, %v429
    %vm432 = vc.u32 %v430, %v426
    %v433 = vsel %vm432, 1, 0
    %v434 = vadd.s32 %v430, %v426
    %v435 = vadd.s32 %v431, %v433
    %v436 = vadd.s32 %v435, %v425
    %v437 = vadd.s32 %v436, %v427
    %v438 = vand.u32 %v415, 65535
    %v439 = vshrl.u32 %v415, 16
    %v440 = vand.u32 %v410, 65535
    %v441 = vshrl.u32 %v410, 16
    %v442 = vmul.u32 %v438, %v440
    %v443 = vmul.u32 %v438, %v441
    %v444 = vmul.u32 %v439, %v440
    %v445 = vmul.u32 %v439, %v441
    %v446 = vshll.u32 %v443, 16
    %v447 = vshrl.u32 %v443, 16
    %v448 = vshll.u32 %v444, 16
    %v449 = vshrl.u32 %v444, 16
    %vm450 = vc.u32 %v442, %v446
    %v451 = vsel %vm450, 1, 0
    %v452 = vadd.s32 %v442, %v446
    %v453 = vadd.s32 %v445, %v451
    %vm454 = vc.u32 %v452, %v448
    %v455 = vsel %vm454, 1, 0
    %v456 = vadd.s32 %v452, %v448
    %v457 = vadd.s32 %v453, %v455
    %v458 = vadd.s32 %v457, %v447
    %v459 = vadd.s32 %v458, %v449
    %v460 = vmul.u32 %v415, %v406
    %v461 = vadd.s32 %v437, %v456
    %vm462 = vc.u32 %v437, %v456
    %v463 = vadd.s32 %v459, 1
    %v464 = vsel %vm462, %v463, %v459
    %v465 = vadd.s32 %v460, %v464
    %v466 = vadd.s32 %v465, 536870912
    %v467 = vshrl.u32 %v466, 30
    %v468 = vshll.u32 %v467, 30
    %v469 = vsub.s32 %v465, %v468
    %vm470 = vcmp.lt.s32.totalorder %v469, 0
    %v471 = vsub.s32 0, %v469
    %v472 = vsel %vm470, %v471, %v469
    %v473 = vclz %v472
    %v474 = vsub.s32 %v473, 2
    %vm475 = vcmp.gt.s32.totalorder 0, %v474
    %v476 = vsel %vm475, 0, %v474
    %v477 = vsub.s32 32, %v476
    %v478 = vshll.u32 %v469, %v476
    %v479 = vshrl.u32 %v461, %v477
    %v480 = vor.u32 %v478, %v479
    %v481 = vsub.s32 4294967266, %v476
    %v482 = vadd.s32 %v481, 127
    %v483 = vshll.u32 %v482, 23
    %v484 = vor.u32 4788187, %v483
    %v485 = vand.u32 2147483647, %v484
    %v487 = vcvt.s32.f32 %v480
    %v488 = vmul.f32 %v487, %v485
    %v489 = vxor.u32 %v488, 2147483648
    %v490 = vsel %vm369, %v489, %v488
    %v491 = vsub.s32 4, %v467
    %v492 = vsel %vm369, %v491, %v467
    %v493 = vsel %vm368, %v199, %v490
    %v494 = vsel %vm368, 0, %v492
    %v495 = vmul.f32 %v493, %v493
    %v496 = vmul.f32 %v495, -0.001358992
    %v497 = vadd.f32 %v496, 0.041655596
    %v498 = vmul.f32 %v495, %v497
    %v499 = vadd.f32 %v498, -0.4999988
    %v500 = vmul.f32 %v495, %v499
    %v501 = vadd.f32 1.0, %v500
    %v502 = vmul.f32 %v493, %v493
    %v503 = vmul.f32 %v502, -0.00019511016
    %v504 = vadd.f32 %v503, 0.008332121
    %v505 = vmul.f32 %v502, %v504
    %v506 = vadd.f32 %v505, -0.16666654
    %v507 = vmul.f32 %v502, %v506
    %v508 = vadd.f32 %v507, 1.0
    %v509 = vmul.f32 %v508, %v493
    %vm510 = vweird.f32 %v199
    %v511 = vadd.s32 %v494, 3
    %v512 = vand.u32 %v511, 3
    %vm513 = vcmp.lt.s32.totalorder %v512, 2
    %vm514 = vcmp.eq.s32.totalorder %v512, 0
    %v515 = vxor.u32 %v509, 2147483648
    %v516 = vsel %vm514, %v501, %v515
    %vm517 = vcmp.eq.s32.totalorder %v512, 2
    %v518 = vxor.u32 %v501, 2147483648
    %v519 = vsel %vm517, %v518, %v509
    %v520 = vsel %vm513, %v516, %v519
    %v521 = vsel %vm510, nan, %v520
    %v522 = vand.u32 2147483647, %v200
    %vm523 = vcmp.le.f32.partialorder %v522, 0.7853982
    %vm524 = vcmp.lt.s32.totalorder %v200, 0
    %v525 = vand.u32 %v200, 2139095040
    %v526 = vshrl.u32 %v525, 23
    %v527 = vsub.s32 %v526, 127
    %v528 = vand.u32 2147483647, %v200
    %v529 = vand.u32 %v528, 8388607
    %v530 = vor.u32 %v529, 8388608
    %v531 = vsub.s32 0, %v530
    %v532 = vadd.s32 %v527, 1
    %vm533 = vcmp.gt.s32.totalorder %v532, 0
    %v534 = vsel %vm533, %v532, 0
    %v535 = vshrl.u32 %v534, 5
    %v536 = vand.u32 %v534, 31
    %v537 = vsub.s32 32, %v536
    %v538 = vshrl.u32 683565275, %v537
    %v539 = vshll.u32 683565275, %v536
    %v540 = vshrl.u32 2475754826, %v537
    %v541 = vor.u32 %v539, %v540
    %v542 = vshll.u32 2475754826, %v536
    %v543 = vshrl.u32 2131351028, %v537
    %v544 = vor.u32 %v542, %v543
    %v545 = vshll.u32 2131351028, %v536
    %v546 = vshrl.u32 2102212464, %v537
    %v547 = vor.u32 %v545, %v546
    %v548 = vshll.u32 2102212464, %v536
    %v549 = vshrl.u32 920167782, %v537
    %v550 = vor.u32 %v548, %v549
    %v551 = vshll.u32 920167782, %v536
    %v552 = vshrl.u32 1326507024, %v537
    %v553 = vor.u32 %v551, %v552
    %vm554 = vcmp.lt.s32.totalorder %v535, 1
    %vm555 = vcmp.lt.s32.totalorder %v535, 2
    %vm556 = vcmp.lt.s32.totalorder %v535, 3
    %vm557 = vcmp.lt.s32.totalorder %v535, 4
    %v558 = vsel %vm554, %v538, %v541
    %v559 = vsel %vm557, %v547, 2102212464
    %v560 = vsel %vm556, %v544, %v559
    %v561 = vsel %vm555, %v558, %v560
    %v562 = vsel %vm554, %v541, %v544
    %v563 = vsel %vm557, %v550, 920167782
    %v564 = vsel %vm556, %v547, %v563
    %v565 = vsel %vm555, %v562, %v564
    %v566 = vsel %vm554, %v544, %v547
    %v567 = vsel %vm557, %v553, 1326507024
    %v568 = vsel %vm556, %v550, %v567
    %v569 = vsel %vm555, %v566, %v568
    %v570 = vshll.u32 %v530, 8
    %v571 = vand.u32 %v570, 65535
    %v572 = vshrl.u32 %v570, 16
    %v573 = vand.u32 %v569, 65535
    %v574 = vshrl.u32 %v569, 16
    %v575 = vmul.u32 %v571, %v573
    %v576 = vmul.u32 %v571, %v574
    %v577 = vmul.u32 %v572, %v573
    %v578 = vmul.u32 %v572, %v574
    %v579 = vshll.u32 %v576, 16
    %v580 = vshrl.u32 %v576, 16
    %v581 = vshll.u32 %v577, 16
    %v582 = vshrl.u32 %v577, 16
    %vm583 = vc.u32 %v575, %v579
    %v584 = vsel %vm583, 1, 0
    %v585 = vadd.s32 %v575, %v579
    %v586 = vadd.s32 %v578, %v584
    %vm587 = vc.u32 %v585, %v581
    %v588 = vsel %vm587, 1, 0
    %v589 = vadd.s32 %v585, %v581
    %v590 = vadd.s32 %v586, %v588
    %v591 = vadd.s32 %v590, %v580
    %v592 = vadd.s32 %v591, %v582
    %v593 = vand.u32 %v570, 65535
    %v594 = vshrl.u32 %v570, 16
    %v595 = vand.u32 %v565, 65535
    %v596 = vshrl.u32 %v565, 16
    %v597 = vmul.u32 %v593, %v595
    %v598 = vmul.u32 %v593, %v596
    %v599 = vmul.u32 %v594, %v595
    %v600 = vmul.u32 %v594, %v596
    %v601 = vshll.u32 %v598, 16
    %v602 = vshrl.u32 %v598, 16
    %v603 = vshll.u32 %v599, 16
    %v604 = vshrl.u32 %v599, 16
    %vm605 = vc.u32 %v597, %v601
    %v606 = vsel %vm605, 1, 0
    %v607 = vadd.s32 %v597, %v601
    %v608 = vadd.s32 %v600, %v606
    %vm609 = vc.u32 %v607, %v603
    %v610 = vsel %vm609, 1, 0
    %v611 = vadd.s32 %v607, %v603
    %v612 = vadd.s32 %v608, %v610
    %v613 = vadd.s32 %v612, %v602
    %v614 = vadd.s32 %v613, %v604
    %v615 = vmul.u32 %v570, %v561
    %v616 = vadd.s32 %v592, %v611
    %vm617 = vc.u32 %v592, %v611
    %v618 = vadd.s32 %v614, 1
    %v619 = vsel %vm617, %v618, %v614
    %v620 = vadd.s32 %v615, %v619
    %v621 = vadd.s32 %v620, 536870912
    %v622 = vshrl.u32 %v621, 30
    %v623 = vshll.u32 %v622, 30
    %v624 = vsub.s32 %v620, %v623
    %vm625 = vcmp.lt.s32.totalorder %v624, 0
    %v626 = vsub.s32 0, %v624
    %v627 = vsel %vm625, %v626, %v624
    %v628 = vclz %v627
    %v629 = vsub.s32 %v628, 2
    %vm630 = vcmp.gt.s32.totalorder 0, %v629
    %v631 = vsel %vm630, 0, %v629
    %v632 = vsub.s32 32, %v631
    %v633 = vshll.u32 %v624, %v631
    %v634 = vshrl.u32 %v616, %v632
    %v635 = vor.u32 %v633, %v634
    %v636 = vsub.s32 4294967266, %v631
    %v637 = vadd.s32 %v636, 127
    %v638 = vshll.u32 %v637, 23
    %v639 = vor.u32 4788187, %v638
    %v640 = vand.u32 2147483647, %v639
    %v642 = vcvt.s32.f32 %v635
    %v643 = vmul.f32 %v642, %v640
    %v644 = vxor.u32 %v643, 2147483648
    %v645 = vsel %vm524, %v644, %v643
    %v646 = vsub.s32 4, %v622
    %v647 = vsel %vm524, %v646, %v622
    %v648 = vsel %vm523, %v200, %v645
    %v649 = vsel %vm523, 0, %v647
    %v650 = vmul.f32 %v648, %v648
    %v651 = vmul.f32 %v650, -0.001358992
    %v652 = vadd.f32 %v651, 0.041655596
    %v653 = vmul.f32 %v650, %v652
    %v654 = vadd.f32 %v653, -0.4999988
    %v655 = vmul.f32 %v650, %v654
    %v656 = vadd.f32 1.0, %v655
    %v657 = vmul.f32 %v648, %v648
    %v658 = vmul.f32 %v657, -0.00019511016
    %v659 = vadd.f32 %v658, 0.008332121
    %v660 = vmul.f32 %v657, %v659
    %v661 = vadd.f32 %v660, -0.16666654
    %v662 = vmul.f32 %v657, %v661
    %v663 = vadd.f32 %v662, 1.0
    %v664 = vmul.f32 %v663, %v648
    %vm665 = vweird.f32 %v200
    %v666 = vadd.s32 %v649, 3
    %v667 = vand.u32 %v666, 3
    %vm668 = vcmp.lt.s32.totalorder %v667, 2
    %vm669 = vcmp.eq.s32.totalorder %v667, 0
    %v670 = vxor.u32 %v664, 2147483648
    %v671 = vsel %vm669, %v656, %v670
    %vm672 = vcmp.eq.s32.totalorder %v667, 2
    %v673 = vxor.u32 %v656, 2147483648
    %v674 = vsel %vm672, %v673, %v664
    %v675 = vsel %vm668, %v671, %v674
    %v676 = vsel %vm665, nan, %v675
    %v677 = vand.u32 2147483647, %v201
    %vm678 = vcmp.le.f32.partialorder %v677, 0.7853982
    %vm679 = vcmp.lt.s32.totalorder %v201, 0
    %v680 = vand.u32 %v201, 2139095040
    %v681 = vshrl.u32 %v680, 23
    %v682 = vsub.s32 %v681, 127
    %v683 = vand.u32 2147483647, %v201
    %v684 = vand.u32 %v683, 8388607
    %v685 = vor.u32 %v684, 8388608
    %v686 = vsub.s32 0, %v685
    %v687 = vadd.s32 %v682, 1
    %vm688 = vcmp.gt.s32.totalorder %v687, 0
    %v689 = vsel %vm688, %v687, 0
    %v690 = vshrl.u32 %v689, 5
    %v691 = vand.u32 %v689, 31
    %v692 = vsub.s32 32, %v691
    %v693 = vshrl.u32 683565275, %v692
    %v694 = vshll.u32 683565275, %v691
    %v695 = vshrl.u32 2475754826, %v692
    %v696 = vor.u32 %v694, %v695
    %v697 = vshll.u32 2475754826, %v691
    %v698 = vshrl.u32 2131351028, %v692
    %v699 = vor.u32 %v697, %v698
    %v700 = vshll.u32 2131351028, %v691
    %v701 = vshrl.u32 2102212464, %v692
    %v702 = vor.u32 %v700, %v701
    %v703 = vshll.u32 2102212464, %v691
    %v704 = vshrl.u32 920167782, %v692
    %v705 = vor.u32 %v703, %v704
    %v706 = vshll.u32 920167782, %v691
    %v707 = vshrl.u32 1326507024, %v692
    %v708 = vor.u32 %v706, %v707
    %vm709 = vcmp.lt.s32.totalorder %v690, 1
    %vm710 = vcmp.lt.s32.totalorder %v690, 2
    %vm711 = vcmp.lt.s32.totalorder %v690, 3
    %vm712 = vcmp.lt.s32.totalorder %v690, 4
    %v713 = vsel %vm709, %v693, %v696
    %v714 = vsel %vm712, %v702, 2102212464
    %v715 = vsel %vm711, %v699, %v714
    %v716 = vsel %vm710, %v713, %v715
    %v717 = vsel %vm709, %v696, %v699
    %v718 = vsel %vm712, %v705, 920167782
    %v719 = vsel %vm711, %v702, %v718
    %v720 = vsel %vm710, %v717, %v719
    %v721 = vsel %vm709, %v699, %v702
    %v722 = vsel %vm712, %v708, 1326507024
    %v723 = vsel %vm711, %v705, %v722
    %v724 = vsel %vm710, %v721, %v723
    %v725 = vshll.u32 %v685, 8
    %v726 = vand.u32 %v725, 65535
    %v727 = vshrl.u32 %v725, 16
    %v728 = vand.u32 %v724, 65535
    %v729 = vshrl.u32 %v724, 16
    %v730 = vmul.u32 %v726, %v728
    %v731 = vmul.u32 %v726, %v729
    %v732 = vmul.u32 %v727, %v728
    %v733 = vmul.u32 %v727, %v729
    %v734 = vshll.u32 %v731, 16
    %v735 = vshrl.u32 %v731, 16
    %v736 = vshll.u32 %v732, 16
    %v737 = vshrl.u32 %v732, 16
    %vm738 = vc.u32 %v730, %v734
    %v739 = vsel %vm738, 1, 0
    %v740 = vadd.s32 %v730, %v734
    %v741 = vadd.s32 %v733, %v739
    %vm742 = vc.u32 %v740, %v736
    %v743 = vsel %vm742, 1, 0
    %v744 = vadd.s32 %v740, %v736
    %v745 = vadd.s32 %v741, %v743
    %v746 = vadd.s32 %v745, %v735
    %v747 = vadd.s32 %v746, %v737
    %v748 = vand.u32 %v725, 65535
    %v749 = vshrl.u32 %v725, 16
    %v750 = vand.u32 %v720, 65535
    %v751 = vshrl.u32 %v720, 16
    %v752 = vmul.u32 %v748, %v750
    %v753 = vmul.u32 %v748, %v751
    %v754 = vmul.u32 %v749, %v750
    %v755 = vmul.u32 %v749, %v751
    %v756 = vshll.u32 %v753, 16
    %v757 = vshrl.u32 %v753, 16
    %v758 = vshll.u32 %v754, 16
    %v759 = vshrl.u32 %v754, 16
    %vm760 = vc.u32 %v752, %v756
    %v761 = vsel %vm760, 1, 0
    %v762 = vadd.s32 %v752, %v756
    %v763 = vadd.s32 %v755, %v761
    %vm764 = vc.u32 %v762, %v758
    %v765 = vsel %vm764, 1, 0
    %v766 = vadd.s32 %v762, %v758
    %v767 = vadd.s32 %v763, %v765
    %v768 = vadd.s32 %v767, %v757
    %v769 = vadd.s32 %v768, %v759
    %v770 = vmul.u32 %v725, %v716
    %v771 = vadd.s32 %v747, %v766
    %vm772 = vc.u32 %v747, %v766
    %v773 = vadd.s32 %v769, 1
    %v774 = vsel %vm772, %v773, %v769
    %v775 = vadd.s32 %v770, %v774
    %v776 = vadd.s32 %v775, 536870912
    %v777 = vshrl.u32 %v776, 30
    %v778 = vshll.u32 %v777, 30
    %v779 = vsub.s32 %v775, %v778
    %vm780 = vcmp.lt.s32.totalorder %v779, 0
    %v781 = vsub.s32 0, %v779
    %v782 = vsel %vm780, %v781, %v779
    %v783 = vclz %v782
    %v784 = vsub.s32 %v783, 2
    %vm785 = vcmp.gt.s32.totalorder 0, %v784
    %v786 = vsel %vm785, 0, %v784
    %v787 = vsub.s32 32, %v786
    %v788 = vshll.u32 %v779, %v786
    %v789 = vshrl.u32 %v771, %v787
    %v790 = vor.u32 %v788, %v789
    %v791 = vsub.s32 4294967266, %v786
    %v792 = vadd.s32 %v791, 127
    %v793 = vshll.u32 %v792, 23
    %v794 = vor.u32 4788187, %v793
    %v795 = vand.u32 2147483647, %v794
    %v797 = vcvt.s32.f32 %v790
    %v798 = vmul.f32 %v797, %v795
    %v799 = vxor.u32 %v798, 2147483648
    %v800 = vsel %vm679, %v799, %v798
    %v801 = vsub.s32 4, %v777
    %v802 = vsel %vm679, %v801, %v777
    %v803 = vsel %vm678, %v201, %v800
    %v804 = vsel %vm678, 0, %v802
    %v805 = vmul.f32 %v803, %v803
    %v806 = vmul.f32 %v805, -0.001358992
    %v807 = vadd.f32 %v806, 0.041655596
    %v808 = vmul.f32 %v805, %v807
    %v809 = vadd.f32 %v808, -0.4999988
    %v810 = vmul.f32 %v805, %v809
    %v811 = vadd.f32 1.0, %v810
    %v812 = vmul.f32 %v803, %v803
    %v813 = vmul.f32 %v812, -0.00019511016
    %v814 = vadd.f32 %v813, 0.008332121
    %v815 = vmul.f32 %v812, %v814
    %v816 = vadd.f32 %v815, -0.16666654
    %v817 = vmul.f32 %v812, %v816
    %v818 = vadd.f32 %v817, 1.0
    %v819 = vmul.f32 %v818, %v803
    %vm820 = vweird.f32 %v201
    %v821 = vadd.s32 %v804, 3
    %v822 = vand.u32 %v821, 3
    %vm823 = vcmp.lt.s32.totalorder %v822, 2
    %vm824 = vcmp.eq.s32.totalorder %v822, 0
    %v825 = vxor.u32 %v819, 2147483648
    %v826 = vsel %vm824, %v811, %v825
    %vm827 = vcmp.eq.s32.totalorder %v822, 2
    %v828 = vxor.u32 %v811, 2147483648
    %v829 = vsel %vm827, %v828, %v819
    %v830 = vsel %vm823, %v826, %v829
    %v831 = vsel %vm820, nan, %v830
    %v832 = vand.u32 2147483647, %v202
    %vm833 = vcmp.le.f32.partialorder %v832, 0.7853982
    %vm834 = vcmp.lt.s32.totalorder %v202, 0
    %v835 = vand.u32 %v202, 2139095040
    %v836 = vshrl.u32 %v835, 23
    %v837 = vsub.s32 %v836, 127
    %v838 = vand.u32 2147483647, %v202
    %v839 = vand.u32 %v838, 8388607
    %v840 = vor.u32 %v839, 8388608
    %v841 = vsub.s32 0, %v840
    %v842 = vadd.s32 %v837, 1
    %vm843 = vcmp.gt.s32.totalorder %v842, 0
    %v844 = vsel %vm843, %v842, 0
    %v845 = vshrl.u32 %v844, 5
    %v846 = vand.u32 %v844, 31
    %v847 = vsub.s32 32, %v846
    %v848 = vshrl.u32 683565275, %v847
    %v849 = vshll.u32 683565275, %v846
    %v850 = vshrl.u32 2475754826, %v847
    %v851 = vor.u32 %v849, %v850
    %v852 = vshll.u32 2475754826, %v846
    %v853 = vshrl.u32 2131351028, %v847
    %v854 = vor.u32 %v852, %v853
    %v855 = vshll.u32 2131351028, %v846
    %v856 = vshrl.u32 2102212464, %v847
    %v857 = vor.u32 %v855, %v856
    %v858 = vshll.u32 2102212464, %v846
    %v859 = vshrl.u32 920167782, %v847
    %v860 = vor.u32 %v858, %v859
    %v861 = vshll.u32 920167782, %v846
    %v862 = vshrl.u32 1326507024, %v847
    %v863 = vor.u32 %v861, %v862
    %vm864 = vcmp.lt.s32.totalorder %v845, 1
    %vm865 = vcmp.lt.s32.totalorder %v845, 2
    %vm866 = vcmp.lt.s32.totalorder %v845, 3
    %vm867 = vcmp.lt.s32.totalorder %v845, 4
    %v868 = vsel %vm864, %v848, %v851
    %v869 = vsel %vm867, %v857, 2102212464
    %v870 = vsel %vm866, %v854, %v869
    %v871 = vsel %vm865, %v868, %v870
    %v872 = vsel %vm864, %v851, %v854
    %v873 = vsel %vm867, %v860, 920167782
    %v874 = vsel %vm866, %v857, %v873
    %v875 = vsel %vm865, %v872, %v874
    %v876 = vsel %vm864, %v854, %v857
    %v877 = vsel %vm867, %v863, 1326507024
    %v878 = vsel %vm866, %v860, %v877
    %v879 = vsel %vm865, %v876, %v878
    %v880 = vshll.u32 %v840, 8
    %v881 = vand.u32 %v880, 65535
    %v882 = vshrl.u32 %v880, 16
    %v883 = vand.u32 %v879, 65535
    %v884 = vshrl.u32 %v879, 16
    %v885 = vmul.u32 %v881, %v883
    %v886 = vmul.u32 %v881, %v884
    %v887 = vmul.u32 %v882, %v883
    %v888 = vmul.u32 %v882, %v884
    %v889 = vshll.u32 %v886, 16
    %v890 = vshrl.u32 %v886, 16
    %v891 = vshll.u32 %v887, 16
    %v892 = vshrl.u32 %v887, 16
    %vm893 = vc.u32 %v885, %v889
    %v894 = vsel %vm893, 1, 0
    %v895 = vadd.s32 %v885, %v889
    %v896 = vadd.s32 %v888, %v894
    %vm897 = vc.u32 %v895, %v891
    %v898 = vsel %vm897, 1, 0
    %v899 = vadd.s32 %v895, %v891
    %v900 = vadd.s32 %v896, %v898
    %v901 = vadd.s32 %v900, %v890
    %v902 = vadd.s32 %v901, %v892
    %v903 = vand.u32 %v880, 65535
    %v904 = vshrl.u32 %v880, 16
    %v905 = vand.u32 %v875, 65535
    %v906 = vshrl.u32 %v875, 16
    %v907 = vmul.u32 %v903, %v905
    %v908 = vmul.u32 %v903, %v906
    %v909 = vmul.u32 %v904, %v905
    %v910 = vmul.u32 %v904, %v906
    %v911 = vshll.u32 %v908, 16
    %v912 = vshrl.u32 %v908, 16
    %v913 = vshll.u32 %v909, 16
    %v914 = vshrl.u32 %v909, 16
    %vm915 = vc.u32 %v907, %v911
    %v916 = vsel %vm915, 1, 0
    %v917 = vadd.s32 %v907, %v911
    %v918 = vadd.s32 %v910, %v916
    %vm919 = vc.u32 %v917, %v913
    %v920 = vsel %vm919, 1, 0
    %v921 = vadd.s32 %v917, %v913
    %v922 = vadd.s32 %v918, %v920
    %v923 = vadd.s32 %v922, %v912
    %v924 = vadd.s32 %v923, %v914
    %v925 = vmul.u32 %v880, %v871
    %v926 = vadd.s32 %v902, %v921
    %vm927 = vc.u32 %v902, %v921
    %v928 = vadd.s32 %v924, 1
    %v929 = vsel %vm927, %v928, %v924
    %v930 = vadd.s32 %v925, %v929
    %v931 = vadd.s32 %v930, 536870912
    %v932 = vshrl.u32 %v931, 30
    %v933 = vshll.u32 %v932, 30
    %v934 = vsub.s32 %v930, %v933
    %vm935 = vcmp.lt.s32.totalorder %v934, 0
    %v936 = vsub.s32 0, %v934
    %v937 = vsel %vm935, %v936, %v934
    %v938 = vclz %v937
    %v939 = vsub.s32 %v938, 2
    %vm940 = vcmp.gt.s32.totalorder 0, %v939
    %v941 = vsel %vm940, 0, %v939
    %v942 = vsub.s32 32, %v941
    %v943 = vshll.u32 %v934, %v941
    %v944 = vshrl.u32 %v926, %v942
    %v945 = vor.u32 %v943, %v944
    %v946 = vsub.s32 4294967266, %v941
    %v947 = vadd.s32 %v946, 127
    %v948 = vshll.u32 %v947, 23
    %v949 = vor.u32 4788187, %v948
    %v950 = vand.u32 2147483647, %v949
    %v952 = vcvt.s32.f32 %v945
    %v953 = vmul.f32 %v952, %v950
    %v954 = vxor.u32 %v953, 2147483648
    %v955 = vsel %vm834, %v954, %v953
    %v956 = vsub.s32 4, %v932
    %v957 = vsel %vm834, %v956, %v932
    %v958 = vsel %vm833, %v202, %v955
    %v959 = vsel %vm833, 0, %v957
    %v960 = vmul.f32 %v958, %v958
    %v961 = vmul.f32 %v960, -0.001358992
    %v962 = vadd.f32 %v961, 0.041655596
    %v963 = vmul.f32 %v960, %v962
    %v964 = vadd.f32 %v963, -0.4999988
    %v965 = vmul.f32 %v960, %v964
    %v966 = vadd.f32 1.0, %v965
    %v967 = vmul.f32 %v958, %v958
    %v968 = vmul.f32 %v967, -0.00019511016
    %v969 = vadd.f32 %v968, 0.008332121
    %v970 = vmul.f32 %v967, %v969
    %v971 = vadd.f32 %v970, -0.16666654
    %v972 = vmul.f32 %v967, %v971
    %v973 = vadd.f32 %v972, 1.0
    %v974 = vmul.f32 %v973, %v958
    %vm975 = vweird.f32 %v202
    %v976 = vadd.s32 %v959, 3
    %v977 = vand.u32 %v976, 3
    %vm978 = vcmp.lt.s32.totalorder %v977, 2
    %vm979 = vcmp.eq.s32.totalorder %v977, 0
    %v980 = vxor.u32 %v974, 2147483648
    %v981 = vsel %vm979, %v966, %v980
    %vm982 = vcmp.eq.s32.totalorder %v977, 2
    %v983 = vxor.u32 %v966, 2147483648
    %v984 = vsel %vm982, %v983, %v974
    %v985 = vsel %vm978, %v981, %v984
    %v986 = vsel %vm975, nan, %v985
    %v987 = vand.u32 2147483647, %v203
    %vm988 = vcmp.le.f32.partialorder %v987, 0.7853982
    %vm989 = vcmp.lt.s32.totalorder %v203, 0
    %v990 = vand.u32 %v203, 2139095040
    %v991 = vshrl.u32 %v990, 23
    %v992 = vsub.s32 %v991, 127
    %v993 = vand.u32 2147483647, %v203
    %v994 = vand.u32 %v993, 8388607
    %v995 = vor.u32 %v994, 8388608
    %v996 = vsub.s32 0, %v995
    %v997 = vadd.s32 %v992, 1
    %vm998 = vcmp.gt.s32.totalorder %v997, 0
    %v999 = vsel %vm998, %v997, 0
    %v1000 = vshrl.u32 %v999, 5
    %v1001 = vand.u32 %v999, 31
    %v1002 = vsub.s32 32, %v1001
    %v1003 = vshrl.u32 683565275, %v1002
    %v1004 = vshll.u32 683565275, %v1001
    %v1005 = vshrl.u32 2475754826, %v1002
    %v1006 = vor.u32 %v1004, %v1005
    %v1007 = vshll.u32 2475754826, %v1001
    %v1008 = vshrl.u32 2131351028, %v1002
    %v1009 = vor.u32 %v1007, %v1008
    %v1010 = vshll.u32 2131351028, %v1001
    %v1011 = vshrl.u32 2102212464, %v1002
    %v1012 = vor.u32 %v1010, %v1011
    %v1013 = vshll.u32 2102212464, %v1001
    %v1014 = vshrl.u32 920167782, %v1002
    %v1015 = vor.u32 %v1013, %v1014
    %v1016 = vshll.u32 920167782, %v1001
    %v1017 = vshrl.u32 1326507024, %v1002
    %v1018 = vor.u32 %v1016, %v1017
    %vm1019 = vcmp.lt.s32.totalorder %v1000, 1
    %vm1020 = vcmp.lt.s32.totalorder %v1000, 2
    %vm1021 = vcmp.lt.s32.totalorder %v1000, 3
    %vm1022 = vcmp.lt.s32.totalorder %v1000, 4
    %v1023 = vsel %vm1019, %v1003, %v1006
    %v1024 = vsel %vm1022, %v1012, 2102212464
    %v1025 = vsel %vm1021, %v1009, %v1024
    %v1026 = vsel %vm1020, %v1023, %v1025
    %v1027 = vsel %vm1019, %v1006, %v1009
    %v1028 = vsel %vm1022, %v1015, 920167782
    %v1029 = vsel %vm1021, %v1012, %v1028
    %v1030 = vsel %vm1020, %v1027, %v1029
    %v1031 = vsel %vm1019, %v1009, %v1012
    %v1032 = vsel %vm1022, %v1018, 1326507024
    %v1033 = vsel %vm1021, %v1015, %v1032
    %v1034 = vsel %vm1020, %v1031, %v1033
    %v1035 = vshll.u32 %v995, 8
    %v1036 = vand.u32 %v1035, 65535
    %v1037 = vshrl.u32 %v1035, 16
    %v1038 = vand.u32 %v1034, 65535
    %v1039 = vshrl.u32 %v1034, 16
    %v1040 = vmul.u32 %v1036, %v1038
    %v1041 = vmul.u32 %v1036, %v1039
    %v1042 = vmul.u32 %v1037, %v1038
    %v1043 = vmul.u32 %v1037, %v1039
    %v1044 = vshll.u32 %v1041, 16
    %v1045 = vshrl.u32 %v1041, 16
    %v1046 = vshll.u32 %v1042, 16
    %v1047 = vshrl.u32 %v1042, 16
    %vm1048 = vc.u32 %v1040, %v1044
    %v1049 = vsel %vm1048, 1, 0
    %v1050 = vadd.s32 %v1040, %v1044
    %v1051 = vadd.s32 %v1043, %v1049
    %vm1052 = vc.u32 %v1050, %v1046
    %v1053 = vsel %vm1052, 1, 0
    %v1054 = vadd.s32 %v1050, %v1046
    %v1055 = vadd.s32 %v1051, %v1053
    %v1056 = vadd.s32 %v1055, %v1045
    %v1057 = vadd.s32 %v1056, %v1047
    %v1058 = vand.u32 %v1035, 65535
    %v1059 = vshrl.u32 %v1035, 16
    %v1060 = vand.u32 %v1030, 65535
    %v1061 = vshrl.u32 %v1030, 16
    %v1062 = vmul.u32 %v1058, %v1060
    %v1063 = vmul.u32 %v1058, %v1061
    %v1064 = vmul.u32 %v1059, %v1060
    %v1065 = vmul.u32 %v1059, %v1061
    %v1066 = vshll.u32 %v1063, 16
    %v1067 = vshrl.u32 %v1063, 16
    %v1068 = vshll.u32 %v1064, 16
    %v1069 = vshrl.u32 %v1064, 16
    %vm1070 = vc.u32 %v1062, %v1066
    %v1071 = vsel %vm1070, 1, 0
    %v1072 = vadd.s32 %v1062, %v1066
    %v1073 = vadd.s32 %v1065, %v1071
    %vm1074 = vc.u32 %v1072, %v1068
    %v1075 = vsel %vm1074, 1, 0
    %v1076 = vadd.s32 %v1072, %v1068
    %v1077 = vadd.s32 %v1073, %v1075
    %v1078 = vadd.s32 %v1077, %v1067
    %v1079 = vadd.s32 %v1078, %v1069
    %v1080 = vmul.u32 %v1035, %v1026
    %v1081 = vadd.s32 %v1057, %v1076
    %vm1082 = vc.u32 %v1057, %v1076
    %v1083 = vadd.s32 %v1079, 1
    %v1084 = vsel %vm1082, %v1083, %v1079
    %v1085 = vadd.s32 %v1080, %v1084
    %v1086 = vadd.s32 %v1085, 536870912
    %v1087 = vshrl.u32 %v1086, 30
    %v1088 = vshll.u32 %v1087, 30
    %v1089 = vsub.s32 %v1085, %v1088
    %vm1090 = vcmp.lt.s32.totalorder %v1089, 0
    %v1091 = vsub.s32 0, %v1089
    %v1092 = vsel %vm1090, %v1091, %v1089
    %v1093 = vclz %v1092
    %v1094 = vsub.s32 %v1093, 2
    %vm1095 = vcmp.gt.s32.totalorder 0, %v1094
    %v1096 = vsel %vm1095, 0, %v1094
    %v1097 = vsub.s32 32, %v1096
    %v1098 = vshll.u32 %v1089, %v1096
    %v1099 = vshrl.u32 %v1081, %v1097
    %v1100 = vor.u32 %v1098, %v1099
    %v1101 = vsub.s32 4294967266, %v1096
    %v1102 = vadd.s32 %v1101, 127
    %v1103 = vshll.u32 %v1102, 23
    %v1104 = vor.u32 4788187, %v1103
    %v1105 = vand.u32 2147483647, %v1104
    %v1107 = vcvt.s32.f32 %v1100
    %v1108 = vmul.f32 %v1107, %v1105
    %v1109 = vxor.u32 %v1108, 2147483648
    %v1110 = vsel %vm989, %v1109, %v1108
    %v1111 = vsub.s32 4, %v1087
    %v1112 = vsel %vm989, %v1111, %v1087
    %v1113 = vsel %vm988, %v203, %v1110
    %v1114 = vsel %vm988, 0, %v1112
    %v1115 = vmul.f32 %v1113, %v1113
    %v1116 = vmul.f32 %v1115, -0.001358992
    %v1117 = vadd.f32 %v1116, 0.041655596
    %v1118 = vmul.f32 %v1115, %v1117
    %v1119 = vadd.f32 %v1118, -0.4999988
    %v1120 = vmul.f32 %v1115, %v1119
    %v1121 = vadd.f32 1.0, %v1120
    %v1122 = vmul.f32 %v1113, %v1113
    %v1123 = vmul.f32 %v1122, -0.00019511016
    %v1124 = vadd.f32 %v1123, 0.008332121
    %v1125 = vmul.f32 %v1122, %v1124
    %v1126 = vadd.f32 %v1125, -0.16666654
    %v1127 = vmul.f32 %v1122, %v1126
    %v1128 = vadd.f32 %v1127, 1.0
    %v1129 = vmul.f32 %v1128, %v1113
    %vm1130 = vweird.f32 %v203
    %v1131 = vadd.s32 %v1114, 3
    %v1132 = vand.u32 %v1131, 3
    %vm1133 = vcmp.lt.s32.totalorder %v1132, 2
    %vm1134 = vcmp.eq.s32.totalorder %v1132, 0
    %v1135 = vxor.u32 %v1129, 2147483648
    %v1136 = vsel %vm1134, %v1121, %v1135
    %vm1137 = vcmp.eq.s32.totalorder %v1132, 2
    %v1138 = vxor.u32 %v1121, 2147483648
    %v1139 = vsel %vm1137, %v1138, %v1129
    %v1140 = vsel %vm1133, %v1136, %v1139
    %v1141 = vsel %vm1130, nan, %v1140
    %v1142 = vand.u32 2147483647, %v204
    %vm1143 = vcmp.le.f32.partialorder %v1142, 0.7853982
    %vm1144 = vcmp.lt.s32.totalorder %v204, 0
    %v1145 = vand.u32 %v204, 2139095040
    %v1146 = vshrl.u32 %v1145, 23
    %v1147 = vsub.s32 %v1146, 127
    %v1148 = vand.u32 2147483647, %v204
    %v1149 = vand.u32 %v1148, 8388607
    %v1150 = vor.u32 %v1149, 8388608
    %v1151 = vsub.s32 0, %v1150
    %v1152 = vadd.s32 %v1147, 1
    %vm1153 = vcmp.gt.s32.totalorder %v1152, 0
    %v1154 = vsel %vm1153, %v1152, 0
    %v1155 = vshrl.u32 %v1154, 5
    %v1156 = vand.u32 %v1154, 31
    %v1157 = vsub.s32 32, %v1156
    %v1158 = vshrl.u32 683565275, %v1157
    %v1159 = vshll.u32 683565275, %v1156
    %v1160 = vshrl.u32 2475754826, %v1157
    %v1161 = vor.u32 %v1159, %v1160
    %v1162 = vshll.u32 2475754826, %v1156
    %v1163 = vshrl.u32 2131351028, %v1157
    %v1164 = vor.u32 %v1162, %v1163
    %v1165 = vshll.u32 2131351028, %v1156
    %v1166 = vshrl.u32 2102212464, %v1157
    %v1167 = vor.u32 %v1165, %v1166
    %v1168 = vshll.u32 2102212464, %v1156
    %v1169 = vshrl.u32 920167782, %v1157
    %v1170 = vor.u32 %v1168, %v1169
    %v1171 = vshll.u32 920167782, %v1156
    %v1172 = vshrl.u32 1326507024, %v1157
    %v1173 = vor.u32 %v1171, %v1172
    %vm1174 = vcmp.lt.s32.totalorder %v1155, 1
    %vm1175 = vcmp.lt.s32.totalorder %v1155, 2
    %vm1176 = vcmp.lt.s32.totalorder %v1155, 3
    %vm1177 = vcmp.lt.s32.totalorder %v1155, 4
    %v1178 = vsel %vm1174, %v1158, %v1161
    %v1179 = vsel %vm1177, %v1167, 2102212464
    %v1180 = vsel %vm1176, %v1164, %v1179
    %v1181 = vsel %vm1175, %v1178, %v1180
    %v1182 = vsel %vm1174, %v1161, %v1164
    %v1183 = vsel %vm1177, %v1170, 920167782
    %v1184 = vsel %vm1176, %v1167, %v1183
    %v1185 = vsel %vm1175, %v1182, %v1184
    %v1186 = vsel %vm1174, %v1164, %v1167
    %v1187 = vsel %vm1177, %v1173, 1326507024
    %v1188 = vsel %vm1176, %v1170, %v1187
    %v1189 = vsel %vm1175, %v1186, %v1188
    %v1190 = vshll.u32 %v1150, 8
    %v1191 = vand.u32 %v1190, 65535
    %v1192 = vshrl.u32 %v1190, 16
    %v1193 = vand.u32 %v1189, 65535
    %v1194 = vshrl.u32 %v1189, 16
    %v1195 = vmul.u32 %v1191, %v1193
    %v1196 = vmul.u32 %v1191, %v1194
    %v1197 = vmul.u32 %v1192, %v1193
    %v1198 = vmul.u32 %v1192, %v1194
    %v1199 = vshll.u32 %v1196, 16
    %v1200 = vshrl.u32 %v1196, 16
    %v1201 = vshll.u32 %v1197, 16
    %v1202 = vshrl.u32 %v1197, 16
    %vm1203 = vc.u32 %v1195, %v1199
    %v1204 = vsel %vm1203, 1, 0
    %v1205 = vadd.s32 %v1195, %v1199
    %v1206 = vadd.s32 %v1198, %v1204
    %vm1207 = vc.u32 %v1205, %v1201
    %v1208 = vsel %vm1207, 1, 0
    %v1209 = vadd.s32 %v1205, %v1201
    %v1210 = vadd.s32 %v1206, %v1208
    %v1211 = vadd.s32 %v1210, %v1200
    %v1212 = vadd.s32 %v1211, %v1202
    %v1213 = vand.u32 %v1190, 65535
    %v1214 = vshrl.u32 %v1190, 16
    %v1215 = vand.u32 %v1185, 65535
    %v1216 = vshrl.u32 %v1185, 16
    %v1217 = vmul.u32 %v1213, %v1215
    %v1218 = vmul.u32 %v1213, %v1216
    %v1219 = vmul.u32 %v1214, %v1215
    %v1220 = vmul.u32 %v1214, %v1216
    %v1221 = vshll.u32 %v1218, 16
    %v1222 = vshrl.u32 %v1218, 16
    %v1223 = vshll.u32 %v1219, 16
    %v1224 = vshrl.u32 %v1219, 16
    %vm1225 = vc.u32 %v1217, %v1221
    %v1226 = vsel %vm1225, 1, 0
    %v1227 = vadd.s32 %v1217, %v1221
    %v1228 = vadd.s32 %v1220, %v1226
    %vm1229 = vc.u32 %v1227, %v1223
    %v1230 = vsel %vm1229, 1, 0
    %v1231 = vadd.s32 %v1227, %v1223
    %v1232 = vadd.s32 %v1228, %v1230
    %v1233 = vadd.s32 %v1232, %v1222
    %v1234 = vadd.s32 %v1233, %v1224
    %v1235 = vmul.u32 %v1190, %v1181
    %v1236 = vadd.s32 %v1212, %v1231
    %vm1237 = vc.u32 %v1212, %v1231
    %v1238 = vadd.s32 %v1234, 1
    %v1239 = vsel %vm1237, %v1238, %v1234
    %v1240 = vadd.s32 %v1235, %v1239
    %v1241 = vadd.s32 %v1240, 536870912
    %v1242 = vshrl.u32 %v1241, 30
    %v1243 = vshll.u32 %v1242, 30
    %v1244 = vsub.s32 %v1240, %v1243
    %vm1245 = vcmp.lt.s32.totalorder %v1244, 0
    %v1246 = vsub.s32 0, %v1244
    %v1247 = vsel %vm1245, %v1246, %v1244
    %v1248 = vclz %v1247
    %v1249 = vsub.s32 %v1248, 2
    %vm1250 = vcmp.gt.s32.totalorder 0, %v1249
    %v1251 = vsel %vm1250, 0, %v1249
    %v1252 = vsub.s32 32, %v1251
    %v1253 = vshll.u32 %v1244, %v1251
    %v1254 = vshrl.u32 %v1236, %v1252
    %v1255 = vor.u32 %v1253, %v1254
    %v1256 = vsub.s32 4294967266, %v1251
    %v1257 = vadd.s32 %v1256, 127
    %v1258 = vshll.u32 %v1257, 23
    %v1259 = vor.u32 4788187, %v1258
    %v1260 = vand.u32 2147483647, %v1259
    %v1262 = vcvt.s32.f32 %v1255
    %v1263 = vmul.f32 %v1262, %v1260
    %v1264 = vxor.u32 %v1263, 2147483648
    %v1265 = vsel %vm1144, %v1264, %v1263
    %v1266 = vsub.s32 4, %v1242
    %v1267 = vsel %vm1144, %v1266, %v1242
    %v1268 = vsel %vm1143, %v204, %v1265
    %v1269 = vsel %vm1143, 0, %v1267
    %v1270 = vmul.f32 %v1268, %v1268
    %v1271 = vmul.f32 %v1270, -0.001358992
    %v1272 = vadd.f32 %v1271, 0.041655596
    %v1273 = vmul.f32 %v1270, %v1272
    %v1274 = vadd.f32 %v1273, -0.4999988
    %v1275 = vmul.f32 %v1270, %v1274
    %v1276 = vadd.f32 1.0, %v1275
    %v1277 = vmul.f32 %v1268, %v1268
    %v1278 = vmul.f32 %v1277, -0.00019511016
    %v1279 = vadd.f32 %v1278, 0.008332121
    %v1280 = vmul.f32 %v1277, %v1279
    %v1281 = vadd.f32 %v1280, -0.16666654
    %v1282 = vmul.f32 %v1277, %v1281
    %v1283 = vadd.f32 %v1282, 1.0
    %v1284 = vmul.f32 %v1283, %v1268
    %vm1285 = vweird.f32 %v204
    %v1286 = vadd.s32 %v1269, 3
    %v1287 = vand.u32 %v1286, 3
    %vm1288 = vcmp.lt.s32.totalorder %v1287, 2
    %vm1289 = vcmp.eq.s32.totalorder %v1287, 0
    %v1290 = vxor.u32 %v1284, 2147483648
    %v1291 = vsel %vm1289, %v1276, %v1290
    %vm1292 = vcmp.eq.s32.totalorder %v1287, 2
    %v1293 = vxor.u32 %v1276, 2147483648
    %v1294 = vsel %vm1292, %v1293, %v1284
    %v1295 = vsel %vm1288, %v1291, %v1294
    %v1296 = vsel %vm1285, nan, %v1295
    %v1297 = vand.u32 2147483647, %v205
    %vm1298 = vcmp.le.f32.partialorder %v1297, 0.7853982
    %vm1299 = vcmp.lt.s32.totalorder %v205, 0
    %v1300 = vand.u32 %v205, 2139095040
    %v1301 = vshrl.u32 %v1300, 23
    %v1302 = vsub.s32 %v1301, 127
    %v1303 = vand.u32 2147483647, %v205
    %v1304 = vand.u32 %v1303, 8388607
    %v1305 = vor.u32 %v1304, 8388608
    %v1306 = vsub.s32 0, %v1305
    %v1307 = vadd.s32 %v1302, 1
    %vm1308 = vcmp.gt.s32.totalorder %v1307, 0
    %v1309 = vsel %vm1308, %v1307, 0
    %v1310 = vshrl.u32 %v1309, 5
    %v1311 = vand.u32 %v1309, 31
    %v1312 = vsub.s32 32, %v1311
    %v1313 = vshrl.u32 683565275, %v1312
    %v1314 = vshll.u32 683565275, %v1311
    %v1315 = vshrl.u32 2475754826, %v1312
    %v1316 = vor.u32 %v1314, %v1315
    %v1317 = vshll.u32 2475754826, %v1311
    %v1318 = vshrl.u32 2131351028, %v1312
    %v1319 = vor.u32 %v1317, %v1318
    %v1320 = vshll.u32 2131351028, %v1311
    %v1321 = vshrl.u32 2102212464, %v1312
    %v1322 = vor.u32 %v1320, %v1321
    %v1323 = vshll.u32 2102212464, %v1311
    %v1324 = vshrl.u32 920167782, %v1312
    %v1325 = vor.u32 %v1323, %v1324
    %v1326 = vshll.u32 920167782, %v1311
    %v1327 = vshrl.u32 1326507024, %v1312
    %v1328 = vor.u32 %v1326, %v1327
    %vm1329 = vcmp.lt.s32.totalorder %v1310, 1
    %vm1330 = vcmp.lt.s32.totalorder %v1310, 2
    %vm1331 = vcmp.lt.s32.totalorder %v1310, 3
    %vm1332 = vcmp.lt.s32.totalorder %v1310, 4
    %v1333 = vsel %vm1329, %v1313, %v1316
    %v1334 = vsel %vm1332, %v1322, 2102212464
    %v1335 = vsel %vm1331, %v1319, %v1334
    %v1336 = vsel %vm1330, %v1333, %v1335
    %v1337 = vsel %vm1329, %v1316, %v1319
    %v1338 = vsel %vm1332, %v1325, 920167782
    %v1339 = vsel %vm1331, %v1322, %v1338
    %v1340 = vsel %vm1330, %v1337, %v1339
    %v1341 = vsel %vm1329, %v1319, %v1322
    %v1342 = vsel %vm1332, %v1328, 1326507024
    %v1343 = vsel %vm1331, %v1325, %v1342
    %v1344 = vsel %vm1330, %v1341, %v1343
    %v1345 = vshll.u32 %v1305, 8
    %v1346 = vand.u32 %v1345, 65535
    %v1347 = vshrl.u32 %v1345, 16
    %v1348 = vand.u32 %v1344, 65535
    %v1349 = vshrl.u32 %v1344, 16
    %v1350 = vmul.u32 %v1346, %v1348
    %v1351 = vmul.u32 %v1346, %v1349
    %v1352 = vmul.u32 %v1347, %v1348
    %v1353 = vmul.u32 %v1347, %v1349
    %v1354 = vshll.u32 %v1351, 16
    %v1355 = vshrl.u32 %v1351, 16
    %v1356 = vshll.u32 %v1352, 16
    %v1357 = vshrl.u32 %v1352, 16
    %vm1358 = vc.u32 %v1350, %v1354
    %v1359 = vsel %vm1358, 1, 0
    %v1360 = vadd.s32 %v1350, %v1354
    %v1361 = vadd.s32 %v1353, %v1359
    %vm1362 = vc.u32 %v1360, %v1356
    %v1363 = vsel %vm1362, 1, 0
    %v1364 = vadd.s32 %v1360, %v1356
    %v1365 = vadd.s32 %v1361, %v1363
    %v1366 = vadd.s32 %v1365, %v1355
    %v1367 = vadd.s32 %v1366, %v1357
    %v1368 = vand.u32 %v1345, 65535
    %v1369 = vshrl.u32 %v1345, 16
    %v1370 = vand.u32 %v1340, 65535
    %v1371 = vshrl.u32 %v1340, 16
    %v1372 = vmul.u32 %v1368, %v1370
    %v1373 = vmul.u32 %v1368, %v1371
    %v1374 = vmul.u32 %v1369, %v1370
    %v1375 = vmul.u32 %v1369, %v1371
    %v1376 = vshll.u32 %v1373, 16
    %v1377 = vshrl.u32 %v1373, 16
    %v1378 = vshll.u32 %v1374, 16
    %v1379 = vshrl.u32 %v1374, 16
    %vm1380 = vc.u32 %v1372, %v1376
    %v1381 = vsel %vm1380, 1, 0
    %v1382 = vadd.s32 %v1372, %v1376
    %v1383 = vadd.s32 %v1375, %v1381
    %vm1384 = vc.u32 %v1382, %v1378
    %v1385 = vsel %vm1384, 1, 0
    %v1386 = vadd.s32 %v1382, %v1378
    %v1387 = vadd.s32 %v1383, %v1385
    %v1388 = vadd.s32 %v1387, %v1377
    %v1389 = vadd.s32 %v1388, %v1379
    %v1390 = vmul.u32 %v1345, %v1336
    %v1391 = vadd.s32 %v1367, %v1386
    %vm1392 = vc.u32 %v1367, %v1386
    %v1393 = vadd.s32 %v1389, 1
    %v1394 = vsel %vm1392, %v1393, %v1389
    %v1395 = vadd.s32 %v1390, %v1394
    %v1396 = vadd.s32 %v1395, 536870912
    %v1397 = vshrl.u32 %v1396, 30
    %v1398 = vshll.u32 %v1397, 30
    %v1399 = vsub.s32 %v1395, %v1398
    %vm1400 = vcmp.lt.s32.totalorder %v1399, 0
    %v1401 = vsub.s32 0, %v1399
    %v1402 = vsel %vm1400, %v1401, %v1399
    %v1403 = vclz %v1402
    %v1404 = vsub.s32 %v1403, 2
    %vm1405 = vcmp.gt.s32.totalorder 0, %v1404
    %v1406 = vsel %vm1405, 0, %v1404
    %v1407 = vsub.s32 32, %v1406
    %v1408 = vshll.u32 %v1399, %v1406
    %v1409 = vshrl.u32 %v1391, %v1407
    %v1410 = vor.u32 %v1408, %v1409
    %v1411 = vsub.s32 4294967266, %v1406
    %v1412 = vadd.s32 %v1411, 127
    %v1413 = vshll.u32 %v1412, 23
    %v1414 = vor.u32 4788187, %v1413
    %v1415 = vand.u32 2147483647, %v1414
    %v1417 = vcvt.s32.f32 %v1410
    %v1418 = vmul.f32 %v1417, %v1415
    %v1419 = vxor.u32 %v1418, 2147483648
    %v1420 = vsel %vm1299, %v1419, %v1418
    %v1421 = vsub.s32 4, %v1397
    %v1422 = vsel %vm1299, %v1421, %v1397
    %v1423 = vsel %vm1298, %v205, %v1420
    %v1424 = vsel %vm1298, 0, %v1422
    %v1425 = vmul.f32 %v1423, %v1423
    %v1426 = vmul.f32 %v1425, -0.001358992
    %v1427 = vadd.f32 %v1426, 0.041655596
    %v1428 = vmul.f32 %v1425, %v1427
    %v1429 = vadd.f32 %v1428, -0.4999988
    %v1430 = vmul.f32 %v1425, %v1429
    %v1431 = vadd.f32 1.0, %v1430
    %v1432 = vmul.f32 %v1423, %v1423
    %v1433 = vmul.f32 %v1432, -0.00019511016
    %v1434 = vadd.f32 %v1433, 0.008332121
    %v1435 = vmul.f32 %v1432, %v1434
    %v1436 = vadd.f32 %v1435, -0.16666654
    %v1437 = vmul.f32 %v1432, %v1436
    %v1438 = vadd.f32 %v1437, 1.0
    %v1439 = vmul.f32 %v1438, %v1423
    %vm1440 = vweird.f32 %v205
    %v1441 = vadd.s32 %v1424, 3
    %v1442 = vand.u32 %v1441, 3
    %vm1443 = vcmp.lt.s32.totalorder %v1442, 2
    %vm1444 = vcmp.eq.s32.totalorder %v1442, 0
    %v1445 = vxor.u32 %v1439, 2147483648
    %v1446 = vsel %vm1444, %v1431, %v1445
    %vm1447 = vcmp.eq.s32.totalorder %v1442, 2
    %v1448 = vxor.u32 %v1431, 2147483648
    %v1449 = vsel %vm1447, %v1448, %v1439
    %v1450 = vsel %vm1443, %v1446, %v1449
    %v1451 = vsel %vm1440, nan, %v1450
    %v1452 = vand.u32 2147483647, %v206
    %vm1453 = vcmp.le.f32.partialorder %v1452, 0.7853982
    %vm1454 = vcmp.lt.s32.totalorder %v206, 0
    %v1455 = vand.u32 %v206, 2139095040
    %v1456 = vshrl.u32 %v1455, 23
    %v1457 = vsub.s32 %v1456, 127
    %v1458 = vand.u32 2147483647, %v206
    %v1459 = vand.u32 %v1458, 8388607
    %v1460 = vor.u32 %v1459, 8388608
    %v1461 = vsub.s32 0, %v1460
    %v1462 = vadd.s32 %v1457, 1
    %vm1463 = vcmp.gt.s32.totalorder %v1462, 0
    %v1464 = vsel %vm1463, %v1462, 0
    %v1465 = vshrl.u32 %v1464, 5
    %v1466 = vand.u32 %v1464, 31
    %v1467 = vsub.s32 32, %v1466
    %v1468 = vshrl.u32 683565275, %v1467
    %v1469 = vshll.u32 683565275, %v1466
    %v1470 = vshrl.u32 2475754826, %v1467
    %v1471 = vor.u32 %v1469, %v1470
    %v1472 = vshll.u32 2475754826, %v1466
    %v1473 = vshrl.u32 2131351028, %v1467
    %v1474 = vor.u32 %v1472, %v1473
    %v1475 = vshll.u32 2131351028, %v1466
    %v1476 = vshrl.u32 2102212464, %v1467
    %v1477 = vor.u32 %v1475, %v1476
    %v1478 = vshll.u32 2102212464, %v1466
    %v1479 = vshrl.u32 920167782, %v1467
    %v1480 = vor.u32 %v1478, %v1479
    %v1481 = vshll.u32 920167782, %v1466
    %v1482 = vshrl.u32 1326507024, %v1467
    %v1483 = vor.u32 %v1481, %v1482
    %vm1484 = vcmp.lt.s32.totalorder %v1465, 1
    %vm1485 = vcmp.lt.s32.totalorder %v1465, 2
    %vm1486 = vcmp.lt.s32.totalorder %v1465, 3
    %vm1487 = vcmp.lt.s32.totalorder %v1465, 4
    %v1488 = vsel %vm1484, %v1468, %v1471
    %v1489 = vsel %vm1487, %v1477, 2102212464
    %v1490 = vsel %vm1486, %v1474, %v1489
    %v1491 = vsel %vm1485, %v1488, %v1490
    %v1492 = vsel %vm1484, %v1471, %v1474
    %v1493 = vsel %vm1487, %v1480, 920167782
    %v1494 = vsel %vm1486, %v1477, %v1493
    %v1495 = vsel %vm1485, %v1492, %v1494
    %v1496 = vsel %vm1484, %v1474, %v1477
    %v1497 = vsel %vm1487, %v1483, 1326507024
    %v1498 = vsel %vm1486, %v1480, %v1497
    %v1499 = vsel %vm1485, %v1496, %v1498
    %v1500 = vshll.u32 %v1460, 8
    %v1501 = vand.u32 %v1500, 65535
    %v1502 = vshrl.u32 %v1500, 16
    %v1503 = vand.u32 %v1499, 65535
    %v1504 = vshrl.u32 %v1499, 16
    %v1505 = vmul.u32 %v1501, %v1503
    %v1506 = vmul.u32 %v1501, %v1504
    %v1507 = vmul.u32 %v1502, %v1503
    %v1508 = vmul.u32 %v1502, %v1504
    %v1509 = vshll.u32 %v1506, 16
    %v1510 = vshrl.u32 %v1506, 16
    %v1511 = vshll.u32 %v1507, 16
    %v1512 = vshrl.u32 %v1507, 16
    %vm1513 = vc.u32 %v1505, %v1509
    %v1514 = vsel %vm1513, 1, 0
    %v1515 = vadd.s32 %v1505, %v1509
    %v1516 = vadd.s32 %v1508, %v1514
    %vm1517 = vc.u32 %v1515, %v1511
    %v1518 = vsel %vm1517, 1, 0
    %v1519 = vadd.s32 %v1515, %v1511
    %v1520 = vadd.s32 %v1516, %v1518
    %v1521 = vadd.s32 %v1520, %v1510
    %v1522 = vadd.s32 %v1521, %v1512
    %v1523 = vand.u32 %v1500, 65535
    %v1524 = vshrl.u32 %v1500, 16
    %v1525 = vand.u32 %v1495, 65535
    %v1526 = vshrl.u32 %v1495, 16
    %v1527 = vmul.u32 %v1523, %v1525
    %v1528 = vmul.u32 %v1523, %v1526
    %v1529 = vmul.u32 %v1524, %v1525
    %v1530 = vmul.u32 %v1524, %v1526
    %v1531 = vshll.u32 %v1528, 16
    %v1532 = vshrl.u32 %v1528, 16
    %v1533 = vshll.u32 %v1529, 16
    %v1534 = vshrl.u32 %v1529, 16
    %vm1535 = vc.u32 %v1527, %v1531
    %v1536 = vsel %vm1535, 1, 0
    %v1537 = vadd.s32 %v1527, %v1531
    %v1538 = vadd.s32 %v1530, %v1536
    %vm1539 = vc.u32 %v1537, %v1533
    %v1540 = vsel %vm1539, 1, 0
    %v1541 = vadd.s32 %v1537, %v1533
    %v1542 = vadd.s32 %v1538, %v1540
    %v1543 = vadd.s32 %v1542, %v1532
    %v1544 = vadd.s32 %v1543, %v1534
    %v1545 = vmul.u32 %v1500, %v1491
    %v1546 = vadd.s32 %v1522, %v1541
    %vm1547 = vc.u32 %v1522, %v1541
    %v1548 = vadd.s32 %v1544, 1
    %v1549 = vsel %vm1547, %v1548, %v1544
    %v1550 = vadd.s32 %v1545, %v1549
    %v1551 = vadd.s32 %v1550, 536870912
    %v1552 = vshrl.u32 %v1551, 30
    %v1553 = vshll.u32 %v1552, 30
    %v1554 = vsub.s32 %v1550, %v1553
    %vm1555 = vcmp.lt.s32.totalorder %v1554, 0
    %v1556 = vsub.s32 0, %v1554
    %v1557 = vsel %vm1555, %v1556, %v1554
    %v1558 = vclz %v1557
    %v1559 = vsub.s32 %v1558, 2
    %vm1560 = vcmp.gt.s32.totalorder 0, %v1559
    %v1561 = vsel %vm1560, 0, %v1559
    %v1562 = vsub.s32 32, %v1561
    %v1563 = vshll.u32 %v1554, %v1561
    %v1564 = vshrl.u32 %v1546, %v1562
    %v1565 = vor.u32 %v1563, %v1564
    %v1566 = vsub.s32 4294967266, %v1561
    %v1567 = vadd.s32 %v1566, 127
    %v1568 = vshll.u32 %v1567, 23
    %v1569 = vor.u32 4788187, %v1568
    %v1570 = vand.u32 2147483647, %v1569
    %v1572 = vcvt.s32.f32 %v1565
    %v1573 = vmul.f32 %v1572, %v1570
    %v1574 = vxor.u32 %v1573, 2147483648
    %v1575 = vsel %vm1454, %v1574, %v1573
    %v1576 = vsub.s32 4, %v1552
    %v1577 = vsel %vm1454, %v1576, %v1552
    %v1578 = vsel %vm1453, %v206, %v1575
    %v1579 = vsel %vm1453, 0, %v1577
    %v1580 = vmul.f32 %v1578, %v1578
    %v1581 = vmul.f32 %v1580, -0.001358992
    %v1582 = vadd.f32 %v1581, 0.041655596
    %v1583 = vmul.f32 %v1580, %v1582
    %v1584 = vadd.f32 %v1583, -0.4999988
    %v1585 = vmul.f32 %v1580, %v1584
    %v1586 = vadd.f32 1.0, %v1585
    %v1587 = vmul.f32 %v1578, %v1578
    %v1588 = vmul.f32 %v1587, -0.00019511016
    %v1589 = vadd.f32 %v1588, 0.008332121
    %v1590 = vmul.f32 %v1587, %v1589
    %v1591 = vadd.f32 %v1590, -0.16666654
    %v1592 = vmul.f32 %v1587, %v1591
    %v1593 = vadd.f32 %v1592, 1.0
    %v1594 = vmul.f32 %v1593, %v1578
    %vm1595 = vweird.f32 %v206
    %v1596 = vadd.s32 %v1579, 3
    %v1597 = vand.u32 %v1596, 3
    %vm1598 = vcmp.lt.s32.totalorder %v1597, 2
    %vm1599 = vcmp.eq.s32.totalorder %v1597, 0
    %v1600 = vxor.u32 %v1594, 2147483648
    %v1601 = vsel %vm1599, %v1586, %v1600
    %vm1602 = vcmp.eq.s32.totalorder %v1597, 2
    %v1603 = vxor.u32 %v1586, 2147483648
    %v1604 = vsel %vm1602, %v1603, %v1594
    %v1605 = vsel %vm1598, %v1601, %v1604
    %v1606 = vsel %vm1595, nan, %v1605
    %v1607 = vand.u32 2147483647, %v207
    %vm1608 = vcmp.le.f32.partialorder %v1607, 0.7853982
    %vm1609 = vcmp.lt.s32.totalorder %v207, 0
    %v1610 = vand.u32 %v207, 2139095040
    %v1611 = vshrl.u32 %v1610, 23
    %v1612 = vsub.s32 %v1611, 127
    %v1613 = vand.u32 2147483647, %v207
    %v1614 = vand.u32 %v1613, 8388607
    %v1615 = vor.u32 %v1614, 8388608
    %v1616 = vsub.s32 0, %v1615
    %v1617 = vadd.s32 %v1612, 1
    %vm1618 = vcmp.gt.s32.totalorder %v1617, 0
    %v1619 = vsel %vm1618, %v1617, 0
    %v1620 = vshrl.u32 %v1619, 5
    %v1621 = vand.u32 %v1619, 31
    %v1622 = vsub.s32 32, %v1621
    %v1623 = vshrl.u32 683565275, %v1622
    %v1624 = vshll.u32 683565275, %v1621
    %v1625 = vshrl.u32 2475754826, %v1622
    %v1626 = vor.u32 %v1624, %v1625
    %v1627 = vshll.u32 2475754826, %v1621
    %v1628 = vshrl.u32 2131351028, %v1622
    %v1629 = vor.u32 %v1627, %v1628
    %v1630 = vshll.u32 2131351028, %v1621
    %v1631 = vshrl.u32 2102212464, %v1622
    %v1632 = vor.u32 %v1630, %v1631
    %v1633 = vshll.u32 2102212464, %v1621
    %v1634 = vshrl.u32 920167782, %v1622
    %v1635 = vor.u32 %v1633, %v1634
    %v1636 = vshll.u32 920167782, %v1621
    %v1637 = vshrl.u32 1326507024, %v1622
    %v1638 = vor.u32 %v1636, %v1637
    %vm1639 = vcmp.lt.s32.totalorder %v1620, 1
    %vm1640 = vcmp.lt.s32.totalorder %v1620, 2
    %vm1641 = vcmp.lt.s32.totalorder %v1620, 3
    %vm1642 = vcmp.lt.s32.totalorder %v1620, 4
    %v1643 = vsel %vm1639, %v1623, %v1626
    %v1644 = vsel %vm1642, %v1632, 2102212464
    %v1645 = vsel %vm1641, %v1629, %v1644
    %v1646 = vsel %vm1640, %v1643, %v1645
    %v1647 = vsel %vm1639, %v1626, %v1629
    %v1648 = vsel %vm1642, %v1635, 920167782
    %v1649 = vsel %vm1641, %v1632, %v1648
    %v1650 = vsel %vm1640, %v1647, %v1649
    %v1651 = vsel %vm1639, %v1629, %v1632
    %v1652 = vsel %vm1642, %v1638, 1326507024
    %v1653 = vsel %vm1641, %v1635, %v1652
    %v1654 = vsel %vm1640, %v1651, %v1653
    %v1655 = vshll.u32 %v1615, 8
    %v1656 = vand.u32 %v1655, 65535
    %v1657 = vshrl.u32 %v1655, 16
    %v1658 = vand.u32 %v1654, 65535
    %v1659 = vshrl.u32 %v1654, 16
    %v1660 = vmul.u32 %v1656, %v1658
    %v1661 = vmul.u32 %v1656, %v1659
    %v1662 = vmul.u32 %v1657, %v1658
    %v1663 = vmul.u32 %v1657, %v1659
    %v1664 = vshll.u32 %v1661, 16
    %v1665 = vshrl.u32 %v1661, 16
    %v1666 = vshll.u32 %v1662, 16
    %v1667 = vshrl.u32 %v1662, 16
    %vm1668 = vc.u32 %v1660, %v1664
    %v1669 = vsel %vm1668, 1, 0
    %v1670 = vadd.s32 %v1660, %v1664
    %v1671 = vadd.s32 %v1663, %v1669
    %vm1672 = vc.u32 %v1670, %v1666
    %v1673 = vsel %vm1672, 1, 0
    %v1674 = vadd.s32 %v1670, %v1666
    %v1675 = vadd.s32 %v1671, %v1673
    %v1676 = vadd.s32 %v1675, %v1665
    %v1677 = vadd.s32 %v1676, %v1667
    %v1678 = vand.u32 %v1655, 65535
    %v1679 = vshrl.u32 %v1655, 16
    %v1680 = vand.u32 %v1650, 65535
    %v1681 = vshrl.u32 %v1650, 16
    %v1682 = vmul.u32 %v1678, %v1680
    %v1683 = vmul.u32 %v1678, %v1681
    %v1684 = vmul.u32 %v1679, %v1680
    %v1685 = vmul.u32 %v1679, %v1681
    %v1686 = vshll.u32 %v1683, 16
    %v1687 = vshrl.u32 %v1683, 16
    %v1688 = vshll.u32 %v1684, 16
    %v1689 = vshrl.u32 %v1684, 16
    %vm1690 = vc.u32 %v1682, %v1686
    %v1691 = vsel %vm1690, 1, 0
    %v1692 = vadd.s32 %v1682, %v1686
    %v1693 = vadd.s32 %v1685, %v1691
    %vm1694 = vc.u32 %v1692, %v1688
    %v1695 = vsel %vm1694, 1, 0
    %v1696 = vadd.s32 %v1692, %v1688
    %v1697 = vadd.s32 %v1693, %v1695
    %v1698 = vadd.s32 %v1697, %v1687
    %v1699 = vadd.s32 %v1698, %v1689
    %v1700 = vmul.u32 %v1655, %v1646
    %v1701 = vadd.s32 %v1677, %v1696
    %vm1702 = vc.u32 %v1677, %v1696
    %v1703 = vadd.s32 %v1699, 1
    %v1704 = vsel %vm1702, %v1703, %v1699
    %v1705 = vadd.s32 %v1700, %v1704
    %v1706 = vadd.s32 %v1705, 536870912
    %v1707 = vshrl.u32 %v1706, 30
    %v1708 = vshll.u32 %v1707, 30
    %v1709 = vsub.s32 %v1705, %v1708
    %vm1710 = vcmp.lt.s32.totalorder %v1709, 0
    %v1711 = vsub.s32 0, %v1709
    %v1712 = vsel %vm1710, %v1711, %v1709
    %v1713 = vclz %v1712
    %v1714 = vsub.s32 %v1713, 2
    %vm1715 = vcmp.gt.s32.totalorder 0, %v1714
    %v1716 = vsel %vm1715, 0, %v1714
    %v1717 = vsub.s32 32, %v1716
    %v1718 = vshll.u32 %v1709, %v1716
    %v1719 = vshrl.u32 %v1701, %v1717
    %v1720 = vor.u32 %v1718, %v1719
    %v1721 = vsub.s32 4294967266, %v1716
    %v1722 = vadd.s32 %v1721, 127
    %v1723 = vshll.u32 %v1722, 23
    %v1724 = vor.u32 4788187, %v1723
    %v1725 = vand.u32 2147483647, %v1724
    %v1727 = vcvt.s32.f32 %v1720
    %v1728 = vmul.f32 %v1727, %v1725
    %v1729 = vxor.u32 %v1728, 2147483648
    %v1730 = vsel %vm1609, %v1729, %v1728
    %v1731 = vsub.s32 4, %v1707
    %v1732 = vsel %vm1609, %v1731, %v1707
    %v1733 = vsel %vm1608, %v207, %v1730
    %v1734 = vsel %vm1608, 0, %v1732
    %v1735 = vmul.f32 %v1733, %v1733
    %v1736 = vmul.f32 %v1735, -0.001358992
    %v1737 = vadd.f32 %v1736, 0.041655596
    %v1738 = vmul.f32 %v1735, %v1737
    %v1739 = vadd.f32 %v1738, -0.4999988
    %v1740 = vmul.f32 %v1735, %v1739
    %v1741 = vadd.f32 1.0, %v1740
    %v1742 = vmul.f32 %v1733, %v1733
    %v1743 = vmul.f32 %v1742, -0.00019511016
    %v1744 = vadd.f32 %v1743, 0.008332121
    %v1745 = vmul.f32 %v1742, %v1744
    %v1746 = vadd.f32 %v1745, -0.16666654
    %v1747 = vmul.f32 %v1742, %v1746
    %v1748 = vadd.f32 %v1747, 1.0
    %v1749 = vmul.f32 %v1748, %v1733
    %vm1750 = vweird.f32 %v207
    %v1751 = vadd.s32 %v1734, 3
    %v1752 = vand.u32 %v1751, 3
    %vm1753 = vcmp.lt.s32.totalorder %v1752, 2
    %vm1754 = vcmp.eq.s32.totalorder %v1752, 0
    %v1755 = vxor.u32 %v1749, 2147483648
    %v1756 = vsel %vm1754, %v1741, %v1755
    %vm1757 = vcmp.eq.s32.totalorder %v1752, 2
    %v1758 = vxor.u32 %v1741, 2147483648
    %v1759 = vsel %vm1757, %v1758, %v1749
    %v1760 = vsel %vm1753, %v1756, %v1759
    %v1761 = vsel %vm1750, nan, %v1760
    %v1762 = vand.u32 2147483647, %v208
    %vm1763 = vcmp.le.f32.partialorder %v1762, 0.7853982
    %vm1764 = vcmp.lt.s32.totalorder %v208, 0
    %v1765 = vand.u32 %v208, 2139095040
    %v1766 = vshrl.u32 %v1765, 23
    %v1767 = vsub.s32 %v1766, 127
    %v1768 = vand.u32 2147483647, %v208
    %v1769 = vand.u32 %v1768, 8388607
    %v1770 = vor.u32 %v1769, 8388608
    %v1771 = vsub.s32 0, %v1770
    %v1772 = vadd.s32 %v1767, 1
    %vm1773 = vcmp.gt.s32.totalorder %v1772, 0
    %v1774 = vsel %vm1773, %v1772, 0
    %v1775 = vshrl.u32 %v1774, 5
    %v1776 = vand.u32 %v1774, 31
    %v1777 = vsub.s32 32, %v1776
    %v1778 = vshrl.u32 683565275, %v1777
    %v1779 = vshll.u32 683565275, %v1776
    %v1780 = vshrl.u32 2475754826, %v1777
    %v1781 = vor.u32 %v1779, %v1780
    %v1782 = vshll.u32 2475754826, %v1776
    %v1783 = vshrl.u32 2131351028, %v1777
    %v1784 = vor.u32 %v1782, %v1783
    %v1785 = vshll.u32 2131351028, %v1776
    %v1786 = vshrl.u32 2102212464, %v1777
    %v1787 = vor.u32 %v1785, %v1786
    %v1788 = vshll.u32 2102212464, %v1776
    %v1789 = vshrl.u32 920167782, %v1777
    %v1790 = vor.u32 %v1788, %v1789
    %v1791 = vshll.u32 920167782, %v1776
    %v1792 = vshrl.u32 1326507024, %v1777
    %v1793 = vor.u32 %v1791, %v1792
    %vm1794 = vcmp.lt.s32.totalorder %v1775, 1
    %vm1795 = vcmp.lt.s32.totalorder %v1775, 2
    %vm1796 = vcmp.lt.s32.totalorder %v1775, 3
    %vm1797 = vcmp.lt.s32.totalorder %v1775, 4
    %v1798 = vsel %vm1794, %v1778, %v1781
    %v1799 = vsel %vm1797, %v1787, 2102212464
    %v1800 = vsel %vm1796, %v1784, %v1799
    %v1801 = vsel %vm1795, %v1798, %v1800
    %v1802 = vsel %vm1794, %v1781, %v1784
    %v1803 = vsel %vm1797, %v1790, 920167782
    %v1804 = vsel %vm1796, %v1787, %v1803
    %v1805 = vsel %vm1795, %v1802, %v1804
    %v1806 = vsel %vm1794, %v1784, %v1787
    %v1807 = vsel %vm1797, %v1793, 1326507024
    %v1808 = vsel %vm1796, %v1790, %v1807
    %v1809 = vsel %vm1795, %v1806, %v1808
    %v1810 = vshll.u32 %v1770, 8
    %v1811 = vand.u32 %v1810, 65535
    %v1812 = vshrl.u32 %v1810, 16
    %v1813 = vand.u32 %v1809, 65535
    %v1814 = vshrl.u32 %v1809, 16
    %v1815 = vmul.u32 %v1811, %v1813
    %v1816 = vmul.u32 %v1811, %v1814
    %v1817 = vmul.u32 %v1812, %v1813
    %v1818 = vmul.u32 %v1812, %v1814
    %v1819 = vshll.u32 %v1816, 16
    %v1820 = vshrl.u32 %v1816, 16
    %v1821 = vshll.u32 %v1817, 16
    %v1822 = vshrl.u32 %v1817, 16
    %vm1823 = vc.u32 %v1815, %v1819
    %v1824 = vsel %vm1823, 1, 0
    %v1825 = vadd.s32 %v1815, %v1819
    %v1826 = vadd.s32 %v1818, %v1824
    %vm1827 = vc.u32 %v1825, %v1821
    %v1828 = vsel %vm1827, 1, 0
    %v1829 = vadd.s32 %v1825, %v1821
    %v1830 = vadd.s32 %v1826, %v1828
    %v1831 = vadd.s32 %v1830, %v1820
    %v1832 = vadd.s32 %v1831, %v1822
    %v1833 = vand.u32 %v1810, 65535
    %v1834 = vshrl.u32 %v1810, 16
    %v1835 = vand.u32 %v1805, 65535
    %v1836 = vshrl.u32 %v1805, 16
    %v1837 = vmul.u32 %v1833, %v1835
    %v1838 = vmul.u32 %v1833, %v1836
    %v1839 = vmul.u32 %v1834, %v1835
    %v1840 = vmul.u32 %v1834, %v1836
    %v1841 = vshll.u32 %v1838, 16
    %v1842 = vshrl.u32 %v1838, 16
    %v1843 = vshll.u32 %v1839, 16
    %v1844 = vshrl.u32 %v1839, 16
    %vm1845 = vc.u32 %v1837, %v1841
    %v1846 = vsel %vm1845, 1, 0
    %v1847 = vadd.s32 %v1837, %v1841
    %v1848 = vadd.s32 %v1840, %v1846
    %vm1849 = vc.u32 %v1847, %v1843
    %v1850 = vsel %vm1849, 1, 0
    %v1851 = vadd.s32 %v1847, %v1843
    %v1852 = vadd.s32 %v1848, %v1850
    %v1853 = vadd.s32 %v1852, %v1842
    %v1854 = vadd.s32 %v1853, %v1844
    %v1855 = vmul.u32 %v1810, %v1801
    %v1856 = vadd.s32 %v1832, %v1851
    %vm1857 = vc.u32 %v1832, %v1851
    %v1858 = vadd.s32 %v1854, 1
    %v1859 = vsel %vm1857, %v1858, %v1854
    %v1860 = vadd.s32 %v1855, %v1859
    %v1861 = vadd.s32 %v1860, 536870912
    %v1862 = vshrl.u32 %v1861, 30
    %v1863 = vshll.u32 %v1862, 30
    %v1864 = vsub.s32 %v1860, %v1863
    %vm1865 = vcmp.lt.s32.totalorder %v1864, 0
    %v1866 = vsub.s32 0, %v1864
    %v1867 = vsel %vm1865, %v1866, %v1864
    %v1868 = vclz %v1867
    %v1869 = vsub.s32 %v1868, 2
    %vm1870 = vcmp.gt.s32.totalorder 0, %v1869
    %v1871 = vsel %vm1870, 0, %v1869
    %v1872 = vsub.s32 32, %v1871
    %v1873 = vshll.u32 %v1864, %v1871
    %v1874 = vshrl.u32 %v1856, %v1872
    %v1875 = vor.u32 %v1873, %v1874
    %v1876 = vsub.s32 4294967266, %v1871
    %v1877 = vadd.s32 %v1876, 127
    %v1878 = vshll.u32 %v1877, 23
    %v1879 = vor.u32 4788187, %v1878
    %v1880 = vand.u32 2147483647, %v1879
    %v1882 = vcvt.s32.f32 %v1875
    %v1883 = vmul.f32 %v1882, %v1880
    %v1884 = vxor.u32 %v1883, 2147483648
    %v1885 = vsel %vm1764, %v1884, %v1883
    %v1886 = vsub.s32 4, %v1862
    %v1887 = vsel %vm1764, %v1886, %v1862
    %v1888 = vsel %vm1763, %v208, %v1885
    %v1889 = vsel %vm1763, 0, %v1887
    %v1890 = vmul.f32 %v1888, %v1888
    %v1891 = vmul.f32 %v1890, -0.001358992
    %v1892 = vadd.f32 %v1891, 0.041655596
    %v1893 = vmul.f32 %v1890, %v1892
    %v1894 = vadd.f32 %v1893, -0.4999988
    %v1895 = vmul.f32 %v1890, %v1894
    %v1896 = vadd.f32 1.0, %v1895
    %v1897 = vmul.f32 %v1888, %v1888
    %v1898 = vmul.f32 %v1897, -0.00019511016
    %v1899 = vadd.f32 %v1898, 0.008332121
    %v1900 = vmul.f32 %v1897, %v1899
    %v1901 = vadd.f32 %v1900, -0.16666654
    %v1902 = vmul.f32 %v1897, %v1901
    %v1903 = vadd.f32 %v1902, 1.0
    %v1904 = vmul.f32 %v1903, %v1888
    %vm1905 = vweird.f32 %v208
    %v1906 = vadd.s32 %v1889, 3
    %v1907 = vand.u32 %v1906, 3
    %vm1908 = vcmp.lt.s32.totalorder %v1907, 2
    %vm1909 = vcmp.eq.s32.totalorder %v1907, 0
    %v1910 = vxor.u32 %v1904, 2147483648
    %v1911 = vsel %vm1909, %v1896, %v1910
    %vm1912 = vcmp.eq.s32.totalorder %v1907, 2
    %v1913 = vxor.u32 %v1896, 2147483648
    %v1914 = vsel %vm1912, %v1913, %v1904
    %v1915 = vsel %vm1908, %v1911, %v1914
    %v1916 = vsel %vm1905, nan, %v1915
    %v1917 = vand.u32 2147483647, %v209
    %vm1918 = vcmp.le.f32.partialorder %v1917, 0.7853982
    %vm1919 = vcmp.lt.s32.totalorder %v209, 0
    %v1920 = vand.u32 %v209, 2139095040
    %v1921 = vshrl.u32 %v1920, 23
    %v1922 = vsub.s32 %v1921, 127
    %v1923 = vand.u32 2147483647, %v209
    %v1924 = vand.u32 %v1923, 8388607
    %v1925 = vor.u32 %v1924, 8388608
    %v1926 = vsub.s32 0, %v1925
    %v1927 = vadd.s32 %v1922, 1
    %vm1928 = vcmp.gt.s32.totalorder %v1927, 0
    %v1929 = vsel %vm1928, %v1927, 0
    %v1930 = vshrl.u32 %v1929, 5
    %v1931 = vand.u32 %v1929, 31
    %v1932 = vsub.s32 32, %v1931
    %v1933 = vshrl.u32 683565275, %v1932
    %v1934 = vshll.u32 683565275, %v1931
    %v1935 = vshrl.u32 2475754826, %v1932
    %v1936 = vor.u32 %v1934, %v1935
    %v1937 = vshll.u32 2475754826, %v1931
    %v1938 = vshrl.u32 2131351028, %v1932
    %v1939 = vor.u32 %v1937, %v1938
    %v1940 = vshll.u32 2131351028, %v1931
    %v1941 = vshrl.u32 2102212464, %v1932
    %v1942 = vor.u32 %v1940, %v1941
    %v1943 = vshll.u32 2102212464, %v1931
    %v1944 = vshrl.u32 920167782, %v1932
    %v1945 = vor.u32 %v1943, %v1944
    %v1946 = vshll.u32 920167782, %v1931
    %v1947 = vshrl.u32 1326507024, %v1932
    %v1948 = vor.u32 %v1946, %v1947
    %vm1949 = vcmp.lt.s32.totalorder %v1930, 1
    %vm1950 = vcmp.lt.s32.totalorder %v1930, 2
    %vm1951 = vcmp.lt.s32.totalorder %v1930, 3
    %vm1952 = vcmp.lt.s32.totalorder %v1930, 4
    %v1953 = vsel %vm1949, %v1933, %v1936
    %v1954 = vsel %vm1952, %v1942, 2102212464
    %v1955 = vsel %vm1951, %v1939, %v1954
    %v1956 = vsel %vm1950, %v1953, %v1955
    %v1957 = vsel %vm1949, %v1936, %v1939
    %v1958 = vsel %vm1952, %v1945, 920167782
    %v1959 = vsel %vm1951, %v1942, %v1958
    %v1960 = vsel %vm1950, %v1957, %v1959
    %v1961 = vsel %vm1949, %v1939, %v1942
    %v1962 = vsel %vm1952, %v1948, 1326507024
    %v1963 = vsel %vm1951, %v1945, %v1962
    %v1964 = vsel %vm1950, %v1961, %v1963
    %v1965 = vshll.u32 %v1925, 8
    %v1966 = vand.u32 %v1965, 65535
    %v1967 = vshrl.u32 %v1965, 16
    %v1968 = vand.u32 %v1964, 65535
    %v1969 = vshrl.u32 %v1964, 16
    %v1970 = vmul.u32 %v1966, %v1968
    %v1971 = vmul.u32 %v1966, %v1969
    %v1972 = vmul.u32 %v1967, %v1968
    %v1973 = vmul.u32 %v1967, %v1969
    %v1974 = vshll.u32 %v1971, 16
    %v1975 = vshrl.u32 %v1971, 16
    %v1976 = vshll.u32 %v1972, 16
    %v1977 = vshrl.u32 %v1972, 16
    %vm1978 = vc.u32 %v1970, %v1974
    %v1979 = vsel %vm1978, 1, 0
    %v1980 = vadd.s32 %v1970, %v1974
    %v1981 = vadd.s32 %v1973, %v1979
    %vm1982 = vc.u32 %v1980, %v1976
    %v1983 = vsel %vm1982, 1, 0
    %v1984 = vadd.s32 %v1980, %v1976
    %v1985 = vadd.s32 %v1981, %v1983
    %v1986 = vadd.s32 %v1985, %v1975
    %v1987 = vadd.s32 %v1986, %v1977
    %v1988 = vand.u32 %v1965, 65535
    %v1989 = vshrl.u32 %v1965, 16
    %v1990 = vand.u32 %v1960, 65535
    %v1991 = vshrl.u32 %v1960, 16
    %v1992 = vmul.u32 %v1988, %v1990
    %v1993 = vmul.u32 %v1988, %v1991
    %v1994 = vmul.u32 %v1989, %v1990
    %v1995 = vmul.u32 %v1989, %v1991
    %v1996 = vshll.u32 %v1993, 16
    %v1997 = vshrl.u32 %v1993, 16
    %v1998 = vshll.u32 %v1994, 16
    %v1999 = vshrl.u32 %v1994, 16
    %vm2000 = vc.u32 %v1992, %v1996
    %v2001 = vsel %vm2000, 1, 0
    %v2002 = vadd.s32 %v1992, %v1996
    %v2003 = vadd.s32 %v1995, %v2001
    %vm2004 = vc.u32 %v2002, %v1998
    %v2005 = vsel %vm2004, 1, 0
    %v2006 = vadd.s32 %v2002, %v1998
    %v2007 = vadd.s32 %v2003, %v2005
    %v2008 = vadd.s32 %v2007, %v1997
    %v2009 = vadd.s32 %v2008, %v1999
    %v2010 = vmul.u32 %v1965, %v1956
    %v2011 = vadd.s32 %v1987, %v2006
    %vm2012 = vc.u32 %v1987, %v2006
    %v2013 = vadd.s32 %v2009, 1
    %v2014 = vsel %vm2012, %v2013, %v2009
    %v2015 = vadd.s32 %v2010, %v2014
    %v2016 = vadd.s32 %v2015, 536870912
    %v2017 = vshrl.u32 %v2016, 30
    %v2018 = vshll.u32 %v2017, 30
    %v2019 = vsub.s32 %v2015, %v2018
    %vm2020 = vcmp.lt.s32.totalorder %v2019, 0
    %v2021 = vsub.s32 0, %v2019
    %v2022 = vsel %vm2020, %v2021, %v2019
    %v2023 = vclz %v2022
    %v2024 = vsub.s32 %v2023, 2
    %vm2025 = vcmp.gt.s32.totalorder 0, %v2024
    %v2026 = vsel %vm2025, 0, %v2024
    %v2027 = vsub.s32 32, %v2026
    %v2028 = vshll.u32 %v2019, %v2026
    %v2029 = vshrl.u32 %v2011, %v2027
    %v2030 = vor.u32 %v2028, %v2029
    %v2031 = vsub.s32 4294967266, %v2026
    %v2032 = vadd.s32 %v2031, 127
    %v2033 = vshll.u32 %v2032, 23
    %v2034 = vor.u32 4788187, %v2033
    %v2035 = vand.u32 2147483647, %v2034
    %v2037 = vcvt.s32.f32 %v2030
    %v2038 = vmul.f32 %v2037, %v2035
    %v2039 = vxor.u32 %v2038, 2147483648
    %v2040 = vsel %vm1919, %v2039, %v2038
    %v2041 = vsub.s32 4, %v2017
    %v2042 = vsel %vm1919, %v2041, %v2017
    %v2043 = vsel %vm1918, %v209, %v2040
    %v2044 = vsel %vm1918, 0, %v2042
    %v2045 = vmul.f32 %v2043, %v2043
    %v2046 = vmul.f32 %v2045, -0.001358992
    %v2047 = vadd.f32 %v2046, 0.041655596
    %v2048 = vmul.f32 %v2045, %v2047
    %v2049 = vadd.f32 %v2048, -0.4999988
    %v2050 = vmul.f32 %v2045, %v2049
    %v2051 = vadd.f32 1.0, %v2050
    %v2052 = vmul.f32 %v2043, %v2043
    %v2053 = vmul.f32 %v2052, -0.00019511016
    %v2054 = vadd.f32 %v2053, 0.008332121
    %v2055 = vmul.f32 %v2052, %v2054
    %v2056 = vadd.f32 %v2055, -0.16666654
    %v2057 = vmul.f32 %v2052, %v2056
    %v2058 = vadd.f32 %v2057, 1.0
    %v2059 = vmul.f32 %v2058, %v2043
    %vm2060 = vweird.f32 %v209
    %v2061 = vadd.s32 %v2044, 3
    %v2062 = vand.u32 %v2061, 3
    %vm2063 = vcmp.lt.s32.totalorder %v2062, 2
    %vm2064 = vcmp.eq.s32.totalorder %v2062, 0
    %v2065 = vxor.u32 %v2059, 2147483648
    %v2066 = vsel %vm2064, %v2051, %v2065
    %vm2067 = vcmp.eq.s32.totalorder %v2062, 2
    %v2068 = vxor.u32 %v2051, 2147483648
    %v2069 = vsel %vm2067, %v2068, %v2059
    %v2070 = vsel %vm2063, %v2066, %v2069
    %v2071 = vsel %vm2060, nan, %v2070
    %v2072 = vand.u32 2147483647, %v210
    %vm2073 = vcmp.le.f32.partialorder %v2072, 0.7853982
    %vm2074 = vcmp.lt.s32.totalorder %v210, 0
    %v2075 = vand.u32 %v210, 2139095040
    %v2076 = vshrl.u32 %v2075, 23
    %v2077 = vsub.s32 %v2076, 127
    %v2078 = vand.u32 2147483647, %v210
    %v2079 = vand.u32 %v2078, 8388607
    %v2080 = vor.u32 %v2079, 8388608
    %v2081 = vsub.s32 0, %v2080
    %v2082 = vadd.s32 %v2077, 1
    %vm2083 = vcmp.gt.s32.totalorder %v2082, 0
    %v2084 = vsel %vm2083, %v2082, 0
    %v2085 = vshrl.u32 %v2084, 5
    %v2086 = vand.u32 %v2084, 31
    %v2087 = vsub.s32 32, %v2086
    %v2088 = vshrl.u32 683565275, %v2087
    %v2089 = vshll.u32 683565275, %v2086
    %v2090 = vshrl.u32 2475754826, %v2087
    %v2091 = vor.u32 %v2089, %v2090
    %v2092 = vshll.u32 2475754826, %v2086
    %v2093 = vshrl.u32 2131351028, %v2087
    %v2094 = vor.u32 %v2092, %v2093
    %v2095 = vshll.u32 2131351028, %v2086
    %v2096 = vshrl.u32 2102212464, %v2087
    %v2097 = vor.u32 %v2095, %v2096
    %v2098 = vshll.u32 2102212464, %v2086
    %v2099 = vshrl.u32 920167782, %v2087
    %v2100 = vor.u32 %v2098, %v2099
    %v2101 = vshll.u32 920167782, %v2086
    %v2102 = vshrl.u32 1326507024, %v2087
    %v2103 = vor.u32 %v2101, %v2102
    %vm2104 = vcmp.lt.s32.totalorder %v2085, 1
    %vm2105 = vcmp.lt.s32.totalorder %v2085, 2
    %vm2106 = vcmp.lt.s32.totalorder %v2085, 3
    %vm2107 = vcmp.lt.s32.totalorder %v2085, 4
    %v2108 = vsel %vm2104, %v2088, %v2091
    %v2109 = vsel %vm2107, %v2097, 2102212464
    %v2110 = vsel %vm2106, %v2094, %v2109
    %v2111 = vsel %vm2105, %v2108, %v2110
    %v2112 = vsel %vm2104, %v2091, %v2094
    %v2113 = vsel %vm2107, %v2100, 920167782
    %v2114 = vsel %vm2106, %v2097, %v2113
    %v2115 = vsel %vm2105, %v2112, %v2114
    %v2116 = vsel %vm2104, %v2094, %v2097
    %v2117 = vsel %vm2107, %v2103, 1326507024
    %v2118 = vsel %vm2106, %v2100, %v2117
    %v2119 = vsel %vm2105, %v2116, %v2118
    %v2120 = vshll.u32 %v2080, 8
    %v2121 = vand.u32 %v2120, 65535
    %v2122 = vshrl.u32 %v2120, 16
    %v2123 = vand.u32 %v2119, 65535
    %v2124 = vshrl.u32 %v2119, 16
    %v2125 = vmul.u32 %v2121, %v2123
    %v2126 = vmul.u32 %v2121, %v2124
    %v2127 = vmul.u32 %v2122, %v2123
    %v2128 = vmul.u32 %v2122, %v2124
    %v2129 = vshll.u32 %v2126, 16
    %v2130 = vshrl.u32 %v2126, 16
    %v2131 = vshll.u32 %v2127, 16
    %v2132 = vshrl.u32 %v2127, 16
    %vm2133 = vc.u32 %v2125, %v2129
    %v2134 = vsel %vm2133, 1, 0
    %v2135 = vadd.s32 %v2125, %v2129
    %v2136 = vadd.s32 %v2128, %v2134
    %vm2137 = vc.u32 %v2135, %v2131
    %v2138 = vsel %vm2137, 1, 0
    %v2139 = vadd.s32 %v2135, %v2131
    %v2140 = vadd.s32 %v2136, %v2138
    %v2141 = vadd.s32 %v2140, %v2130
    %v2142 = vadd.s32 %v2141, %v2132
    %v2143 = vand.u32 %v2120, 65535
    %v2144 = vshrl.u32 %v2120, 16
    %v2145 = vand.u32 %v2115, 65535
    %v2146 = vshrl.u32 %v2115, 16
    %v2147 = vmul.u32 %v2143, %v2145
    %v2148 = vmul.u32 %v2143, %v2146
    %v2149 = vmul.u32 %v2144, %v2145
    %v2150 = vmul.u32 %v2144, %v2146
    %v2151 = vshll.u32 %v2148, 16
    %v2152 = vshrl.u32 %v2148, 16
    %v2153 = vshll.u32 %v2149, 16
    %v2154 = vshrl.u32 %v2149, 16
    %vm2155 = vc.u32 %v2147, %v2151
    %v2156 = vsel %vm2155, 1, 0
    %v2157 = vadd.s32 %v2147, %v2151
    %v2158 = vadd.s32 %v2150, %v2156
    %vm2159 = vc.u32 %v2157, %v2153
    %v2160 = vsel %vm2159, 1, 0
    %v2161 = vadd.s32 %v2157, %v2153
    %v2162 = vadd.s32 %v2158, %v2160
    %v2163 = vadd.s32 %v2162, %v2152
    %v2164 = vadd.s32 %v2163, %v2154
    %v2165 = vmul.u32 %v2120, %v2111
    %v2166 = vadd.s32 %v2142, %v2161
    %vm2167 = vc.u32 %v2142, %v2161
    %v2168 = vadd.s32 %v2164, 1
    %v2169 = vsel %vm2167, %v2168, %v2164
    %v2170 = vadd.s32 %v2165, %v2169
    %v2171 = vadd.s32 %v2170, 536870912
    %v2172 = vshrl.u32 %v2171, 30
    %v2173 = vshll.u32 %v2172, 30
    %v2174 = vsub.s32 %v2170, %v2173
    %vm2175 = vcmp.lt.s32.totalorder %v2174, 0
    %v2176 = vsub.s32 0, %v2174
    %v2177 = vsel %vm2175, %v2176, %v2174
    %v2178 = vclz %v2177
    %v2179 = vsub.s32 %v2178, 2
    %vm2180 = vcmp.gt.s32.totalorder 0, %v2179
    %v2181 = vsel %vm2180, 0, %v2179
    %v2182 = vsub.s32 32, %v2181
    %v2183 = vshll.u32 %v2174, %v2181
    %v2184 = vshrl.u32 %v2166, %v2182
    %v2185 = vor.u32 %v2183, %v2184
    %v2186 = vsub.s32 4294967266, %v2181
    %v2187 = vadd.s32 %v2186, 127
    %v2188 = vshll.u32 %v2187, 23
    %v2189 = vor.u32 4788187, %v2188
    %v2190 = vand.u32 2147483647, %v2189
    %v2192 = vcvt.s32.f32 %v2185
    %v2193 = vmul.f32 %v2192, %v2190
    %v2194 = vxor.u32 %v2193, 2147483648
    %v2195 = vsel %vm2074, %v2194, %v2193
    %v2196 = vsub.s32 4, %v2172
    %v2197 = vsel %vm2074, %v2196, %v2172
    %v2198 = vsel %vm2073, %v210, %v2195
    %v2199 = vsel %vm2073, 0, %v2197
    %v2200 = vmul.f32 %v2198, %v2198
    %v2201 = vmul.f32 %v2200, -0.001358992
    %v2202 = vadd.f32 %v2201, 0.041655596
    %v2203 = vmul.f32 %v2200, %v2202
    %v2204 = vadd.f32 %v2203, -0.4999988
    %v2205 = vmul.f32 %v2200, %v2204
    %v2206 = vadd.f32 1.0, %v2205
    %v2207 = vmul.f32 %v2198, %v2198
    %v2208 = vmul.f32 %v2207, -0.00019511016
    %v2209 = vadd.f32 %v2208, 0.008332121
    %v2210 = vmul.f32 %v2207, %v2209
    %v2211 = vadd.f32 %v2210, -0.16666654
    %v2212 = vmul.f32 %v2207, %v2211
    %v2213 = vadd.f32 %v2212, 1.0
    %v2214 = vmul.f32 %v2213, %v2198
    %vm2215 = vweird.f32 %v210
    %v2216 = vadd.s32 %v2199, 3
    %v2217 = vand.u32 %v2216, 3
    %vm2218 = vcmp.lt.s32.totalorder %v2217, 2
    %vm2219 = vcmp.eq.s32.totalorder %v2217, 0
    %v2220 = vxor.u32 %v2214, 2147483648
    %v2221 = vsel %vm2219, %v2206, %v2220
    %vm2222 = vcmp.eq.s32.totalorder %v2217, 2
    %v2223 = vxor.u32 %v2206, 2147483648
    %v2224 = vsel %vm2222, %v2223, %v2214
    %v2225 = vsel %vm2218, %v2221, %v2224
    %v2226 = vsel %vm2215, nan, %v2225
    %v2227 = vand.u32 2147483647, %v211
    %vm2228 = vcmp.le.f32.partialorder %v2227, 0.7853982
    %vm2229 = vcmp.lt.s32.totalorder %v211, 0
    %v2230 = vand.u32 %v211, 2139095040
    %v2231 = vshrl.u32 %v2230, 23
    %v2232 = vsub.s32 %v2231, 127
    %v2233 = vand.u32 2147483647, %v211
    %v2234 = vand.u32 %v2233, 8388607
    %v2235 = vor.u32 %v2234, 8388608
    %v2236 = vsub.s32 0, %v2235
    %v2237 = vadd.s32 %v2232, 1
    %vm2238 = vcmp.gt.s32.totalorder %v2237, 0
    %v2239 = vsel %vm2238, %v2237, 0
    %v2240 = vshrl.u32 %v2239, 5
    %v2241 = vand.u32 %v2239, 31
    %v2242 = vsub.s32 32, %v2241
    %v2243 = vshrl.u32 683565275, %v2242
    %v2244 = vshll.u32 683565275, %v2241
    %v2245 = vshrl.u32 2475754826, %v2242
    %v2246 = vor.u32 %v2244, %v2245
    %v2247 = vshll.u32 2475754826, %v2241
    %v2248 = vshrl.u32 2131351028, %v2242
    %v2249 = vor.u32 %v2247, %v2248
    %v2250 = vshll.u32 2131351028, %v2241
    %v2251 = vshrl.u32 2102212464, %v2242
    %v2252 = vor.u32 %v2250, %v2251
    %v2253 = vshll.u32 2102212464, %v2241
    %v2254 = vshrl.u32 920167782, %v2242
    %v2255 = vor.u32 %v2253, %v2254
    %v2256 = vshll.u32 920167782, %v2241
    %v2257 = vshrl.u32 1326507024, %v2242
    %v2258 = vor.u32 %v2256, %v2257
    %vm2259 = vcmp.lt.s32.totalorder %v2240, 1
    %vm2260 = vcmp.lt.s32.totalorder %v2240, 2
    %vm2261 = vcmp.lt.s32.totalorder %v2240, 3
    %vm2262 = vcmp.lt.s32.totalorder %v2240, 4
    %v2263 = vsel %vm2259, %v2243, %v2246
    %v2264 = vsel %vm2262, %v2252, 2102212464
    %v2265 = vsel %vm2261, %v2249, %v2264
    %v2266 = vsel %vm2260, %v2263, %v2265
    %v2267 = vsel %vm2259, %v2246, %v2249
    %v2268 = vsel %vm2262, %v2255, 920167782
    %v2269 = vsel %vm2261, %v2252, %v2268
    %v2270 = vsel %vm2260, %v2267, %v2269
    %v2271 = vsel %vm2259, %v2249, %v2252
    %v2272 = vsel %vm2262, %v2258, 1326507024
    %v2273 = vsel %vm2261, %v2255, %v2272
    %v2274 = vsel %vm2260, %v2271, %v2273
    %v2275 = vshll.u32 %v2235, 8
    %v2276 = vand.u32 %v2275, 65535
    %v2277 = vshrl.u32 %v2275, 16
    %v2278 = vand.u32 %v2274, 65535
    %v2279 = vshrl.u32 %v2274, 16
    %v2280 = vmul.u32 %v2276, %v2278
    %v2281 = vmul.u32 %v2276, %v2279
    %v2282 = vmul.u32 %v2277, %v2278
    %v2283 = vmul.u32 %v2277, %v2279
    %v2284 = vshll.u32 %v2281, 16
    %v2285 = vshrl.u32 %v2281, 16
    %v2286 = vshll.u32 %v2282, 16
    %v2287 = vshrl.u32 %v2282, 16
    %vm2288 = vc.u32 %v2280, %v2284
    %v2289 = vsel %vm2288, 1, 0
    %v2290 = vadd.s32 %v2280, %v2284
    %v2291 = vadd.s32 %v2283, %v2289
    %vm2292 = vc.u32 %v2290, %v2286
    %v2293 = vsel %vm2292, 1, 0
    %v2294 = vadd.s32 %v2290, %v2286
    %v2295 = vadd.s32 %v2291, %v2293
    %v2296 = vadd.s32 %v2295, %v2285
    %v2297 = vadd.s32 %v2296, %v2287
    %v2298 = vand.u32 %v2275, 65535
    %v2299 = vshrl.u32 %v2275, 16
    %v2300 = vand.u32 %v2270, 65535
    %v2301 = vshrl.u32 %v2270, 16
    %v2302 = vmul.u32 %v2298, %v2300
    %v2303 = vmul.u32 %v2298, %v2301
    %v2304 = vmul.u32 %v2299, %v2300
    %v2305 = vmul.u32 %v2299, %v2301
    %v2306 = vshll.u32 %v2303, 16
    %v2307 = vshrl.u32 %v2303, 16
    %v2308 = vshll.u32 %v2304, 16
    %v2309 = vshrl.u32 %v2304, 16
    %vm2310 = vc.u32 %v2302, %v2306
    %v2311 = vsel %vm2310, 1, 0
    %v2312 = vadd.s32 %v2302, %v2306
    %v2313 = vadd.s32 %v2305, %v2311
    %vm2314 = vc.u32 %v2312, %v2308
    %v2315 = vsel %vm2314, 1, 0
    %v2316 = vadd.s32 %v2312, %v2308
    %v2317 = vadd.s32 %v2313, %v2315
    %v2318 = vadd.s32 %v2317, %v2307
    %v2319 = vadd.s32 %v2318, %v2309
    %v2320 = vmul.u32 %v2275, %v2266
    %v2321 = vadd.s32 %v2297, %v2316
    %vm2322 = vc.u32 %v2297, %v2316
    %v2323 = vadd.s32 %v2319, 1
    %v2324 = vsel %vm2322, %v2323, %v2319
    %v2325 = vadd.s32 %v2320, %v2324
    %v2326 = vadd.s32 %v2325, 536870912
    %v2327 = vshrl.u32 %v2326, 30
    %v2328 = vshll.u32 %v2327, 30
    %v2329 = vsub.s32 %v2325, %v2328
    %vm2330 = vcmp.lt.s32.totalorder %v2329, 0
    %v2331 = vsub.s32 0, %v2329
    %v2332 = vsel %vm2330, %v2331, %v2329
    %v2333 = vclz %v2332
    %v2334 = vsub.s32 %v2333, 2
    %vm2335 = vcmp.gt.s32.totalorder 0, %v2334
    %v2336 = vsel %vm2335, 0, %v2334
    %v2337 = vsub.s32 32, %v2336
    %v2338 = vshll.u32 %v2329, %v2336
    %v2339 = vshrl.u32 %v2321, %v2337
    %v2340 = vor.u32 %v2338, %v2339
    %v2341 = vsub.s32 4294967266, %v2336
    %v2342 = vadd.s32 %v2341, 127
    %v2343 = vshll.u32 %v2342, 23
    %v2344 = vor.u32 4788187, %v2343
    %v2345 = vand.u32 2147483647, %v2344
    %v2347 = vcvt.s32.f32 %v2340
    %v2348 = vmul.f32 %v2347, %v2345
    %v2349 = vxor.u32 %v2348, 2147483648
    %v2350 = vsel %vm2229, %v2349, %v2348
    %v2351 = vsub.s32 4, %v2327
    %v2352 = vsel %vm2229, %v2351, %v2327
    %v2353 = vsel %vm2228, %v211, %v2350
    %v2354 = vsel %vm2228, 0, %v2352
    %v2355 = vmul.f32 %v2353, %v2353
    %v2356 = vmul.f32 %v2355, -0.001358992
    %v2357 = vadd.f32 %v2356, 0.041655596
    %v2358 = vmul.f32 %v2355, %v2357
    %v2359 = vadd.f32 %v2358, -0.4999988
    %v2360 = vmul.f32 %v2355, %v2359
    %v2361 = vadd.f32 1.0, %v2360
    %v2362 = vmul.f32 %v2353, %v2353
    %v2363 = vmul.f32 %v2362, -0.00019511016
    %v2364 = vadd.f32 %v2363, 0.008332121
    %v2365 = vmul.f32 %v2362, %v2364
    %v2366 = vadd.f32 %v2365, -0.16666654
    %v2367 = vmul.f32 %v2362, %v2366
    %v2368 = vadd.f32 %v2367, 1.0
    %v2369 = vmul.f32 %v2368, %v2353
    %vm2370 = vweird.f32 %v211
    %v2371 = vadd.s32 %v2354, 3
    %v2372 = vand.u32 %v2371, 3
    %vm2373 = vcmp.lt.s32.totalorder %v2372, 2
    %vm2374 = vcmp.eq.s32.totalorder %v2372, 0
    %v2375 = vxor.u32 %v2369, 2147483648
    %v2376 = vsel %vm2374, %v2361, %v2375
    %vm2377 = vcmp.eq.s32.totalorder %v2372, 2
    %v2378 = vxor.u32 %v2361, 2147483648
    %v2379 = vsel %vm2377, %v2378, %v2369
    %v2380 = vsel %vm2373, %v2376, %v2379
    %v2381 = vsel %vm2370, nan, %v2380
    %v2382 = vld [vmem:[%s4] sm:$0xff]
    %v2383 = vld [vmem:[%s4 + $0x8] sm:$0xff]
    %v2384 = vld [vmem:[%s4 + $0x10] sm:$0xff]
    %v2385 = vld [vmem:[%s4 + $0x18] sm:$0xff]
    %v2386 = vld [vmem:[%s4 + $0x20] sm:$0xff]
    %v2387 = vld [vmem:[%s4 + $0x28] sm:$0xff]
    %v2388 = vld [vmem:[%s4 + $0x30] sm:$0x3]
    %v2389 = vld [vmem:[%s5] sm:$0xff]
    %v2390 = vld [vmem:[%s5 + $0x8] sm:$0xff]
    %v2391 = vld [vmem:[%s5 + $0x10] sm:$0xff]
    %v2392 = vld [vmem:[%s5 + $0x18] sm:$0xff]
    %v2393 = vld [vmem:[%s5 + $0x20] sm:$0xff]
    %v2394 = vld [vmem:[%s5 + $0x28] sm:$0xff]
    %v2395 = vld [vmem:[%s5 + $0x30] sm:$0x3]
    %2397 = vset.pattern.permute.xlu0 0
    %2398 = vperm.xlu0 %2397, %v2389
    %v2399 = vpop.permute.xlu0 %2398
    %2402 = vset.pattern.permute.xlu0 0
    %2403 = vperm.xlu0 %2402, %v2390
    %v2404 = vpop.permute.xlu0 %2403
    %2407 = vset.pattern.permute.xlu0 0
    %2408 = vperm.xlu0 %2407, %v2391
    %v2409 = vpop.permute.xlu0 %2408
    %2412 = vset.pattern.permute.xlu0 0
    %2413 = vperm.xlu0 %2412, %v2392
    %v2414 = vpop.permute.xlu0 %2413
    %2417 = vset.pattern.permute.xlu0 0
    %2418 = vperm.xlu0 %2417, %v2393
    %v2419 = vpop.permute.xlu0 %2418
    %2422 = vset.pattern.permute.xlu0 0
    %2423 = vperm.xlu0 %2422, %v2394
    %v2424 = vpop.permute.xlu0 %2423
    %2427 = vset.pattern.permute.xlu0 0
    %2428 = vperm.xlu0 %2427, %v2395
    %v2429 = vpop.permute.xlu0 %2428
    %vm2431 = vcmask 408576
    %v2433 = vsel %vm2431, %v2382, 0
    %v2436 = vsel %vm2431, %v2383, 0
    %v2439 = vsel %vm2431, %v2384, 0
    %v2442 = vsel %vm2431, %v2385, 0
    %v2445 = vsel %vm2431, %v2386, 0
    %v2448 = vsel %vm2431, %v2387, 0
    %v2451 = vsel %vm2431, %v2388, 0
    %vm2453 = vcmask 1041408
    %v2455 = vsel %vm2453, %v2226, 0
    %v2458 = vsel %vm2453, %v2381, 0
    %2460 = vmatpush.msra.mxu0 0.0
    %2461 = vmatpush.msra.mxu0 0.0
    %2462 = vmatpush.msra.mxu0 0.0
    %2463 = vmatpush.msra.mxu0 0.0
    %2464 = vmatpush.msra.mxu0 0.0
    %2465 = vmatpush.msra.mxu0 0.0
    %2466 = vmatpush.msra.mxu0 0.0
    %2467 = vmatpush.msra.mxu0 0.0
    %2468 = vmatpush.msra.mxu0 0.0
    %2469 = vmatpush.msra.mxu0 %v2455
    %2470 = vmatpush.msra.mxu0 %v1916
    %2471 = vmatpush.msra.mxu0 %v1606
    %2472 = vmatpush.msra.mxu0 %v1296
    %2473 = vmatpush.msra.mxu0 %v986
    %2474 = vmatpush.msra.mxu0 %v676
    %2475 = vmatpush.msra.mxu0 %v366
    %2476 = vmatmul.f32.gmra.mxu0 %v2433
    %v2477 = vpop.f32.mrf.mxu0
    %v2478 = vadd.f32 %v2399, %v2477
    %2479 = vmatmul.f32.gmra.mxu0 %v2436
    %v2480 = vpop.f32.mrf.mxu0
    %v2481 = vadd.f32 %v2404, %v2480
    %2482 = vmatmul.f32.gmra.mxu0 %v2439
    %v2483 = vpop.f32.mrf.mxu0
    %v2484 = vadd.f32 %v2409, %v2483
    %2485 = vmatmul.f32.gmra.mxu0 %v2442
    %v2486 = vpop.f32.mrf.mxu0
    %v2487 = vadd.f32 %v2414, %v2486
    %2488 = vmatmul.f32.gmra.mxu0 %v2445
    %v2489 = vpop.f32.mrf.mxu0
    %v2490 = vadd.f32 %v2419, %v2489
    %2491 = vmatmul.f32.gmra.mxu0 %v2448
    %v2492 = vpop.f32.mrf.mxu0
    %v2493 = vadd.f32 %v2424, %v2492
    %2494 = vmatmul.f32.gmra.mxu0 %v2451
    %v2495 = vpop.f32.mrf.mxu0
    %v2496 = vadd.f32 %v2429, %v2495
    %2497 = vdwg.mxu0
    %2498 = vmatpush.msra.mxu0 0.0
    %2499 = vmatpush.msra.mxu0 0.0
    %2500 = vmatpush.msra.mxu0 0.0
    %2501 = vmatpush.msra.mxu0 0.0
    %2502 = vmatpush.msra.mxu0 0.0
    %2503 = vmatpush.msra.mxu0 0.0
    %2504 = vmatpush.msra.mxu0 0.0
    %2505 = vmatpush.msra.mxu0 0.0
    %2506 = vmatpush.msra.mxu0 0.0
    %2507 = vmatpush.msra.mxu0 %v2458
    %2508 = vmatpush.msra.mxu0 %v2071
    %2509 = vmatpush.msra.mxu0 %v1761
    %2510 = vmatpush.msra.mxu0 %v1451
    %2511 = vmatpush.msra.mxu0 %v1141
    %2512 = vmatpush.msra.mxu0 %v831
    %2513 = vmatpush.msra.mxu0 %v521
    %2514 = vmatmul.f32.gmra.mxu0 %v2433
    %v2515 = vpop.f32.mrf.mxu0
    %v2516 = vadd.f32 %v2399, %v2515
    %2517 = vmatmul.f32.gmra.mxu0 %v2436
    %v2518 = vpop.f32.mrf.mxu0
    %v2519 = vadd.f32 %v2404, %v2518
    %2520 = vmatmul.f32.gmra.mxu0 %v2439
    %v2521 = vpop.f32.mrf.mxu0
    %v2522 = vadd.f32 %v2409, %v2521
    %2523 = vmatmul.f32.gmra.mxu0 %v2442
    %v2524 = vpop.f32.mrf.mxu0
    %v2525 = vadd.f32 %v2414, %v2524
    %2526 = vmatmul.f32.gmra.mxu0 %v2445
    %v2527 = vpop.f32.mrf.mxu0
    %v2528 = vadd.f32 %v2419, %v2527
    %2529 = vmatmul.f32.gmra.mxu0 %v2448
    %v2530 = vpop.f32.mrf.mxu0
    %v2531 = vadd.f32 %v2424, %v2530
    %2532 = vmatmul.f32.gmra.mxu0 %v2451
    %v2533 = vpop.f32.mrf.mxu0
    %v2534 = vadd.f32 %v2429, %v2533
    %2535 = vdwg.mxu0
    %v2536 = vand.u32 2147483647, %v2478
    %vm2537 = vcmp.le.f32.partialorder %v2536, 0.7853982
    %vm2538 = vcmp.lt.s32.totalorder %v2478, 0
    %v2539 = vand.u32 %v2478, 2139095040
    %v2540 = vshrl.u32 %v2539, 23
    %v2541 = vsub.s32 %v2540, 127
    %v2542 = vand.u32 2147483647, %v2478
    %v2543 = vand.u32 %v2542, 8388607
    %v2544 = vor.u32 %v2543, 8388608
    %v2545 = vsub.s32 0, %v2544
    %v2546 = vadd.s32 %v2541, 1
    %vm2547 = vcmp.gt.s32.totalorder %v2546, 0
    %v2548 = vsel %vm2547, %v2546, 0
    %v2549 = vshrl.u32 %v2548, 5
    %v2550 = vand.u32 %v2548, 31
    %v2551 = vsub.s32 32, %v2550
    %v2552 = vshrl.u32 683565275, %v2551
    %v2553 = vshll.u32 683565275, %v2550
    %v2554 = vshrl.u32 2475754826, %v2551
    %v2555 = vor.u32 %v2553, %v2554
    %v2556 = vshll.u32 2475754826, %v2550
    %v2557 = vshrl.u32 2131351028, %v2551
    %v2558 = vor.u32 %v2556, %v2557
    %v2559 = vshll.u32 2131351028, %v2550
    %v2560 = vshrl.u32 2102212464, %v2551
    %v2561 = vor.u32 %v2559, %v2560
    %v2562 = vshll.u32 2102212464, %v2550
    %v2563 = vshrl.u32 920167782, %v2551
    %v2564 = vor.u32 %v2562, %v2563
    %v2565 = vshll.u32 920167782, %v2550
    %v2566 = vshrl.u32 1326507024, %v2551
    %v2567 = vor.u32 %v2565, %v2566
    %vm2568 = vcmp.lt.s32.totalorder %v2549, 1
    %vm2569 = vcmp.lt.s32.totalorder %v2549, 2
    %vm2570 = vcmp.lt.s32.totalorder %v2549, 3
    %vm2571 = vcmp.lt.s32.totalorder %v2549, 4
    %v2572 = vsel %vm2568, %v2552, %v2555
    %v2573 = vsel %vm2571, %v2561, 2102212464
    %v2574 = vsel %vm2570, %v2558, %v2573
    %v2575 = vsel %vm2569, %v2572, %v2574
    %v2576 = vsel %vm2568, %v2555, %v2558
    %v2577 = vsel %vm2571, %v2564, 920167782
    %v2578 = vsel %vm2570, %v2561, %v2577
    %v2579 = vsel %vm2569, %v2576, %v2578
    %v2580 = vsel %vm2568, %v2558, %v2561
    %v2581 = vsel %vm2571, %v2567, 1326507024
    %v2582 = vsel %vm2570, %v2564, %v2581
    %v2583 = vsel %vm2569, %v2580, %v2582
    %v2584 = vshll.u32 %v2544, 8
    %v2585 = vand.u32 %v2584, 65535
    %v2586 = vshrl.u32 %v2584, 16
    %v2587 = vand.u32 %v2583, 65535
    %v2588 = vshrl.u32 %v2583, 16
    %v2589 = vmul.u32 %v2585, %v2587
    %v2590 = vmul.u32 %v2585, %v2588
    %v2591 = vmul.u32 %v2586, %v2587
    %v2592 = vmul.u32 %v2586, %v2588
    %v2593 = vshll.u32 %v2590, 16
    %v2594 = vshrl.u32 %v2590, 16
    %v2595 = vshll.u32 %v2591, 16
    %v2596 = vshrl.u32 %v2591, 16
    %vm2597 = vc.u32 %v2589, %v2593
    %v2598 = vsel %vm2597, 1, 0
    %v2599 = vadd.s32 %v2589, %v2593
    %v2600 = vadd.s32 %v2592, %v2598
    %vm2601 = vc.u32 %v2599, %v2595
    %v2602 = vsel %vm2601, 1, 0
    %v2603 = vadd.s32 %v2599, %v2595
    %v2604 = vadd.s32 %v2600, %v2602
    %v2605 = vadd.s32 %v2604, %v2594
    %v2606 = vadd.s32 %v2605, %v2596
    %v2607 = vand.u32 %v2584, 65535
    %v2608 = vshrl.u32 %v2584, 16
    %v2609 = vand.u32 %v2579, 65535
    %v2610 = vshrl.u32 %v2579, 16
    %v2611 = vmul.u32 %v2607, %v2609
    %v2612 = vmul.u32 %v2607, %v2610
    %v2613 = vmul.u32 %v2608, %v2609
    %v2614 = vmul.u32 %v2608, %v2610
    %v2615 = vshll.u32 %v2612, 16
    %v2616 = vshrl.u32 %v2612, 16
    %v2617 = vshll.u32 %v2613, 16
    %v2618 = vshrl.u32 %v2613, 16
    %vm2619 = vc.u32 %v2611, %v2615
    %v2620 = vsel %vm2619, 1, 0
    %v2621 = vadd.s32 %v2611, %v2615
    %v2622 = vadd.s32 %v2614, %v2620
    %vm2623 = vc.u32 %v2621, %v2617
    %v2624 = vsel %vm2623, 1, 0
    %v2625 = vadd.s32 %v2621, %v2617
    %v2626 = vadd.s32 %v2622, %v2624
    %v2627 = vadd.s32 %v2626, %v2616
    %v2628 = vadd.s32 %v2627, %v2618
    %v2629 = vmul.u32 %v2584, %v2575
    %v2630 = vadd.s32 %v2606, %v2625
    %vm2631 = vc.u32 %v2606, %v2625
    %v2632 = vadd.s32 %v2628, 1
    %v2633 = vsel %vm2631, %v2632, %v2628
    %v2634 = vadd.s32 %v2629, %v2633
    %v2635 = vadd.s32 %v2634, 536870912
    %v2636 = vshrl.u32 %v2635, 30
    %v2637 = vshll.u32 %v2636, 30
    %v2638 = vsub.s32 %v2634, %v2637
    %vm2639 = vcmp.lt.s32.totalorder %v2638, 0
    %v2640 = vsub.s32 0, %v2638
    %v2641 = vsel %vm2639, %v2640, %v2638
    %v2642 = vclz %v2641
    %v2643 = vsub.s32 %v2642, 2
    %vm2644 = vcmp.gt.s32.totalorder 0, %v2643
    %v2645 = vsel %vm2644, 0, %v2643
    %v2646 = vsub.s32 32, %v2645
    %v2647 = vshll.u32 %v2638, %v2645
    %v2648 = vshrl.u32 %v2630, %v2646
    %v2649 = vor.u32 %v2647, %v2648
    %v2650 = vsub.s32 4294967266, %v2645
    %v2651 = vadd.s32 %v2650, 127
    %v2652 = vshll.u32 %v2651, 23
    %v2653 = vor.u32 4788187, %v2652
    %v2654 = vand.u32 2147483647, %v2653
    %v2656 = vcvt.s32.f32 %v2649
    %v2657 = vmul.f32 %v2656, %v2654
    %v2658 = vxor.u32 %v2657, 2147483648
    %v2659 = vsel %vm2538, %v2658, %v2657
    %v2660 = vsub.s32 4, %v2636
    %v2661 = vsel %vm2538, %v2660, %v2636
    %v2662 = vsel %vm2537, %v2478, %v2659
    %v2663 = vsel %vm2537, 0, %v2661
    %v2664 = vmul.f32 %v2662, %v2662
    %v2665 = vmul.f32 %v2664, -0.001358992
    %v2666 = vadd.f32 %v2665, 0.041655596
    %v2667 = vmul.f32 %v2664, %v2666
    %v2668 = vadd.f32 %v2667, -0.4999988
    %v2669 = vmul.f32 %v2664, %v2668
    %v2670 = vadd.f32 1.0, %v2669
    %v2671 = vmul.f32 %v2662, %v2662
    %v2672 = vmul.f32 %v2671, -0.00019511016
    %v2673 = vadd.f32 %v2672, 0.008332121
    %v2674 = vmul.f32 %v2671, %v2673
    %v2675 = vadd.f32 %v2674, -0.16666654
    %v2676 = vmul.f32 %v2671, %v2675
    %v2677 = vadd.f32 %v2676, 1.0
    %v2678 = vmul.f32 %v2677, %v2662
    %vm2679 = vweird.f32 %v2478
    %v2680 = vadd.s32 %v2663, 3
    %v2681 = vand.u32 %v2680, 3
    %vm2682 = vcmp.lt.s32.totalorder %v2681, 2
    %vm2683 = vcmp.eq.s32.totalorder %v2681, 0
    %v2684 = vxor.u32 %v2678, 2147483648
    %v2685 = vsel %vm2683, %v2670, %v2684
    %vm2686 = vcmp.eq.s32.totalorder %v2681, 2
    %v2687 = vxor.u32 %v2670, 2147483648
    %v2688 = vsel %vm2686, %v2687, %v2678
    %v2689 = vsel %vm2682, %v2685, %v2688
    %v2690 = vsel %vm2679, nan, %v2689
    %v2691 = vand.u32 2147483647, %v2516
    %vm2692 = vcmp.le.f32.partialorder %v2691, 0.7853982
    %vm2693 = vcmp.lt.s32.totalorder %v2516, 0
    %v2694 = vand.u32 %v2516, 2139095040
    %v2695 = vshrl.u32 %v2694, 23
    %v2696 = vsub.s32 %v2695, 127
    %v2697 = vand.u32 2147483647, %v2516
    %v2698 = vand.u32 %v2697, 8388607
    %v2699 = vor.u32 %v2698, 8388608
    %v2700 = vsub.s32 0, %v2699
    %v2701 = vadd.s32 %v2696, 1
    %vm2702 = vcmp.gt.s32.totalorder %v2701, 0
    %v2703 = vsel %vm2702, %v2701, 0
    %v2704 = vshrl.u32 %v2703, 5
    %v2705 = vand.u32 %v2703, 31
    %v2706 = vsub.s32 32, %v2705
    %v2707 = vshrl.u32 683565275, %v2706
    %v2708 = vshll.u32 683565275, %v2705
    %v2709 = vshrl.u32 2475754826, %v2706
    %v2710 = vor.u32 %v2708, %v2709
    %v2711 = vshll.u32 2475754826, %v2705
    %v2712 = vshrl.u32 2131351028, %v2706
    %v2713 = vor.u32 %v2711, %v2712
    %v2714 = vshll.u32 2131351028, %v2705
    %v2715 = vshrl.u32 2102212464, %v2706
    %v2716 = vor.u32 %v2714, %v2715
    %v2717 = vshll.u32 2102212464, %v2705
    %v2718 = vshrl.u32 920167782, %v2706
    %v2719 = vor.u32 %v2717, %v2718
    %v2720 = vshll.u32 920167782, %v2705
    %v2721 = vshrl.u32 1326507024, %v2706
    %v2722 = vor.u32 %v2720, %v2721
    %vm2723 = vcmp.lt.s32.totalorder %v2704, 1
    %vm2724 = vcmp.lt.s32.totalorder %v2704, 2
    %vm2725 = vcmp.lt.s32.totalorder %v2704, 3
    %vm2726 = vcmp.lt.s32.totalorder %v2704, 4
    %v2727 = vsel %vm2723, %v2707, %v2710
    %v2728 = vsel %vm2726, %v2716, 2102212464
    %v2729 = vsel %vm2725, %v2713, %v2728
    %v2730 = vsel %vm2724, %v2727, %v2729
    %v2731 = vsel %vm2723, %v2710, %v2713
    %v2732 = vsel %vm2726, %v2719, 920167782
    %v2733 = vsel %vm2725, %v2716, %v2732
    %v2734 = vsel %vm2724, %v2731, %v2733
    %v2735 = vsel %vm2723, %v2713, %v2716
    %v2736 = vsel %vm2726, %v2722, 1326507024
    %v2737 = vsel %vm2725, %v2719, %v2736
    %v2738 = vsel %vm2724, %v2735, %v2737
    %v2739 = vshll.u32 %v2699, 8
    %v2740 = vand.u32 %v2739, 65535
    %v2741 = vshrl.u32 %v2739, 16
    %v2742 = vand.u32 %v2738, 65535
    %v2743 = vshrl.u32 %v2738, 16
    %v2744 = vmul.u32 %v2740, %v2742
    %v2745 = vmul.u32 %v2740, %v2743
    %v2746 = vmul.u32 %v2741, %v2742
    %v2747 = vmul.u32 %v2741, %v2743
    %v2748 = vshll.u32 %v2745, 16
    %v2749 = vshrl.u32 %v2745, 16
    %v2750 = vshll.u32 %v2746, 16
    %v2751 = vshrl.u32 %v2746, 16
    %vm2752 = vc.u32 %v2744, %v2748
    %v2753 = vsel %vm2752, 1, 0
    %v2754 = vadd.s32 %v2744, %v2748
    %v2755 = vadd.s32 %v2747, %v2753
    %vm2756 = vc.u32 %v2754, %v2750
    %v2757 = vsel %vm2756, 1, 0
    %v2758 = vadd.s32 %v2754, %v2750
    %v2759 = vadd.s32 %v2755, %v2757
    %v2760 = vadd.s32 %v2759, %v2749
    %v2761 = vadd.s32 %v2760, %v2751
    %v2762 = vand.u32 %v2739, 65535
    %v2763 = vshrl.u32 %v2739, 16
    %v2764 = vand.u32 %v2734, 65535
    %v2765 = vshrl.u32 %v2734, 16
    %v2766 = vmul.u32 %v2762, %v2764
    %v2767 = vmul.u32 %v2762, %v2765
    %v2768 = vmul.u32 %v2763, %v2764
    %v2769 = vmul.u32 %v2763, %v2765
    %v2770 = vshll.u32 %v2767, 16
    %v2771 = vshrl.u32 %v2767, 16
    %v2772 = vshll.u32 %v2768, 16
    %v2773 = vshrl.u32 %v2768, 16
    %vm2774 = vc.u32 %v2766, %v2770
    %v2775 = vsel %vm2774, 1, 0
    %v2776 = vadd.s32 %v2766, %v2770
    %v2777 = vadd.s32 %v2769, %v2775
    %vm2778 = vc.u32 %v2776, %v2772
    %v2779 = vsel %vm2778, 1, 0
    %v2780 = vadd.s32 %v2776, %v2772
    %v2781 = vadd.s32 %v2777, %v2779
    %v2782 = vadd.s32 %v2781, %v2771
    %v2783 = vadd.s32 %v2782, %v2773
    %v2784 = vmul.u32 %v2739, %v2730
    %v2785 = vadd.s32 %v2761, %v2780
    %vm2786 = vc.u32 %v2761, %v2780
    %v2787 = vadd.s32 %v2783, 1
    %v2788 = vsel %vm2786, %v2787, %v2783
    %v2789 = vadd.s32 %v2784, %v2788
    %v2790 = vadd.s32 %v2789, 536870912
    %v2791 = vshrl.u32 %v2790, 30
    %v2792 = vshll.u32 %v2791, 30
    %v2793 = vsub.s32 %v2789, %v2792
    %vm2794 = vcmp.lt.s32.totalorder %v2793, 0
    %v2795 = vsub.s32 0, %v2793
    %v2796 = vsel %vm2794, %v2795, %v2793
    %v2797 = vclz %v2796
    %v2798 = vsub.s32 %v2797, 2
    %vm2799 = vcmp.gt.s32.totalorder 0, %v2798
    %v2800 = vsel %vm2799, 0, %v2798
    %v2801 = vsub.s32 32, %v2800
    %v2802 = vshll.u32 %v2793, %v2800
    %v2803 = vshrl.u32 %v2785, %v2801
    %v2804 = vor.u32 %v2802, %v2803
    %v2805 = vsub.s32 4294967266, %v2800
    %v2806 = vadd.s32 %v2805, 127
    %v2807 = vshll.u32 %v2806, 23
    %v2808 = vor.u32 4788187, %v2807
    %v2809 = vand.u32 2147483647, %v2808
    %v2811 = vcvt.s32.f32 %v2804
    %v2812 = vmul.f32 %v2811, %v2809
    %v2813 = vxor.u32 %v2812, 2147483648
    %v2814 = vsel %vm2693, %v2813, %v2812
    %v2815 = vsub.s32 4, %v2791
    %v2816 = vsel %vm2693, %v2815, %v2791
    %v2817 = vsel %vm2692, %v2516, %v2814
    %v2818 = vsel %vm2692, 0, %v2816
    %v2819 = vmul.f32 %v2817, %v2817
    %v2820 = vmul.f32 %v2819, -0.001358992
    %v2821 = vadd.f32 %v2820, 0.041655596
    %v2822 = vmul.f32 %v2819, %v2821
    %v2823 = vadd.f32 %v2822, -0.4999988
    %v2824 = vmul.f32 %v2819, %v2823
    %v2825 = vadd.f32 1.0, %v2824
    %v2826 = vmul.f32 %v2817, %v2817
    %v2827 = vmul.f32 %v2826, -0.00019511016
    %v2828 = vadd.f32 %v2827, 0.008332121
    %v2829 = vmul.f32 %v2826, %v2828
    %v2830 = vadd.f32 %v2829, -0.16666654
    %v2831 = vmul.f32 %v2826, %v2830
    %v2832 = vadd.f32 %v2831, 1.0
    %v2833 = vmul.f32 %v2832, %v2817
    %vm2834 = vweird.f32 %v2516
    %v2835 = vadd.s32 %v2818, 3
    %v2836 = vand.u32 %v2835, 3
    %vm2837 = vcmp.lt.s32.totalorder %v2836, 2
    %vm2838 = vcmp.eq.s32.totalorder %v2836, 0
    %v2839 = vxor.u32 %v2833, 2147483648
    %v2840 = vsel %vm2838, %v2825, %v2839
    %vm2841 = vcmp.eq.s32.totalorder %v2836, 2
    %v2842 = vxor.u32 %v2825, 2147483648
    %v2843 = vsel %vm2841, %v2842, %v2833
    %v2844 = vsel %vm2837, %v2840, %v2843
    %v2845 = vsel %vm2834, nan, %v2844
    %v2846 = vand.u32 2147483647, %v2481
    %vm2847 = vcmp.le.f32.partialorder %v2846, 0.7853982
    %vm2848 = vcmp.lt.s32.totalorder %v2481, 0
    %v2849 = vand.u32 %v2481, 2139095040
    %v2850 = vshrl.u32 %v2849, 23
    %v2851 = vsub.s32 %v2850, 127
    %v2852 = vand.u32 2147483647, %v2481
    %v2853 = vand.u32 %v2852, 8388607
    %v2854 = vor.u32 %v2853, 8388608
    %v2855 = vsub.s32 0, %v2854
    %v2856 = vadd.s32 %v2851, 1
    %vm2857 = vcmp.gt.s32.totalorder %v2856, 0
    %v2858 = vsel %vm2857, %v2856, 0
    %v2859 = vshrl.u32 %v2858, 5
    %v2860 = vand.u32 %v2858, 31
    %v2861 = vsub.s32 32, %v2860
    %v2862 = vshrl.u32 683565275, %v2861
    %v2863 = vshll.u32 683565275, %v2860
    %v2864 = vshrl.u32 2475754826, %v2861
    %v2865 = vor.u32 %v2863, %v2864
    %v2866 = vshll.u32 2475754826, %v2860
    %v2867 = vshrl.u32 2131351028, %v2861
    %v2868 = vor.u32 %v2866, %v2867
    %v2869 = vshll.u32 2131351028, %v2860
    %v2870 = vshrl.u32 2102212464, %v2861
    %v2871 = vor.u32 %v2869, %v2870
    %v2872 = vshll.u32 2102212464, %v2860
    %v2873 = vshrl.u32 920167782, %v2861
    %v2874 = vor.u32 %v2872, %v2873
    %v2875 = vshll.u32 920167782, %v2860
    %v2876 = vshrl.u32 1326507024, %v2861
    %v2877 = vor.u32 %v2875, %v2876
    %vm2878 = vcmp.lt.s32.totalorder %v2859, 1
    %vm2879 = vcmp.lt.s32.totalorder %v2859, 2
    %vm2880 = vcmp.lt.s32.totalorder %v2859, 3
    %vm2881 = vcmp.lt.s32.totalorder %v2859, 4
    %v2882 = vsel %vm2878, %v2862, %v2865
    %v2883 = vsel %vm2881, %v2871, 2102212464
    %v2884 = vsel %vm2880, %v2868, %v2883
    %v2885 = vsel %vm2879, %v2882, %v2884
    %v2886 = vsel %vm2878, %v2865, %v2868
    %v2887 = vsel %vm2881, %v2874, 920167782
    %v2888 = vsel %vm2880, %v2871, %v2887
    %v2889 = vsel %vm2879, %v2886, %v2888
    %v2890 = vsel %vm2878, %v2868, %v2871
    %v2891 = vsel %vm2881, %v2877, 1326507024
    %v2892 = vsel %vm2880, %v2874, %v2891
    %v2893 = vsel %vm2879, %v2890, %v2892
    %v2894 = vshll.u32 %v2854, 8
    %v2895 = vand.u32 %v2894, 65535
    %v2896 = vshrl.u32 %v2894, 16
    %v2897 = vand.u32 %v2893, 65535
    %v2898 = vshrl.u32 %v2893, 16
    %v2899 = vmul.u32 %v2895, %v2897
    %v2900 = vmul.u32 %v2895, %v2898
    %v2901 = vmul.u32 %v2896, %v2897
    %v2902 = vmul.u32 %v2896, %v2898
    %v2903 = vshll.u32 %v2900, 16
    %v2904 = vshrl.u32 %v2900, 16
    %v2905 = vshll.u32 %v2901, 16
    %v2906 = vshrl.u32 %v2901, 16
    %vm2907 = vc.u32 %v2899, %v2903
    %v2908 = vsel %vm2907, 1, 0
    %v2909 = vadd.s32 %v2899, %v2903
    %v2910 = vadd.s32 %v2902, %v2908
    %vm2911 = vc.u32 %v2909, %v2905
    %v2912 = vsel %vm2911, 1, 0
    %v2913 = vadd.s32 %v2909, %v2905
    %v2914 = vadd.s32 %v2910, %v2912
    %v2915 = vadd.s32 %v2914, %v2904
    %v2916 = vadd.s32 %v2915, %v2906
    %v2917 = vand.u32 %v2894, 65535
    %v2918 = vshrl.u32 %v2894, 16
    %v2919 = vand.u32 %v2889, 65535
    %v2920 = vshrl.u32 %v2889, 16
    %v2921 = vmul.u32 %v2917, %v2919
    %v2922 = vmul.u32 %v2917, %v2920
    %v2923 = vmul.u32 %v2918, %v2919
    %v2924 = vmul.u32 %v2918, %v2920
    %v2925 = vshll.u32 %v2922, 16
    %v2926 = vshrl.u32 %v2922, 16
    %v2927 = vshll.u32 %v2923, 16
    %v2928 = vshrl.u32 %v2923, 16
    %vm2929 = vc.u32 %v2921, %v2925
    %v2930 = vsel %vm2929, 1, 0
    %v2931 = vadd.s32 %v2921, %v2925
    %v2932 = vadd.s32 %v2924, %v2930
    %vm2933 = vc.u32 %v2931, %v2927
    %v2934 = vsel %vm2933, 1, 0
    %v2935 = vadd.s32 %v2931, %v2927
    %v2936 = vadd.s32 %v2932, %v2934
    %v2937 = vadd.s32 %v2936, %v2926
    %v2938 = vadd.s32 %v2937, %v2928
    %v2939 = vmul.u32 %v2894, %v2885
    %v2940 = vadd.s32 %v2916, %v2935
    %vm2941 = vc.u32 %v2916, %v2935
    %v2942 = vadd.s32 %v2938, 1
    %v2943 = vsel %vm2941, %v2942, %v2938
    %v2944 = vadd.s32 %v2939, %v2943
    %v2945 = vadd.s32 %v2944, 536870912
    %v2946 = vshrl.u32 %v2945, 30
    %v2947 = vshll.u32 %v2946, 30
    %v2948 = vsub.s32 %v2944, %v2947
    %vm2949 = vcmp.lt.s32.totalorder %v2948, 0
    %v2950 = vsub.s32 0, %v2948
    %v2951 = vsel %vm2949, %v2950, %v2948
    %v2952 = vclz %v2951
    %v2953 = vsub.s32 %v2952, 2
    %vm2954 = vcmp.gt.s32.totalorder 0, %v2953
    %v2955 = vsel %vm2954, 0, %v2953
    %v2956 = vsub.s32 32, %v2955
    %v2957 = vshll.u32 %v2948, %v2955
    %v2958 = vshrl.u32 %v2940, %v2956
    %v2959 = vor.u32 %v2957, %v2958
    %v2960 = vsub.s32 4294967266, %v2955
    %v2961 = vadd.s32 %v2960, 127
    %v2962 = vshll.u32 %v2961, 23
    %v2963 = vor.u32 4788187, %v2962
    %v2964 = vand.u32 2147483647, %v2963
    %v2966 = vcvt.s32.f32 %v2959
    %v2967 = vmul.f32 %v2966, %v2964
    %v2968 = vxor.u32 %v2967, 2147483648
    %v2969 = vsel %vm2848, %v2968, %v2967
    %v2970 = vsub.s32 4, %v2946
    %v2971 = vsel %vm2848, %v2970, %v2946
    %v2972 = vsel %vm2847, %v2481, %v2969
    %v2973 = vsel %vm2847, 0, %v2971
    %v2974 = vmul.f32 %v2972, %v2972
    %v2975 = vmul.f32 %v2974, -0.001358992
    %v2976 = vadd.f32 %v2975, 0.041655596
    %v2977 = vmul.f32 %v2974, %v2976
    %v2978 = vadd.f32 %v2977, -0.4999988
    %v2979 = vmul.f32 %v2974, %v2978
    %v2980 = vadd.f32 1.0, %v2979
    %v2981 = vmul.f32 %v2972, %v2972
    %v2982 = vmul.f32 %v2981, -0.00019511016
    %v2983 = vadd.f32 %v2982, 0.008332121
    %v2984 = vmul.f32 %v2981, %v2983
    %v2985 = vadd.f32 %v2984, -0.16666654
    %v2986 = vmul.f32 %v2981, %v2985
    %v2987 = vadd.f32 %v2986, 1.0
    %v2988 = vmul.f32 %v2987, %v2972
    %vm2989 = vweird.f32 %v2481
    %v2990 = vadd.s32 %v2973, 3
    %v2991 = vand.u32 %v2990, 3
    %vm2992 = vcmp.lt.s32.totalorder %v2991, 2
    %vm2993 = vcmp.eq.s32.totalorder %v2991, 0
    %v2994 = vxor.u32 %v2988, 2147483648
    %v2995 = vsel %vm2993, %v2980, %v2994
    %vm2996 = vcmp.eq.s32.totalorder %v2991, 2
    %v2997 = vxor.u32 %v2980, 2147483648
    %v2998 = vsel %vm2996, %v2997, %v2988
    %v2999 = vsel %vm2992, %v2995, %v2998
    %v3000 = vsel %vm2989, nan, %v2999
    %v3001 = vand.u32 2147483647, %v2519
    %vm3002 = vcmp.le.f32.partialorder %v3001, 0.7853982
    %vm3003 = vcmp.lt.s32.totalorder %v2519, 0
    %v3004 = vand.u32 %v2519, 2139095040
    %v3005 = vshrl.u32 %v3004, 23
    %v3006 = vsub.s32 %v3005, 127
    %v3007 = vand.u32 2147483647, %v2519
    %v3008 = vand.u32 %v3007, 8388607
    %v3009 = vor.u32 %v3008, 8388608
    %v3010 = vsub.s32 0, %v3009
    %v3011 = vadd.s32 %v3006, 1
    %vm3012 = vcmp.gt.s32.totalorder %v3011, 0
    %v3013 = vsel %vm3012, %v3011, 0
    %v3014 = vshrl.u32 %v3013, 5
    %v3015 = vand.u32 %v3013, 31
    %v3016 = vsub.s32 32, %v3015
    %v3017 = vshrl.u32 683565275, %v3016
    %v3018 = vshll.u32 683565275, %v3015
    %v3019 = vshrl.u32 2475754826, %v3016
    %v3020 = vor.u32 %v3018, %v3019
    %v3021 = vshll.u32 2475754826, %v3015
    %v3022 = vshrl.u32 2131351028, %v3016
    %v3023 = vor.u32 %v3021, %v3022
    %v3024 = vshll.u32 2131351028, %v3015
    %v3025 = vshrl.u32 2102212464, %v3016
    %v3026 = vor.u32 %v3024, %v3025
    %v3027 = vshll.u32 2102212464, %v3015
    %v3028 = vshrl.u32 920167782, %v3016
    %v3029 = vor.u32 %v3027, %v3028
    %v3030 = vshll.u32 920167782, %v3015
    %v3031 = vshrl.u32 1326507024, %v3016
    %v3032 = vor.u32 %v3030, %v3031
    %vm3033 = vcmp.lt.s32.totalorder %v3014, 1
    %vm3034 = vcmp.lt.s32.totalorder %v3014, 2
    %vm3035 = vcmp.lt.s32.totalorder %v3014, 3
    %vm3036 = vcmp.lt.s32.totalorder %v3014, 4
    %v3037 = vsel %vm3033, %v3017, %v3020
    %v3038 = vsel %vm3036, %v3026, 2102212464
    %v3039 = vsel %vm3035, %v3023, %v3038
    %v3040 = vsel %vm3034, %v3037, %v3039
    %v3041 = vsel %vm3033, %v3020, %v3023
    %v3042 = vsel %vm3036, %v3029, 920167782
    %v3043 = vsel %vm3035, %v3026, %v3042
    %v3044 = vsel %vm3034, %v3041, %v3043
    %v3045 = vsel %vm3033, %v3023, %v3026
    %v3046 = vsel %vm3036, %v3032, 1326507024
    %v3047 = vsel %vm3035, %v3029, %v3046
    %v3048 = vsel %vm3034, %v3045, %v3047
    %v3049 = vshll.u32 %v3009, 8
    %v3050 = vand.u32 %v3049, 65535
    %v3051 = vshrl.u32 %v3049, 16
    %v3052 = vand.u32 %v3048, 65535
    %v3053 = vshrl.u32 %v3048, 16
    %v3054 = vmul.u32 %v3050, %v3052
    %v3055 = vmul.u32 %v3050, %v3053
    %v3056 = vmul.u32 %v3051, %v3052
    %v3057 = vmul.u32 %v3051, %v3053
    %v3058 = vshll.u32 %v3055, 16
    %v3059 = vshrl.u32 %v3055, 16
    %v3060 = vshll.u32 %v3056, 16
    %v3061 = vshrl.u32 %v3056, 16
    %vm3062 = vc.u32 %v3054, %v3058
    %v3063 = vsel %vm3062, 1, 0
    %v3064 = vadd.s32 %v3054, %v3058
    %v3065 = vadd.s32 %v3057, %v3063
    %vm3066 = vc.u32 %v3064, %v3060
    %v3067 = vsel %vm3066, 1, 0
    %v3068 = vadd.s32 %v3064, %v3060
    %v3069 = vadd.s32 %v3065, %v3067
    %v3070 = vadd.s32 %v3069, %v3059
    %v3071 = vadd.s32 %v3070, %v3061
    %v3072 = vand.u32 %v3049, 65535
    %v3073 = vshrl.u32 %v3049, 16
    %v3074 = vand.u32 %v3044, 65535
    %v3075 = vshrl.u32 %v3044, 16
    %v3076 = vmul.u32 %v3072, %v3074
    %v3077 = vmul.u32 %v3072, %v3075
    %v3078 = vmul.u32 %v3073, %v3074
    %v3079 = vmul.u32 %v3073, %v3075
    %v3080 = vshll.u32 %v3077, 16
    %v3081 = vshrl.u32 %v3077, 16
    %v3082 = vshll.u32 %v3078, 16
    %v3083 = vshrl.u32 %v3078, 16
    %vm3084 = vc.u32 %v3076, %v3080
    %v3085 = vsel %vm3084, 1, 0
    %v3086 = vadd.s32 %v3076, %v3080
    %v3087 = vadd.s32 %v3079, %v3085
    %vm3088 = vc.u32 %v3086, %v3082
    %v3089 = vsel %vm3088, 1, 0
    %v3090 = vadd.s32 %v3086, %v3082
    %v3091 = vadd.s32 %v3087, %v3089
    %v3092 = vadd.s32 %v3091, %v3081
    %v3093 = vadd.s32 %v3092, %v3083
    %v3094 = vmul.u32 %v3049, %v3040
    %v3095 = vadd.s32 %v3071, %v3090
    %vm3096 = vc.u32 %v3071, %v3090
    %v3097 = vadd.s32 %v3093, 1
    %v3098 = vsel %vm3096, %v3097, %v3093
    %v3099 = vadd.s32 %v3094, %v3098
    %v3100 = vadd.s32 %v3099, 536870912
    %v3101 = vshrl.u32 %v3100, 30
    %v3102 = vshll.u32 %v3101, 30
    %v3103 = vsub.s32 %v3099, %v3102
    %vm3104 = vcmp.lt.s32.totalorder %v3103, 0
    %v3105 = vsub.s32 0, %v3103
    %v3106 = vsel %vm3104, %v3105, %v3103
    %v3107 = vclz %v3106
    %v3108 = vsub.s32 %v3107, 2
    %vm3109 = vcmp.gt.s32.totalorder 0, %v3108
    %v3110 = vsel %vm3109, 0, %v3108
    %v3111 = vsub.s32 32, %v3110
    %v3112 = vshll.u32 %v3103, %v3110
    %v3113 = vshrl.u32 %v3095, %v3111
    %v3114 = vor.u32 %v3112, %v3113
    %v3115 = vsub.s32 4294967266, %v3110
    %v3116 = vadd.s32 %v3115, 127
    %v3117 = vshll.u32 %v3116, 23
    %v3118 = vor.u32 4788187, %v3117
    %v3119 = vand.u32 2147483647, %v3118
    %v3121 = vcvt.s32.f32 %v3114
    %v3122 = vmul.f32 %v3121, %v3119
    %v3123 = vxor.u32 %v3122, 2147483648
    %v3124 = vsel %vm3003, %v3123, %v3122
    %v3125 = vsub.s32 4, %v3101
    %v3126 = vsel %vm3003, %v3125, %v3101
    %v3127 = vsel %vm3002, %v2519, %v3124
    %v3128 = vsel %vm3002, 0, %v3126
    %v3129 = vmul.f32 %v3127, %v3127
    %v3130 = vmul.f32 %v3129, -0.001358992
    %v3131 = vadd.f32 %v3130, 0.041655596
    %v3132 = vmul.f32 %v3129, %v3131
    %v3133 = vadd.f32 %v3132, -0.4999988
    %v3134 = vmul.f32 %v3129, %v3133
    %v3135 = vadd.f32 1.0, %v3134
    %v3136 = vmul.f32 %v3127, %v3127
    %v3137 = vmul.f32 %v3136, -0.00019511016
    %v3138 = vadd.f32 %v3137, 0.008332121
    %v3139 = vmul.f32 %v3136, %v3138
    %v3140 = vadd.f32 %v3139, -0.16666654
    %v3141 = vmul.f32 %v3136, %v3140
    %v3142 = vadd.f32 %v3141, 1.0
    %v3143 = vmul.f32 %v3142, %v3127
    %vm3144 = vweird.f32 %v2519
    %v3145 = vadd.s32 %v3128, 3
    %v3146 = vand.u32 %v3145, 3
    %vm3147 = vcmp.lt.s32.totalorder %v3146, 2
    %vm3148 = vcmp.eq.s32.totalorder %v3146, 0
    %v3149 = vxor.u32 %v3143, 2147483648
    %v3150 = vsel %vm3148, %v3135, %v3149
    %vm3151 = vcmp.eq.s32.totalorder %v3146, 2
    %v3152 = vxor.u32 %v3135, 2147483648
    %v3153 = vsel %vm3151, %v3152, %v3143
    %v3154 = vsel %vm3147, %v3150, %v3153
    %v3155 = vsel %vm3144, nan, %v3154
    %v3156 = vand.u32 2147483647, %v2484
    %vm3157 = vcmp.le.f32.partialorder %v3156, 0.7853982
    %vm3158 = vcmp.lt.s32.totalorder %v2484, 0
    %v3159 = vand.u32 %v2484, 2139095040
    %v3160 = vshrl.u32 %v3159, 23
    %v3161 = vsub.s32 %v3160, 127
    %v3162 = vand.u32 2147483647, %v2484
    %v3163 = vand.u32 %v3162, 8388607
    %v3164 = vor.u32 %v3163, 8388608
    %v3165 = vsub.s32 0, %v3164
    %v3166 = vadd.s32 %v3161, 1
    %vm3167 = vcmp.gt.s32.totalorder %v3166, 0
    %v3168 = vsel %vm3167, %v3166, 0
    %v3169 = vshrl.u32 %v3168, 5
    %v3170 = vand.u32 %v3168, 31
    %v3171 = vsub.s32 32, %v3170
    %v3172 = vshrl.u32 683565275, %v3171
    %v3173 = vshll.u32 683565275, %v3170
    %v3174 = vshrl.u32 2475754826, %v3171
    %v3175 = vor.u32 %v3173, %v3174
    %v3176 = vshll.u32 2475754826, %v3170
    %v3177 = vshrl.u32 2131351028, %v3171
    %v3178 = vor.u32 %v3176, %v3177
    %v3179 = vshll.u32 2131351028, %v3170
    %v3180 = vshrl.u32 2102212464, %v3171
    %v3181 = vor.u32 %v3179, %v3180
    %v3182 = vshll.u32 2102212464, %v3170
    %v3183 = vshrl.u32 920167782, %v3171
    %v3184 = vor.u32 %v3182, %v3183
    %v3185 = vshll.u32 920167782, %v3170
    %v3186 = vshrl.u32 1326507024, %v3171
    %v3187 = vor.u32 %v3185, %v3186
    %vm3188 = vcmp.lt.s32.totalorder %v3169, 1
    %vm3189 = vcmp.lt.s32.totalorder %v3169, 2
    %vm3190 = vcmp.lt.s32.totalorder %v3169, 3
    %vm3191 = vcmp.lt.s32.totalorder %v3169, 4
    %v3192 = vsel %vm3188, %v3172, %v3175
    %v3193 = vsel %vm3191, %v3181, 2102212464
    %v3194 = vsel %vm3190, %v3178, %v3193
    %v3195 = vsel %vm3189, %v3192, %v3194
    %v3196 = vsel %vm3188, %v3175, %v3178
    %v3197 = vsel %vm3191, %v3184, 920167782
    %v3198 = vsel %vm3190, %v3181, %v3197
    %v3199 = vsel %vm3189, %v3196, %v3198
    %v3200 = vsel %vm3188, %v3178, %v3181
    %v3201 = vsel %vm3191, %v3187, 1326507024
    %v3202 = vsel %vm3190, %v3184, %v3201
    %v3203 = vsel %vm3189, %v3200, %v3202
    %v3204 = vshll.u32 %v3164, 8
    %v3205 = vand.u32 %v3204, 65535
    %v3206 = vshrl.u32 %v3204, 16
    %v3207 = vand.u32 %v3203, 65535
    %v3208 = vshrl.u32 %v3203, 16
    %v3209 = vmul.u32 %v3205, %v3207
    %v3210 = vmul.u32 %v3205, %v3208
    %v3211 = vmul.u32 %v3206, %v3207
    %v3212 = vmul.u32 %v3206, %v3208
    %v3213 = vshll.u32 %v3210, 16
    %v3214 = vshrl.u32 %v3210, 16
    %v3215 = vshll.u32 %v3211, 16
    %v3216 = vshrl.u32 %v3211, 16
    %vm3217 = vc.u32 %v3209, %v3213
    %v3218 = vsel %vm3217, 1, 0
    %v3219 = vadd.s32 %v3209, %v3213
    %v3220 = vadd.s32 %v3212, %v3218
    %vm3221 = vc.u32 %v3219, %v3215
    %v3222 = vsel %vm3221, 1, 0
    %v3223 = vadd.s32 %v3219, %v3215
    %v3224 = vadd.s32 %v3220, %v3222
    %v3225 = vadd.s32 %v3224, %v3214
    %v3226 = vadd.s32 %v3225, %v3216
    %v3227 = vand.u32 %v3204, 65535
    %v3228 = vshrl.u32 %v3204, 16
    %v3229 = vand.u32 %v3199, 65535
    %v3230 = vshrl.u32 %v3199, 16
    %v3231 = vmul.u32 %v3227, %v3229
    %v3232 = vmul.u32 %v3227, %v3230
    %v3233 = vmul.u32 %v3228, %v3229
    %v3234 = vmul.u32 %v3228, %v3230
    %v3235 = vshll.u32 %v3232, 16
    %v3236 = vshrl.u32 %v3232, 16
    %v3237 = vshll.u32 %v3233, 16
    %v3238 = vshrl.u32 %v3233, 16
    %vm3239 = vc.u32 %v3231, %v3235
    %v3240 = vsel %vm3239, 1, 0
    %v3241 = vadd.s32 %v3231, %v3235
    %v3242 = vadd.s32 %v3234, %v3240
    %vm3243 = vc.u32 %v3241, %v3237
    %v3244 = vsel %vm3243, 1, 0
    %v3245 = vadd.s32 %v3241, %v3237
    %v3246 = vadd.s32 %v3242, %v3244
    %v3247 = vadd.s32 %v3246, %v3236
    %v3248 = vadd.s32 %v3247, %v3238
    %v3249 = vmul.u32 %v3204, %v3195
    %v3250 = vadd.s32 %v3226, %v3245
    %vm3251 = vc.u32 %v3226, %v3245
    %v3252 = vadd.s32 %v3248, 1
    %v3253 = vsel %vm3251, %v3252, %v3248
    %v3254 = vadd.s32 %v3249, %v3253
    %v3255 = vadd.s32 %v3254, 536870912
    %v3256 = vshrl.u32 %v3255, 30
    %v3257 = vshll.u32 %v3256, 30
    %v3258 = vsub.s32 %v3254, %v3257
    %vm3259 = vcmp.lt.s32.totalorder %v3258, 0
    %v3260 = vsub.s32 0, %v3258
    %v3261 = vsel %vm3259, %v3260, %v3258
    %v3262 = vclz %v3261
    %v3263 = vsub.s32 %v3262, 2
    %vm3264 = vcmp.gt.s32.totalorder 0, %v3263
    %v3265 = vsel %vm3264, 0, %v3263
    %v3266 = vsub.s32 32, %v3265
    %v3267 = vshll.u32 %v3258, %v3265
    %v3268 = vshrl.u32 %v3250, %v3266
    %v3269 = vor.u32 %v3267, %v3268
    %v3270 = vsub.s32 4294967266, %v3265
    %v3271 = vadd.s32 %v3270, 127
    %v3272 = vshll.u32 %v3271, 23
    %v3273 = vor.u32 4788187, %v3272
    %v3274 = vand.u32 2147483647, %v3273
    %v3276 = vcvt.s32.f32 %v3269
    %v3277 = vmul.f32 %v3276, %v3274
    %v3278 = vxor.u32 %v3277, 2147483648
    %v3279 = vsel %vm3158, %v3278, %v3277
    %v3280 = vsub.s32 4, %v3256
    %v3281 = vsel %vm3158, %v3280, %v3256
    %v3282 = vsel %vm3157, %v2484, %v3279
    %v3283 = vsel %vm3157, 0, %v3281
    %v3284 = vmul.f32 %v3282, %v3282
    %v3285 = vmul.f32 %v3284, -0.001358992
    %v3286 = vadd.f32 %v3285, 0.041655596
    %v3287 = vmul.f32 %v3284, %v3286
    %v3288 = vadd.f32 %v3287, -0.4999988
    %v3289 = vmul.f32 %v3284, %v3288
    %v3290 = vadd.f32 1.0, %v3289
    %v3291 = vmul.f32 %v3282, %v3282
    %v3292 = vmul.f32 %v3291, -0.00019511016
    %v3293 = vadd.f32 %v3292, 0.008332121
    %v3294 = vmul.f32 %v3291, %v3293
    %v3295 = vadd.f32 %v3294, -0.16666654
    %v3296 = vmul.f32 %v3291, %v3295
    %v3297 = vadd.f32 %v3296, 1.0
    %v3298 = vmul.f32 %v3297, %v3282
    %vm3299 = vweird.f32 %v2484
    %v3300 = vadd.s32 %v3283, 3
    %v3301 = vand.u32 %v3300, 3
    %vm3302 = vcmp.lt.s32.totalorder %v3301, 2
    %vm3303 = vcmp.eq.s32.totalorder %v3301, 0
    %v3304 = vxor.u32 %v3298, 2147483648
    %v3305 = vsel %vm3303, %v3290, %v3304
    %vm3306 = vcmp.eq.s32.totalorder %v3301, 2
    %v3307 = vxor.u32 %v3290, 2147483648
    %v3308 = vsel %vm3306, %v3307, %v3298
    %v3309 = vsel %vm3302, %v3305, %v3308
    %v3310 = vsel %vm3299, nan, %v3309
    %v3311 = vand.u32 2147483647, %v2522
    %vm3312 = vcmp.le.f32.partialorder %v3311, 0.7853982
    %vm3313 = vcmp.lt.s32.totalorder %v2522, 0
    %v3314 = vand.u32 %v2522, 2139095040
    %v3315 = vshrl.u32 %v3314, 23
    %v3316 = vsub.s32 %v3315, 127
    %v3317 = vand.u32 2147483647, %v2522
    %v3318 = vand.u32 %v3317, 8388607
    %v3319 = vor.u32 %v3318, 8388608
    %v3320 = vsub.s32 0, %v3319
    %v3321 = vadd.s32 %v3316, 1
    %vm3322 = vcmp.gt.s32.totalorder %v3321, 0
    %v3323 = vsel %vm3322, %v3321, 0
    %v3324 = vshrl.u32 %v3323, 5
    %v3325 = vand.u32 %v3323, 31
    %v3326 = vsub.s32 32, %v3325
    %v3327 = vshrl.u32 683565275, %v3326
    %v3328 = vshll.u32 683565275, %v3325
    %v3329 = vshrl.u32 2475754826, %v3326
    %v3330 = vor.u32 %v3328, %v3329
    %v3331 = vshll.u32 2475754826, %v3325
    %v3332 = vshrl.u32 2131351028, %v3326
    %v3333 = vor.u32 %v3331, %v3332
    %v3334 = vshll.u32 2131351028, %v3325
    %v3335 = vshrl.u32 2102212464, %v3326
    %v3336 = vor.u32 %v3334, %v3335
    %v3337 = vshll.u32 2102212464, %v3325
    %v3338 = vshrl.u32 920167782, %v3326
    %v3339 = vor.u32 %v3337, %v3338
    %v3340 = vshll.u32 920167782, %v3325
    %v3341 = vshrl.u32 1326507024, %v3326
    %v3342 = vor.u32 %v3340, %v3341
    %vm3343 = vcmp.lt.s32.totalorder %v3324, 1
    %vm3344 = vcmp.lt.s32.totalorder %v3324, 2
    %vm3345 = vcmp.lt.s32.totalorder %v3324, 3
    %vm3346 = vcmp.lt.s32.totalorder %v3324, 4
    %v3347 = vsel %vm3343, %v3327, %v3330
    %v3348 = vsel %vm3346, %v3336, 2102212464
    %v3349 = vsel %vm3345, %v3333, %v3348
    %v3350 = vsel %vm3344, %v3347, %v3349
    %v3351 = vsel %vm3343, %v3330, %v3333
    %v3352 = vsel %vm3346, %v3339, 920167782
    %v3353 = vsel %vm3345, %v3336, %v3352
    %v3354 = vsel %vm3344, %v3351, %v3353
    %v3355 = vsel %vm3343, %v3333, %v3336
    %v3356 = vsel %vm3346, %v3342, 1326507024
    %v3357 = vsel %vm3345, %v3339, %v3356
    %v3358 = vsel %vm3344, %v3355, %v3357
    %v3359 = vshll.u32 %v3319, 8
    %v3360 = vand.u32 %v3359, 65535
    %v3361 = vshrl.u32 %v3359, 16
    %v3362 = vand.u32 %v3358, 65535
    %v3363 = vshrl.u32 %v3358, 16
    %v3364 = vmul.u32 %v3360, %v3362
    %v3365 = vmul.u32 %v3360, %v3363
    %v3366 = vmul.u32 %v3361, %v3362
    %v3367 = vmul.u32 %v3361, %v3363
    %v3368 = vshll.u32 %v3365, 16
    %v3369 = vshrl.u32 %v3365, 16
    %v3370 = vshll.u32 %v3366, 16
    %v3371 = vshrl.u32 %v3366, 16
    %vm3372 = vc.u32 %v3364, %v3368
    %v3373 = vsel %vm3372, 1, 0
    %v3374 = vadd.s32 %v3364, %v3368
    %v3375 = vadd.s32 %v3367, %v3373
    %vm3376 = vc.u32 %v3374, %v3370
    %v3377 = vsel %vm3376, 1, 0
    %v3378 = vadd.s32 %v3374, %v3370
    %v3379 = vadd.s32 %v3375, %v3377
    %v3380 = vadd.s32 %v3379, %v3369
    %v3381 = vadd.s32 %v3380, %v3371
    %v3382 = vand.u32 %v3359, 65535
    %v3383 = vshrl.u32 %v3359, 16
    %v3384 = vand.u32 %v3354, 65535
    %v3385 = vshrl.u32 %v3354, 16
    %v3386 = vmul.u32 %v3382, %v3384
    %v3387 = vmul.u32 %v3382, %v3385
    %v3388 = vmul.u32 %v3383, %v3384
    %v3389 = vmul.u32 %v3383, %v3385
    %v3390 = vshll.u32 %v3387, 16
    %v3391 = vshrl.u32 %v3387, 16
    %v3392 = vshll.u32 %v3388, 16
    %v3393 = vshrl.u32 %v3388, 16
    %vm3394 = vc.u32 %v3386, %v3390
    %v3395 = vsel %vm3394, 1, 0
    %v3396 = vadd.s32 %v3386, %v3390
    %v3397 = vadd.s32 %v3389, %v3395
    %vm3398 = vc.u32 %v3396, %v3392
    %v3399 = vsel %vm3398, 1, 0
    %v3400 = vadd.s32 %v3396, %v3392
    %v3401 = vadd.s32 %v3397, %v3399
    %v3402 = vadd.s32 %v3401, %v3391
    %v3403 = vadd.s32 %v3402, %v3393
    %v3404 = vmul.u32 %v3359, %v3350
    %v3405 = vadd.s32 %v3381, %v3400
    %vm3406 = vc.u32 %v3381, %v3400
    %v3407 = vadd.s32 %v3403, 1
    %v3408 = vsel %vm3406, %v3407, %v3403
    %v3409 = vadd.s32 %v3404, %v3408
    %v3410 = vadd.s32 %v3409, 536870912
    %v3411 = vshrl.u32 %v3410, 30
    %v3412 = vshll.u32 %v3411, 30
    %v3413 = vsub.s32 %v3409, %v3412
    %vm3414 = vcmp.lt.s32.totalorder %v3413, 0
    %v3415 = vsub.s32 0, %v3413
    %v3416 = vsel %vm3414, %v3415, %v3413
    %v3417 = vclz %v3416
    %v3418 = vsub.s32 %v3417, 2
    %vm3419 = vcmp.gt.s32.totalorder 0, %v3418
    %v3420 = vsel %vm3419, 0, %v3418
    %v3421 = vsub.s32 32, %v3420
    %v3422 = vshll.u32 %v3413, %v3420
    %v3423 = vshrl.u32 %v3405, %v3421
    %v3424 = vor.u32 %v3422, %v3423
    %v3425 = vsub.s32 4294967266, %v3420
    %v3426 = vadd.s32 %v3425, 127
    %v3427 = vshll.u32 %v3426, 23
    %v3428 = vor.u32 4788187, %v3427
    %v3429 = vand.u32 2147483647, %v3428
    %v3431 = vcvt.s32.f32 %v3424
    %v3432 = vmul.f32 %v3431, %v3429
    %v3433 = vxor.u32 %v3432, 2147483648
    %v3434 = vsel %vm3313, %v3433, %v3432
    %v3435 = vsub.s32 4, %v3411
    %v3436 = vsel %vm3313, %v3435, %v3411
    %v3437 = vsel %vm3312, %v2522, %v3434
    %v3438 = vsel %vm3312, 0, %v3436
    %v3439 = vmul.f32 %v3437, %v3437
    %v3440 = vmul.f32 %v3439, -0.001358992
    %v3441 = vadd.f32 %v3440, 0.041655596
    %v3442 = vmul.f32 %v3439, %v3441
    %v3443 = vadd.f32 %v3442, -0.4999988
    %v3444 = vmul.f32 %v3439, %v3443
    %v3445 = vadd.f32 1.0, %v3444
    %v3446 = vmul.f32 %v3437, %v3437
    %v3447 = vmul.f32 %v3446, -0.00019511016
    %v3448 = vadd.f32 %v3447, 0.008332121
    %v3449 = vmul.f32 %v3446, %v3448
    %v3450 = vadd.f32 %v3449, -0.16666654
    %v3451 = vmul.f32 %v3446, %v3450
    %v3452 = vadd.f32 %v3451, 1.0
    %v3453 = vmul.f32 %v3452, %v3437
    %vm3454 = vweird.f32 %v2522
    %v3455 = vadd.s32 %v3438, 3
    %v3456 = vand.u32 %v3455, 3
    %vm3457 = vcmp.lt.s32.totalorder %v3456, 2
    %vm3458 = vcmp.eq.s32.totalorder %v3456, 0
    %v3459 = vxor.u32 %v3453, 2147483648
    %v3460 = vsel %vm3458, %v3445, %v3459
    %vm3461 = vcmp.eq.s32.totalorder %v3456, 2
    %v3462 = vxor.u32 %v3445, 2147483648
    %v3463 = vsel %vm3461, %v3462, %v3453
    %v3464 = vsel %vm3457, %v3460, %v3463
    %v3465 = vsel %vm3454, nan, %v3464
    %v3466 = vand.u32 2147483647, %v2487
    %vm3467 = vcmp.le.f32.partialorder %v3466, 0.7853982
    %vm3468 = vcmp.lt.s32.totalorder %v2487, 0
    %v3469 = vand.u32 %v2487, 2139095040
    %v3470 = vshrl.u32 %v3469, 23
    %v3471 = vsub.s32 %v3470, 127
    %v3472 = vand.u32 2147483647, %v2487
    %v3473 = vand.u32 %v3472, 8388607
    %v3474 = vor.u32 %v3473, 8388608
    %v3475 = vsub.s32 0, %v3474
    %v3476 = vadd.s32 %v3471, 1
    %vm3477 = vcmp.gt.s32.totalorder %v3476, 0
    %v3478 = vsel %vm3477, %v3476, 0
    %v3479 = vshrl.u32 %v3478, 5
    %v3480 = vand.u32 %v3478, 31
    %v3481 = vsub.s32 32, %v3480
    %v3482 = vshrl.u32 683565275, %v3481
    %v3483 = vshll.u32 683565275, %v3480
    %v3484 = vshrl.u32 2475754826, %v3481
    %v3485 = vor.u32 %v3483, %v3484
    %v3486 = vshll.u32 2475754826, %v3480
    %v3487 = vshrl.u32 2131351028, %v3481
    %v3488 = vor.u32 %v3486, %v3487
    %v3489 = vshll.u32 2131351028, %v3480
    %v3490 = vshrl.u32 2102212464, %v3481
    %v3491 = vor.u32 %v3489, %v3490
    %v3492 = vshll.u32 2102212464, %v3480
    %v3493 = vshrl.u32 920167782, %v3481
    %v3494 = vor.u32 %v3492, %v3493
    %v3495 = vshll.u32 920167782, %v3480
    %v3496 = vshrl.u32 1326507024, %v3481
    %v3497 = vor.u32 %v3495, %v3496
    %vm3498 = vcmp.lt.s32.totalorder %v3479, 1
    %vm3499 = vcmp.lt.s32.totalorder %v3479, 2
    %vm3500 = vcmp.lt.s32.totalorder %v3479, 3
    %vm3501 = vcmp.lt.s32.totalorder %v3479, 4
    %v3502 = vsel %vm3498, %v3482, %v3485
    %v3503 = vsel %vm3501, %v3491, 2102212464
    %v3504 = vsel %vm3500, %v3488, %v3503
    %v3505 = vsel %vm3499, %v3502, %v3504
    %v3506 = vsel %vm3498, %v3485, %v3488
    %v3507 = vsel %vm3501, %v3494, 920167782
    %v3508 = vsel %vm3500, %v3491, %v3507
    %v3509 = vsel %vm3499, %v3506, %v3508
    %v3510 = vsel %vm3498, %v3488, %v3491
    %v3511 = vsel %vm3501, %v3497, 1326507024
    %v3512 = vsel %vm3500, %v3494, %v3511
    %v3513 = vsel %vm3499, %v3510, %v3512
    %v3514 = vshll.u32 %v3474, 8
    %v3515 = vand.u32 %v3514, 65535
    %v3516 = vshrl.u32 %v3514, 16
    %v3517 = vand.u32 %v3513, 65535
    %v3518 = vshrl.u32 %v3513, 16
    %v3519 = vmul.u32 %v3515, %v3517
    %v3520 = vmul.u32 %v3515, %v3518
    %v3521 = vmul.u32 %v3516, %v3517
    %v3522 = vmul.u32 %v3516, %v3518
    %v3523 = vshll.u32 %v3520, 16
    %v3524 = vshrl.u32 %v3520, 16
    %v3525 = vshll.u32 %v3521, 16
    %v3526 = vshrl.u32 %v3521, 16
    %vm3527 = vc.u32 %v3519, %v3523
    %v3528 = vsel %vm3527, 1, 0
    %v3529 = vadd.s32 %v3519, %v3523
    %v3530 = vadd.s32 %v3522, %v3528
    %vm3531 = vc.u32 %v3529, %v3525
    %v3532 = vsel %vm3531, 1, 0
    %v3533 = vadd.s32 %v3529, %v3525
    %v3534 = vadd.s32 %v3530, %v3532
    %v3535 = vadd.s32 %v3534, %v3524
    %v3536 = vadd.s32 %v3535, %v3526
    %v3537 = vand.u32 %v3514, 65535
    %v3538 = vshrl.u32 %v3514, 16
    %v3539 = vand.u32 %v3509, 65535
    %v3540 = vshrl.u32 %v3509, 16
    %v3541 = vmul.u32 %v3537, %v3539
    %v3542 = vmul.u32 %v3537, %v3540
    %v3543 = vmul.u32 %v3538, %v3539
    %v3544 = vmul.u32 %v3538, %v3540
    %v3545 = vshll.u32 %v3542, 16
    %v3546 = vshrl.u32 %v3542, 16
    %v3547 = vshll.u32 %v3543, 16
    %v3548 = vshrl.u32 %v3543, 16
    %vm3549 = vc.u32 %v3541, %v3545
    %v3550 = vsel %vm3549, 1, 0
    %v3551 = vadd.s32 %v3541, %v3545
    %v3552 = vadd.s32 %v3544, %v3550
    %vm3553 = vc.u32 %v3551, %v3547
    %v3554 = vsel %vm3553, 1, 0
    %v3555 = vadd.s32 %v3551, %v3547
    %v3556 = vadd.s32 %v3552, %v3554
    %v3557 = vadd.s32 %v3556, %v3546
    %v3558 = vadd.s32 %v3557, %v3548
    %v3559 = vmul.u32 %v3514, %v3505
    %v3560 = vadd.s32 %v3536, %v3555
    %vm3561 = vc.u32 %v3536, %v3555
    %v3562 = vadd.s32 %v3558, 1
    %v3563 = vsel %vm3561, %v3562, %v3558
    %v3564 = vadd.s32 %v3559, %v3563
    %v3565 = vadd.s32 %v3564, 536870912
    %v3566 = vshrl.u32 %v3565, 30
    %v3567 = vshll.u32 %v3566, 30
    %v3568 = vsub.s32 %v3564, %v3567
    %vm3569 = vcmp.lt.s32.totalorder %v3568, 0
    %v3570 = vsub.s32 0, %v3568
    %v3571 = vsel %vm3569, %v3570, %v3568
    %v3572 = vclz %v3571
    %v3573 = vsub.s32 %v3572, 2
    %vm3574 = vcmp.gt.s32.totalorder 0, %v3573
    %v3575 = vsel %vm3574, 0, %v3573
    %v3576 = vsub.s32 32, %v3575
    %v3577 = vshll.u32 %v3568, %v3575
    %v3578 = vshrl.u32 %v3560, %v3576
    %v3579 = vor.u32 %v3577, %v3578
    %v3580 = vsub.s32 4294967266, %v3575
    %v3581 = vadd.s32 %v3580, 127
    %v3582 = vshll.u32 %v3581, 23
    %v3583 = vor.u32 4788187, %v3582
    %v3584 = vand.u32 2147483647, %v3583
    %v3586 = vcvt.s32.f32 %v3579
    %v3587 = vmul.f32 %v3586, %v3584
    %v3588 = vxor.u32 %v3587, 2147483648
    %v3589 = vsel %vm3468, %v3588, %v3587
    %v3590 = vsub.s32 4, %v3566
    %v3591 = vsel %vm3468, %v3590, %v3566
    %v3592 = vsel %vm3467, %v2487, %v3589
    %v3593 = vsel %vm3467, 0, %v3591
    %v3594 = vmul.f32 %v3592, %v3592
    %v3595 = vmul.f32 %v3594, -0.001358992
    %v3596 = vadd.f32 %v3595, 0.041655596
    %v3597 = vmul.f32 %v3594, %v3596
    %v3598 = vadd.f32 %v3597, -0.4999988
    %v3599 = vmul.f32 %v3594, %v3598
    %v3600 = vadd.f32 1.0, %v3599
    %v3601 = vmul.f32 %v3592, %v3592
    %v3602 = vmul.f32 %v3601, -0.00019511016
    %v3603 = vadd.f32 %v3602, 0.008332121
    %v3604 = vmul.f32 %v3601, %v3603
    %v3605 = vadd.f32 %v3604, -0.16666654
    %v3606 = vmul.f32 %v3601, %v3605
    %v3607 = vadd.f32 %v3606, 1.0
    %v3608 = vmul.f32 %v3607, %v3592
    %vm3609 = vweird.f32 %v2487
    %v3610 = vadd.s32 %v3593, 3
    %v3611 = vand.u32 %v3610, 3
    %vm3612 = vcmp.lt.s32.totalorder %v3611, 2
    %vm3613 = vcmp.eq.s32.totalorder %v3611, 0
    %v3614 = vxor.u32 %v3608, 2147483648
    %v3615 = vsel %vm3613, %v3600, %v3614
    %vm3616 = vcmp.eq.s32.totalorder %v3611, 2
    %v3617 = vxor.u32 %v3600, 2147483648
    %v3618 = vsel %vm3616, %v3617, %v3608
    %v3619 = vsel %vm3612, %v3615, %v3618
    %v3620 = vsel %vm3609, nan, %v3619
    %v3621 = vand.u32 2147483647, %v2525
    %vm3622 = vcmp.le.f32.partialorder %v3621, 0.7853982
    %vm3623 = vcmp.lt.s32.totalorder %v2525, 0
    %v3624 = vand.u32 %v2525, 2139095040
    %v3625 = vshrl.u32 %v3624, 23
    %v3626 = vsub.s32 %v3625, 127
    %v3627 = vand.u32 2147483647, %v2525
    %v3628 = vand.u32 %v3627, 8388607
    %v3629 = vor.u32 %v3628, 8388608
    %v3630 = vsub.s32 0, %v3629
    %v3631 = vadd.s32 %v3626, 1
    %vm3632 = vcmp.gt.s32.totalorder %v3631, 0
    %v3633 = vsel %vm3632, %v3631, 0
    %v3634 = vshrl.u32 %v3633, 5
    %v3635 = vand.u32 %v3633, 31
    %v3636 = vsub.s32 32, %v3635
    %v3637 = vshrl.u32 683565275, %v3636
    %v3638 = vshll.u32 683565275, %v3635
    %v3639 = vshrl.u32 2475754826, %v3636
    %v3640 = vor.u32 %v3638, %v3639
    %v3641 = vshll.u32 2475754826, %v3635
    %v3642 = vshrl.u32 2131351028, %v3636
    %v3643 = vor.u32 %v3641, %v3642
    %v3644 = vshll.u32 2131351028, %v3635
    %v3645 = vshrl.u32 2102212464, %v3636
    %v3646 = vor.u32 %v3644, %v3645
    %v3647 = vshll.u32 2102212464, %v3635
    %v3648 = vshrl.u32 920167782, %v3636
    %v3649 = vor.u32 %v3647, %v3648
    %v3650 = vshll.u32 920167782, %v3635
    %v3651 = vshrl.u32 1326507024, %v3636
    %v3652 = vor.u32 %v3650, %v3651
    %vm3653 = vcmp.lt.s32.totalorder %v3634, 1
    %vm3654 = vcmp.lt.s32.totalorder %v3634, 2
    %vm3655 = vcmp.lt.s32.totalorder %v3634, 3
    %vm3656 = vcmp.lt.s32.totalorder %v3634, 4
    %v3657 = vsel %vm3653, %v3637, %v3640
    %v3658 = vsel %vm3656, %v3646, 2102212464
    %v3659 = vsel %vm3655, %v3643, %v3658
    %v3660 = vsel %vm3654, %v3657, %v3659
    %v3661 = vsel %vm3653, %v3640, %v3643
    %v3662 = vsel %vm3656, %v3649, 920167782
    %v3663 = vsel %vm3655, %v3646, %v3662
    %v3664 = vsel %vm3654, %v3661, %v3663
    %v3665 = vsel %vm3653, %v3643, %v3646
    %v3666 = vsel %vm3656, %v3652, 1326507024
    %v3667 = vsel %vm3655, %v3649, %v3666
    %v3668 = vsel %vm3654, %v3665, %v3667
    %v3669 = vshll.u32 %v3629, 8
    %v3670 = vand.u32 %v3669, 65535
    %v3671 = vshrl.u32 %v3669, 16
    %v3672 = vand.u32 %v3668, 65535
    %v3673 = vshrl.u32 %v3668, 16
    %v3674 = vmul.u32 %v3670, %v3672
    %v3675 = vmul.u32 %v3670, %v3673
    %v3676 = vmul.u32 %v3671, %v3672
    %v3677 = vmul.u32 %v3671, %v3673
    %v3678 = vshll.u32 %v3675, 16
    %v3679 = vshrl.u32 %v3675, 16
    %v3680 = vshll.u32 %v3676, 16
    %v3681 = vshrl.u32 %v3676, 16
    %vm3682 = vc.u32 %v3674, %v3678
    %v3683 = vsel %vm3682, 1, 0
    %v3684 = vadd.s32 %v3674, %v3678
    %v3685 = vadd.s32 %v3677, %v3683
    %vm3686 = vc.u32 %v3684, %v3680
    %v3687 = vsel %vm3686, 1, 0
    %v3688 = vadd.s32 %v3684, %v3680
    %v3689 = vadd.s32 %v3685, %v3687
    %v3690 = vadd.s32 %v3689, %v3679
    %v3691 = vadd.s32 %v3690, %v3681
    %v3692 = vand.u32 %v3669, 65535
    %v3693 = vshrl.u32 %v3669, 16
    %v3694 = vand.u32 %v3664, 65535
    %v3695 = vshrl.u32 %v3664, 16
    %v3696 = vmul.u32 %v3692, %v3694
    %v3697 = vmul.u32 %v3692, %v3695
    %v3698 = vmul.u32 %v3693, %v3694
    %v3699 = vmul.u32 %v3693, %v3695
    %v3700 = vshll.u32 %v3697, 16
    %v3701 = vshrl.u32 %v3697, 16
    %v3702 = vshll.u32 %v3698, 16
    %v3703 = vshrl.u32 %v3698, 16
    %vm3704 = vc.u32 %v3696, %v3700
    %v3705 = vsel %vm3704, 1, 0
    %v3706 = vadd.s32 %v3696, %v3700
    %v3707 = vadd.s32 %v3699, %v3705
    %vm3708 = vc.u32 %v3706, %v3702
    %v3709 = vsel %vm3708, 1, 0
    %v3710 = vadd.s32 %v3706, %v3702
    %v3711 = vadd.s32 %v3707, %v3709
    %v3712 = vadd.s32 %v3711, %v3701
    %v3713 = vadd.s32 %v3712, %v3703
    %v3714 = vmul.u32 %v3669, %v3660
    %v3715 = vadd.s32 %v3691, %v3710
    %vm3716 = vc.u32 %v3691, %v3710
    %v3717 = vadd.s32 %v3713, 1
    %v3718 = vsel %vm3716, %v3717, %v3713
    %v3719 = vadd.s32 %v3714, %v3718
    %v3720 = vadd.s32 %v3719, 536870912
    %v3721 = vshrl.u32 %v3720, 30
    %v3722 = vshll.u32 %v3721, 30
    %v3723 = vsub.s32 %v3719, %v3722
    %vm3724 = vcmp.lt.s32.totalorder %v3723, 0
    %v3725 = vsub.s32 0, %v3723
    %v3726 = vsel %vm3724, %v3725, %v3723
    %v3727 = vclz %v3726
    %v3728 = vsub.s32 %v3727, 2
    %vm3729 = vcmp.gt.s32.totalorder 0, %v3728
    %v3730 = vsel %vm3729, 0, %v3728
    %v3731 = vsub.s32 32, %v3730
    %v3732 = vshll.u32 %v3723, %v3730
    %v3733 = vshrl.u32 %v3715, %v3731
    %v3734 = vor.u32 %v3732, %v3733
    %v3735 = vsub.s32 4294967266, %v3730
    %v3736 = vadd.s32 %v3735, 127
    %v3737 = vshll.u32 %v3736, 23
    %v3738 = vor.u32 4788187, %v3737
    %v3739 = vand.u32 2147483647, %v3738
    %v3741 = vcvt.s32.f32 %v3734
    %v3742 = vmul.f32 %v3741, %v3739
    %v3743 = vxor.u32 %v3742, 2147483648
    %v3744 = vsel %vm3623, %v3743, %v3742
    %v3745 = vsub.s32 4, %v3721
    %v3746 = vsel %vm3623, %v3745, %v3721
    %v3747 = vsel %vm3622, %v2525, %v3744
    %v3748 = vsel %vm3622, 0, %v3746
    %v3749 = vmul.f32 %v3747, %v3747
    %v3750 = vmul.f32 %v3749, -0.001358992
    %v3751 = vadd.f32 %v3750, 0.041655596
    %v3752 = vmul.f32 %v3749, %v3751
    %v3753 = vadd.f32 %v3752, -0.4999988
    %v3754 = vmul.f32 %v3749, %v3753
    %v3755 = vadd.f32 1.0, %v3754
    %v3756 = vmul.f32 %v3747, %v3747
    %v3757 = vmul.f32 %v3756, -0.00019511016
    %v3758 = vadd.f32 %v3757, 0.008332121
    %v3759 = vmul.f32 %v3756, %v3758
    %v3760 = vadd.f32 %v3759, -0.16666654
    %v3761 = vmul.f32 %v3756, %v3760
    %v3762 = vadd.f32 %v3761, 1.0
    %v3763 = vmul.f32 %v3762, %v3747
    %vm3764 = vweird.f32 %v2525
    %v3765 = vadd.s32 %v3748, 3
    %v3766 = vand.u32 %v3765, 3
    %vm3767 = vcmp.lt.s32.totalorder %v3766, 2
    %vm3768 = vcmp.eq.s32.totalorder %v3766, 0
    %v3769 = vxor.u32 %v3763, 2147483648
    %v3770 = vsel %vm3768, %v3755, %v3769
    %vm3771 = vcmp.eq.s32.totalorder %v3766, 2
    %v3772 = vxor.u32 %v3755, 2147483648
    %v3773 = vsel %vm3771, %v3772, %v3763
    %v3774 = vsel %vm3767, %v3770, %v3773
    %v3775 = vsel %vm3764, nan, %v3774
    %v3776 = vand.u32 2147483647, %v2490
    %vm3777 = vcmp.le.f32.partialorder %v3776, 0.7853982
    %vm3778 = vcmp.lt.s32.totalorder %v2490, 0
    %v3779 = vand.u32 %v2490, 2139095040
    %v3780 = vshrl.u32 %v3779, 23
    %v3781 = vsub.s32 %v3780, 127
    %v3782 = vand.u32 2147483647, %v2490
    %v3783 = vand.u32 %v3782, 8388607
    %v3784 = vor.u32 %v3783, 8388608
    %v3785 = vsub.s32 0, %v3784
    %v3786 = vadd.s32 %v3781, 1
    %vm3787 = vcmp.gt.s32.totalorder %v3786, 0
    %v3788 = vsel %vm3787, %v3786, 0
    %v3789 = vshrl.u32 %v3788, 5
    %v3790 = vand.u32 %v3788, 31
    %v3791 = vsub.s32 32, %v3790
    %v3792 = vshrl.u32 683565275, %v3791
    %v3793 = vshll.u32 683565275, %v3790
    %v3794 = vshrl.u32 2475754826, %v3791
    %v3795 = vor.u32 %v3793, %v3794
    %v3796 = vshll.u32 2475754826, %v3790
    %v3797 = vshrl.u32 2131351028, %v3791
    %v3798 = vor.u32 %v3796, %v3797
    %v3799 = vshll.u32 2131351028, %v3790
    %v3800 = vshrl.u32 2102212464, %v3791
    %v3801 = vor.u32 %v3799, %v3800
    %v3802 = vshll.u32 2102212464, %v3790
    %v3803 = vshrl.u32 920167782, %v3791
    %v3804 = vor.u32 %v3802, %v3803
    %v3805 = vshll.u32 920167782, %v3790
    %v3806 = vshrl.u32 1326507024, %v3791
    %v3807 = vor.u32 %v3805, %v3806
    %vm3808 = vcmp.lt.s32.totalorder %v3789, 1
    %vm3809 = vcmp.lt.s32.totalorder %v3789, 2
    %vm3810 = vcmp.lt.s32.totalorder %v3789, 3
    %vm3811 = vcmp.lt.s32.totalorder %v3789, 4
    %v3812 = vsel %vm3808, %v3792, %v3795
    %v3813 = vsel %vm3811, %v3801, 2102212464
    %v3814 = vsel %vm3810, %v3798, %v3813
    %v3815 = vsel %vm3809, %v3812, %v3814
    %v3816 = vsel %vm3808, %v3795, %v3798
    %v3817 = vsel %vm3811, %v3804, 920167782
    %v3818 = vsel %vm3810, %v3801, %v3817
    %v3819 = vsel %vm3809, %v3816, %v3818
    %v3820 = vsel %vm3808, %v3798, %v3801
    %v3821 = vsel %vm3811, %v3807, 1326507024
    %v3822 = vsel %vm3810, %v3804, %v3821
    %v3823 = vsel %vm3809, %v3820, %v3822
    %v3824 = vshll.u32 %v3784, 8
    %v3825 = vand.u32 %v3824, 65535
    %v3826 = vshrl.u32 %v3824, 16
    %v3827 = vand.u32 %v3823, 65535
    %v3828 = vshrl.u32 %v3823, 16
    %v3829 = vmul.u32 %v3825, %v3827
    %v3830 = vmul.u32 %v3825, %v3828
    %v3831 = vmul.u32 %v3826, %v3827
    %v3832 = vmul.u32 %v3826, %v3828
    %v3833 = vshll.u32 %v3830, 16
    %v3834 = vshrl.u32 %v3830, 16
    %v3835 = vshll.u32 %v3831, 16
    %v3836 = vshrl.u32 %v3831, 16
    %vm3837 = vc.u32 %v3829, %v3833
    %v3838 = vsel %vm3837, 1, 0
    %v3839 = vadd.s32 %v3829, %v3833
    %v3840 = vadd.s32 %v3832, %v3838
    %vm3841 = vc.u32 %v3839, %v3835
    %v3842 = vsel %vm3841, 1, 0
    %v3843 = vadd.s32 %v3839, %v3835
    %v3844 = vadd.s32 %v3840, %v3842
    %v3845 = vadd.s32 %v3844, %v3834
    %v3846 = vadd.s32 %v3845, %v3836
    %v3847 = vand.u32 %v3824, 65535
    %v3848 = vshrl.u32 %v3824, 16
    %v3849 = vand.u32 %v3819, 65535
    %v3850 = vshrl.u32 %v3819, 16
    %v3851 = vmul.u32 %v3847, %v3849
    %v3852 = vmul.u32 %v3847, %v3850
    %v3853 = vmul.u32 %v3848, %v3849
    %v3854 = vmul.u32 %v3848, %v3850
    %v3855 = vshll.u32 %v3852, 16
    %v3856 = vshrl.u32 %v3852, 16
    %v3857 = vshll.u32 %v3853, 16
    %v3858 = vshrl.u32 %v3853, 16
    %vm3859 = vc.u32 %v3851, %v3855
    %v3860 = vsel %vm3859, 1, 0
    %v3861 = vadd.s32 %v3851, %v3855
    %v3862 = vadd.s32 %v3854, %v3860
    %vm3863 = vc.u32 %v3861, %v3857
    %v3864 = vsel %vm3863, 1, 0
    %v3865 = vadd.s32 %v3861, %v3857
    %v3866 = vadd.s32 %v3862, %v3864
    %v3867 = vadd.s32 %v3866, %v3856
    %v3868 = vadd.s32 %v3867, %v3858
    %v3869 = vmul.u32 %v3824, %v3815
    %v3870 = vadd.s32 %v3846, %v3865
    %vm3871 = vc.u32 %v3846, %v3865
    %v3872 = vadd.s32 %v3868, 1
    %v3873 = vsel %vm3871, %v3872, %v3868
    %v3874 = vadd.s32 %v3869, %v3873
    %v3875 = vadd.s32 %v3874, 536870912
    %v3876 = vshrl.u32 %v3875, 30
    %v3877 = vshll.u32 %v3876, 30
    %v3878 = vsub.s32 %v3874, %v3877
    %vm3879 = vcmp.lt.s32.totalorder %v3878, 0
    %v3880 = vsub.s32 0, %v3878
    %v3881 = vsel %vm3879, %v3880, %v3878
    %v3882 = vclz %v3881
    %v3883 = vsub.s32 %v3882, 2
    %vm3884 = vcmp.gt.s32.totalorder 0, %v3883
    %v3885 = vsel %vm3884, 0, %v3883
    %v3886 = vsub.s32 32, %v3885
    %v3887 = vshll.u32 %v3878, %v3885
    %v3888 = vshrl.u32 %v3870, %v3886
    %v3889 = vor.u32 %v3887, %v3888
    %v3890 = vsub.s32 4294967266, %v3885
    %v3891 = vadd.s32 %v3890, 127
    %v3892 = vshll.u32 %v3891, 23
    %v3893 = vor.u32 4788187, %v3892
    %v3894 = vand.u32 2147483647, %v3893
    %v3896 = vcvt.s32.f32 %v3889
    %v3897 = vmul.f32 %v3896, %v3894
    %v3898 = vxor.u32 %v3897, 2147483648
    %v3899 = vsel %vm3778, %v3898, %v3897
    %v3900 = vsub.s32 4, %v3876
    %v3901 = vsel %vm3778, %v3900, %v3876
    %v3902 = vsel %vm3777, %v2490, %v3899
    %v3903 = vsel %vm3777, 0, %v3901
    %v3904 = vmul.f32 %v3902, %v3902
    %v3905 = vmul.f32 %v3904, -0.001358992
    %v3906 = vadd.f32 %v3905, 0.041655596
    %v3907 = vmul.f32 %v3904, %v3906
    %v3908 = vadd.f32 %v3907, -0.4999988
    %v3909 = vmul.f32 %v3904, %v3908
    %v3910 = vadd.f32 1.0, %v3909
    %v3911 = vmul.f32 %v3902, %v3902
    %v3912 = vmul.f32 %v3911, -0.00019511016
    %v3913 = vadd.f32 %v3912, 0.008332121
    %v3914 = vmul.f32 %v3911, %v3913
    %v3915 = vadd.f32 %v3914, -0.16666654
    %v3916 = vmul.f32 %v3911, %v3915
    %v3917 = vadd.f32 %v3916, 1.0
    %v3918 = vmul.f32 %v3917, %v3902
    %vm3919 = vweird.f32 %v2490
    %v3920 = vadd.s32 %v3903, 3
    %v3921 = vand.u32 %v3920, 3
    %vm3922 = vcmp.lt.s32.totalorder %v3921, 2
    %vm3923 = vcmp.eq.s32.totalorder %v3921, 0
    %v3924 = vxor.u32 %v3918, 2147483648
    %v3925 = vsel %vm3923, %v3910, %v3924
    %vm3926 = vcmp.eq.s32.totalorder %v3921, 2
    %v3927 = vxor.u32 %v3910, 2147483648
    %v3928 = vsel %vm3926, %v3927, %v3918
    %v3929 = vsel %vm3922, %v3925, %v3928
    %v3930 = vsel %vm3919, nan, %v3929
    %v3931 = vand.u32 2147483647, %v2528
    %vm3932 = vcmp.le.f32.partialorder %v3931, 0.7853982
    %vm3933 = vcmp.lt.s32.totalorder %v2528, 0
    %v3934 = vand.u32 %v2528, 2139095040
    %v3935 = vshrl.u32 %v3934, 23
    %v3936 = vsub.s32 %v3935, 127
    %v3937 = vand.u32 2147483647, %v2528
    %v3938 = vand.u32 %v3937, 8388607
    %v3939 = vor.u32 %v3938, 8388608
    %v3940 = vsub.s32 0, %v3939
    %v3941 = vadd.s32 %v3936, 1
    %vm3942 = vcmp.gt.s32.totalorder %v3941, 0
    %v3943 = vsel %vm3942, %v3941, 0
    %v3944 = vshrl.u32 %v3943, 5
    %v3945 = vand.u32 %v3943, 31
    %v3946 = vsub.s32 32, %v3945
    %v3947 = vshrl.u32 683565275, %v3946
    %v3948 = vshll.u32 683565275, %v3945
    %v3949 = vshrl.u32 2475754826, %v3946
    %v3950 = vor.u32 %v3948, %v3949
    %v3951 = vshll.u32 2475754826, %v3945
    %v3952 = vshrl.u32 2131351028, %v3946
    %v3953 = vor.u32 %v3951, %v3952
    %v3954 = vshll.u32 2131351028, %v3945
    %v3955 = vshrl.u32 2102212464, %v3946
    %v3956 = vor.u32 %v3954, %v3955
    %v3957 = vshll.u32 2102212464, %v3945
    %v3958 = vshrl.u32 920167782, %v3946
    %v3959 = vor.u32 %v3957, %v3958
    %v3960 = vshll.u32 920167782, %v3945
    %v3961 = vshrl.u32 1326507024, %v3946
    %v3962 = vor.u32 %v3960, %v3961
    %vm3963 = vcmp.lt.s32.totalorder %v3944, 1
    %vm3964 = vcmp.lt.s32.totalorder %v3944, 2
    %vm3965 = vcmp.lt.s32.totalorder %v3944, 3
    %vm3966 = vcmp.lt.s32.totalorder %v3944, 4
    %v3967 = vsel %vm3963, %v3947, %v3950
    %v3968 = vsel %vm3966, %v3956, 2102212464
    %v3969 = vsel %vm3965, %v3953, %v3968
    %v3970 = vsel %vm3964, %v3967, %v3969
    %v3971 = vsel %vm3963, %v3950, %v3953
    %v3972 = vsel %vm3966, %v3959, 920167782
    %v3973 = vsel %vm3965, %v3956, %v3972
    %v3974 = vsel %vm3964, %v3971, %v3973
    %v3975 = vsel %vm3963, %v3953, %v3956
    %v3976 = vsel %vm3966, %v3962, 1326507024
    %v3977 = vsel %vm3965, %v3959, %v3976
    %v3978 = vsel %vm3964, %v3975, %v3977
    %v3979 = vshll.u32 %v3939, 8
    %v3980 = vand.u32 %v3979, 65535
    %v3981 = vshrl.u32 %v3979, 16
    %v3982 = vand.u32 %v3978, 65535
    %v3983 = vshrl.u32 %v3978, 16
    %v3984 = vmul.u32 %v3980, %v3982
    %v3985 = vmul.u32 %v3980, %v3983
    %v3986 = vmul.u32 %v3981, %v3982
    %v3987 = vmul.u32 %v3981, %v3983
    %v3988 = vshll.u32 %v3985, 16
    %v3989 = vshrl.u32 %v3985, 16
    %v3990 = vshll.u32 %v3986, 16
    %v3991 = vshrl.u32 %v3986, 16
    %vm3992 = vc.u32 %v3984, %v3988
    %v3993 = vsel %vm3992, 1, 0
    %v3994 = vadd.s32 %v3984, %v3988
    %v3995 = vadd.s32 %v3987, %v3993
    %vm3996 = vc.u32 %v3994, %v3990
    %v3997 = vsel %vm3996, 1, 0
    %v3998 = vadd.s32 %v3994, %v3990
    %v3999 = vadd.s32 %v3995, %v3997
    %v4000 = vadd.s32 %v3999, %v3989
    %v4001 = vadd.s32 %v4000, %v3991
    %v4002 = vand.u32 %v3979, 65535
    %v4003 = vshrl.u32 %v3979, 16
    %v4004 = vand.u32 %v3974, 65535
    %v4005 = vshrl.u32 %v3974, 16
    %v4006 = vmul.u32 %v4002, %v4004
    %v4007 = vmul.u32 %v4002, %v4005
    %v4008 = vmul.u32 %v4003, %v4004
    %v4009 = vmul.u32 %v4003, %v4005
    %v4010 = vshll.u32 %v4007, 16
    %v4011 = vshrl.u32 %v4007, 16
    %v4012 = vshll.u32 %v4008, 16
    %v4013 = vshrl.u32 %v4008, 16
    %vm4014 = vc.u32 %v4006, %v4010
    %v4015 = vsel %vm4014, 1, 0
    %v4016 = vadd.s32 %v4006, %v4010
    %v4017 = vadd.s32 %v4009, %v4015
    %vm4018 = vc.u32 %v4016, %v4012
    %v4019 = vsel %vm4018, 1, 0
    %v4020 = vadd.s32 %v4016, %v4012
    %v4021 = vadd.s32 %v4017, %v4019
    %v4022 = vadd.s32 %v4021, %v4011
    %v4023 = vadd.s32 %v4022, %v4013
    %v4024 = vmul.u32 %v3979, %v3970
    %v4025 = vadd.s32 %v4001, %v4020
    %vm4026 = vc.u32 %v4001, %v4020
    %v4027 = vadd.s32 %v4023, 1
    %v4028 = vsel %vm4026, %v4027, %v4023
    %v4029 = vadd.s32 %v4024, %v4028
    %v4030 = vadd.s32 %v4029, 536870912
    %v4031 = vshrl.u32 %v4030, 30
    %v4032 = vshll.u32 %v4031, 30
    %v4033 = vsub.s32 %v4029, %v4032
    %vm4034 = vcmp.lt.s32.totalorder %v4033, 0
    %v4035 = vsub.s32 0, %v4033
    %v4036 = vsel %vm4034, %v4035, %v4033
    %v4037 = vclz %v4036
    %v4038 = vsub.s32 %v4037, 2
    %vm4039 = vcmp.gt.s32.totalorder 0, %v4038
    %v4040 = vsel %vm4039, 0, %v4038
    %v4041 = vsub.s32 32, %v4040
    %v4042 = vshll.u32 %v4033, %v4040
    %v4043 = vshrl.u32 %v4025, %v4041
    %v4044 = vor.u32 %v4042, %v4043
    %v4045 = vsub.s32 4294967266, %v4040
    %v4046 = vadd.s32 %v4045, 127
    %v4047 = vshll.u32 %v4046, 23
    %v4048 = vor.u32 4788187, %v4047
    %v4049 = vand.u32 2147483647, %v4048
    %v4051 = vcvt.s32.f32 %v4044
    %v4052 = vmul.f32 %v4051, %v4049
    %v4053 = vxor.u32 %v4052, 2147483648
    %v4054 = vsel %vm3933, %v4053, %v4052
    %v4055 = vsub.s32 4, %v4031
    %v4056 = vsel %vm3933, %v4055, %v4031
    %v4057 = vsel %vm3932, %v2528, %v4054
    %v4058 = vsel %vm3932, 0, %v4056
    %v4059 = vmul.f32 %v4057, %v4057
    %v4060 = vmul.f32 %v4059, -0.001358992
    %v4061 = vadd.f32 %v4060, 0.041655596
    %v4062 = vmul.f32 %v4059, %v4061
    %v4063 = vadd.f32 %v4062, -0.4999988
    %v4064 = vmul.f32 %v4059, %v4063
    %v4065 = vadd.f32 1.0, %v4064
    %v4066 = vmul.f32 %v4057, %v4057
    %v4067 = vmul.f32 %v4066, -0.00019511016
    %v4068 = vadd.f32 %v4067, 0.008332121
    %v4069 = vmul.f32 %v4066, %v4068
    %v4070 = vadd.f32 %v4069, -0.16666654
    %v4071 = vmul.f32 %v4066, %v4070
    %v4072 = vadd.f32 %v4071, 1.0
    %v4073 = vmul.f32 %v4072, %v4057
    %vm4074 = vweird.f32 %v2528
    %v4075 = vadd.s32 %v4058, 3
    %v4076 = vand.u32 %v4075, 3
    %vm4077 = vcmp.lt.s32.totalorder %v4076, 2
    %vm4078 = vcmp.eq.s32.totalorder %v4076, 0
    %v4079 = vxor.u32 %v4073, 2147483648
    %v4080 = vsel %vm4078, %v4065, %v4079
    %vm4081 = vcmp.eq.s32.totalorder %v4076, 2
    %v4082 = vxor.u32 %v4065, 2147483648
    %v4083 = vsel %vm4081, %v4082, %v4073
    %v4084 = vsel %vm4077, %v4080, %v4083
    %v4085 = vsel %vm4074, nan, %v4084
    %v4086 = vand.u32 2147483647, %v2493
    %vm4087 = vcmp.le.f32.partialorder %v4086, 0.7853982
    %vm4088 = vcmp.lt.s32.totalorder %v2493, 0
    %v4089 = vand.u32 %v2493, 2139095040
    %v4090 = vshrl.u32 %v4089, 23
    %v4091 = vsub.s32 %v4090, 127
    %v4092 = vand.u32 2147483647, %v2493
    %v4093 = vand.u32 %v4092, 8388607
    %v4094 = vor.u32 %v4093, 8388608
    %v4095 = vsub.s32 0, %v4094
    %v4096 = vadd.s32 %v4091, 1
    %vm4097 = vcmp.gt.s32.totalorder %v4096, 0
    %v4098 = vsel %vm4097, %v4096, 0
    %v4099 = vshrl.u32 %v4098, 5
    %v4100 = vand.u32 %v4098, 31
    %v4101 = vsub.s32 32, %v4100
    %v4102 = vshrl.u32 683565275, %v4101
    %v4103 = vshll.u32 683565275, %v4100
    %v4104 = vshrl.u32 2475754826, %v4101
    %v4105 = vor.u32 %v4103, %v4104
    %v4106 = vshll.u32 2475754826, %v4100
    %v4107 = vshrl.u32 2131351028, %v4101
    %v4108 = vor.u32 %v4106, %v4107
    %v4109 = vshll.u32 2131351028, %v4100
    %v4110 = vshrl.u32 2102212464, %v4101
    %v4111 = vor.u32 %v4109, %v4110
    %v4112 = vshll.u32 2102212464, %v4100
    %v4113 = vshrl.u32 920167782, %v4101
    %v4114 = vor.u32 %v4112, %v4113
    %v4115 = vshll.u32 920167782, %v4100
    %v4116 = vshrl.u32 1326507024, %v4101
    %v4117 = vor.u32 %v4115, %v4116
    %vm4118 = vcmp.lt.s32.totalorder %v4099, 1
    %vm4119 = vcmp.lt.s32.totalorder %v4099, 2
    %vm4120 = vcmp.lt.s32.totalorder %v4099, 3
    %vm4121 = vcmp.lt.s32.totalorder %v4099, 4
    %v4122 = vsel %vm4118, %v4102, %v4105
    %v4123 = vsel %vm4121, %v4111, 2102212464
    %v4124 = vsel %vm4120, %v4108, %v4123
    %v4125 = vsel %vm4119, %v4122, %v4124
    %v4126 = vsel %vm4118, %v4105, %v4108
    %v4127 = vsel %vm4121, %v4114, 920167782
    %v4128 = vsel %vm4120, %v4111, %v4127
    %v4129 = vsel %vm4119, %v4126, %v4128
    %v4130 = vsel %vm4118, %v4108, %v4111
    %v4131 = vsel %vm4121, %v4117, 1326507024
    %v4132 = vsel %vm4120, %v4114, %v4131
    %v4133 = vsel %vm4119, %v4130, %v4132
    %v4134 = vshll.u32 %v4094, 8
    %v4135 = vand.u32 %v4134, 65535
    %v4136 = vshrl.u32 %v4134, 16
    %v4137 = vand.u32 %v4133, 65535
    %v4138 = vshrl.u32 %v4133, 16
    %v4139 = vmul.u32 %v4135, %v4137
    %v4140 = vmul.u32 %v4135, %v4138
    %v4141 = vmul.u32 %v4136, %v4137
    %v4142 = vmul.u32 %v4136, %v4138
    %v4143 = vshll.u32 %v4140, 16
    %v4144 = vshrl.u32 %v4140, 16
    %v4145 = vshll.u32 %v4141, 16
    %v4146 = vshrl.u32 %v4141, 16
    %vm4147 = vc.u32 %v4139, %v4143
    %v4148 = vsel %vm4147, 1, 0
    %v4149 = vadd.s32 %v4139, %v4143
    %v4150 = vadd.s32 %v4142, %v4148
    %vm4151 = vc.u32 %v4149, %v4145
    %v4152 = vsel %vm4151, 1, 0
    %v4153 = vadd.s32 %v4149, %v4145
    %v4154 = vadd.s32 %v4150, %v4152
    %v4155 = vadd.s32 %v4154, %v4144
    %v4156 = vadd.s32 %v4155, %v4146
    %v4157 = vand.u32 %v4134, 65535
    %v4158 = vshrl.u32 %v4134, 16
    %v4159 = vand.u32 %v4129, 65535
    %v4160 = vshrl.u32 %v4129, 16
    %v4161 = vmul.u32 %v4157, %v4159
    %v4162 = vmul.u32 %v4157, %v4160
    %v4163 = vmul.u32 %v4158, %v4159
    %v4164 = vmul.u32 %v4158, %v4160
    %v4165 = vshll.u32 %v4162, 16
    %v4166 = vshrl.u32 %v4162, 16
    %v4167 = vshll.u32 %v4163, 16
    %v4168 = vshrl.u32 %v4163, 16
    %vm4169 = vc.u32 %v4161, %v4165
    %v4170 = vsel %vm4169, 1, 0
    %v4171 = vadd.s32 %v4161, %v4165
    %v4172 = vadd.s32 %v4164, %v4170
    %vm4173 = vc.u32 %v4171, %v4167
    %v4174 = vsel %vm4173, 1, 0
    %v4175 = vadd.s32 %v4171, %v4167
    %v4176 = vadd.s32 %v4172, %v4174
    %v4177 = vadd.s32 %v4176, %v4166
    %v4178 = vadd.s32 %v4177, %v4168
    %v4179 = vmul.u32 %v4134, %v4125
    %v4180 = vadd.s32 %v4156, %v4175
    %vm4181 = vc.u32 %v4156, %v4175
    %v4182 = vadd.s32 %v4178, 1
    %v4183 = vsel %vm4181, %v4182, %v4178
    %v4184 = vadd.s32 %v4179, %v4183
    %v4185 = vadd.s32 %v4184, 536870912
    %v4186 = vshrl.u32 %v4185, 30
    %v4187 = vshll.u32 %v4186, 30
    %v4188 = vsub.s32 %v4184, %v4187
    %vm4189 = vcmp.lt.s32.totalorder %v4188, 0
    %v4190 = vsub.s32 0, %v4188
    %v4191 = vsel %vm4189, %v4190, %v4188
    %v4192 = vclz %v4191
    %v4193 = vsub.s32 %v4192, 2
    %vm4194 = vcmp.gt.s32.totalorder 0, %v4193
    %v4195 = vsel %vm4194, 0, %v4193
    %v4196 = vsub.s32 32, %v4195
    %v4197 = vshll.u32 %v4188, %v4195
    %v4198 = vshrl.u32 %v4180, %v4196
    %v4199 = vor.u32 %v4197, %v4198
    %v4200 = vsub.s32 4294967266, %v4195
    %v4201 = vadd.s32 %v4200, 127
    %v4202 = vshll.u32 %v4201, 23
    %v4203 = vor.u32 4788187, %v4202
    %v4204 = vand.u32 2147483647, %v4203
    %v4206 = vcvt.s32.f32 %v4199
    %v4207 = vmul.f32 %v4206, %v4204
    %v4208 = vxor.u32 %v4207, 2147483648
    %v4209 = vsel %vm4088, %v4208, %v4207
    %v4210 = vsub.s32 4, %v4186
    %v4211 = vsel %vm4088, %v4210, %v4186
    %v4212 = vsel %vm4087, %v2493, %v4209
    %v4213 = vsel %vm4087, 0, %v4211
    %v4214 = vmul.f32 %v4212, %v4212
    %v4215 = vmul.f32 %v4214, -0.001358992
    %v4216 = vadd.f32 %v4215, 0.041655596
    %v4217 = vmul.f32 %v4214, %v4216
    %v4218 = vadd.f32 %v4217, -0.4999988
    %v4219 = vmul.f32 %v4214, %v4218
    %v4220 = vadd.f32 1.0, %v4219
    %v4221 = vmul.f32 %v4212, %v4212
    %v4222 = vmul.f32 %v4221, -0.00019511016
    %v4223 = vadd.f32 %v4222, 0.008332121
    %v4224 = vmul.f32 %v4221, %v4223
    %v4225 = vadd.f32 %v4224, -0.16666654
    %v4226 = vmul.f32 %v4221, %v4225
    %v4227 = vadd.f32 %v4226, 1.0
    %v4228 = vmul.f32 %v4227, %v4212
    %vm4229 = vweird.f32 %v2493
    %v4230 = vadd.s32 %v4213, 3
    %v4231 = vand.u32 %v4230, 3
    %vm4232 = vcmp.lt.s32.totalorder %v4231, 2
    %vm4233 = vcmp.eq.s32.totalorder %v4231, 0
    %v4234 = vxor.u32 %v4228, 2147483648
    %v4235 = vsel %vm4233, %v4220, %v4234
    %vm4236 = vcmp.eq.s32.totalorder %v4231, 2
    %v4237 = vxor.u32 %v4220, 2147483648
    %v4238 = vsel %vm4236, %v4237, %v4228
    %v4239 = vsel %vm4232, %v4235, %v4238
    %v4240 = vsel %vm4229, nan, %v4239
    %v4241 = vand.u32 2147483647, %v2531
    %vm4242 = vcmp.le.f32.partialorder %v4241, 0.7853982
    %vm4243 = vcmp.lt.s32.totalorder %v2531, 0
    %v4244 = vand.u32 %v2531, 2139095040
    %v4245 = vshrl.u32 %v4244, 23
    %v4246 = vsub.s32 %v4245, 127
    %v4247 = vand.u32 2147483647, %v2531
    %v4248 = vand.u32 %v4247, 8388607
    %v4249 = vor.u32 %v4248, 8388608
    %v4250 = vsub.s32 0, %v4249
    %v4251 = vadd.s32 %v4246, 1
    %vm4252 = vcmp.gt.s32.totalorder %v4251, 0
    %v4253 = vsel %vm4252, %v4251, 0
    %v4254 = vshrl.u32 %v4253, 5
    %v4255 = vand.u32 %v4253, 31
    %v4256 = vsub.s32 32, %v4255
    %v4257 = vshrl.u32 683565275, %v4256
    %v4258 = vshll.u32 683565275, %v4255
    %v4259 = vshrl.u32 2475754826, %v4256
    %v4260 = vor.u32 %v4258, %v4259
    %v4261 = vshll.u32 2475754826, %v4255
    %v4262 = vshrl.u32 2131351028, %v4256
    %v4263 = vor.u32 %v4261, %v4262
    %v4264 = vshll.u32 2131351028, %v4255
    %v4265 = vshrl.u32 2102212464, %v4256
    %v4266 = vor.u32 %v4264, %v4265
    %v4267 = vshll.u32 2102212464, %v4255
    %v4268 = vshrl.u32 920167782, %v4256
    %v4269 = vor.u32 %v4267, %v4268
    %v4270 = vshll.u32 920167782, %v4255
    %v4271 = vshrl.u32 1326507024, %v4256
    %v4272 = vor.u32 %v4270, %v4271
    %vm4273 = vcmp.lt.s32.totalorder %v4254, 1
    %vm4274 = vcmp.lt.s32.totalorder %v4254, 2
    %vm4275 = vcmp.lt.s32.totalorder %v4254, 3
    %vm4276 = vcmp.lt.s32.totalorder %v4254, 4
    %v4277 = vsel %vm4273, %v4257, %v4260
    %v4278 = vsel %vm4276, %v4266, 2102212464
    %v4279 = vsel %vm4275, %v4263, %v4278
    %v4280 = vsel %vm4274, %v4277, %v4279
    %v4281 = vsel %vm4273, %v4260, %v4263
    %v4282 = vsel %vm4276, %v4269, 920167782
    %v4283 = vsel %vm4275, %v4266, %v4282
    %v4284 = vsel %vm4274, %v4281, %v4283
    %v4285 = vsel %vm4273, %v4263, %v4266
    %v4286 = vsel %vm4276, %v4272, 1326507024
    %v4287 = vsel %vm4275, %v4269, %v4286
    %v4288 = vsel %vm4274, %v4285, %v4287
    %v4289 = vshll.u32 %v4249, 8
    %v4290 = vand.u32 %v4289, 65535
    %v4291 = vshrl.u32 %v4289, 16
    %v4292 = vand.u32 %v4288, 65535
    %v4293 = vshrl.u32 %v4288, 16
    %v4294 = vmul.u32 %v4290, %v4292
    %v4295 = vmul.u32 %v4290, %v4293
    %v4296 = vmul.u32 %v4291, %v4292
    %v4297 = vmul.u32 %v4291, %v4293
    %v4298 = vshll.u32 %v4295, 16
    %v4299 = vshrl.u32 %v4295, 16
    %v4300 = vshll.u32 %v4296, 16
    %v4301 = vshrl.u32 %v4296, 16
    %vm4302 = vc.u32 %v4294, %v4298
    %v4303 = vsel %vm4302, 1, 0
    %v4304 = vadd.s32 %v4294, %v4298
    %v4305 = vadd.s32 %v4297, %v4303
    %vm4306 = vc.u32 %v4304, %v4300
    %v4307 = vsel %vm4306, 1, 0
    %v4308 = vadd.s32 %v4304, %v4300
    %v4309 = vadd.s32 %v4305, %v4307
    %v4310 = vadd.s32 %v4309, %v4299
    %v4311 = vadd.s32 %v4310, %v4301
    %v4312 = vand.u32 %v4289, 65535
    %v4313 = vshrl.u32 %v4289, 16
    %v4314 = vand.u32 %v4284, 65535
    %v4315 = vshrl.u32 %v4284, 16
    %v4316 = vmul.u32 %v4312, %v4314
    %v4317 = vmul.u32 %v4312, %v4315
    %v4318 = vmul.u32 %v4313, %v4314
    %v4319 = vmul.u32 %v4313, %v4315
    %v4320 = vshll.u32 %v4317, 16
    %v4321 = vshrl.u32 %v4317, 16
    %v4322 = vshll.u32 %v4318, 16
    %v4323 = vshrl.u32 %v4318, 16
    %vm4324 = vc.u32 %v4316, %v4320
    %v4325 = vsel %vm4324, 1, 0
    %v4326 = vadd.s32 %v4316, %v4320
    %v4327 = vadd.s32 %v4319, %v4325
    %vm4328 = vc.u32 %v4326, %v4322
    %v4329 = vsel %vm4328, 1, 0
    %v4330 = vadd.s32 %v4326, %v4322
    %v4331 = vadd.s32 %v4327, %v4329
    %v4332 = vadd.s32 %v4331, %v4321
    %v4333 = vadd.s32 %v4332, %v4323
    %v4334 = vmul.u32 %v4289, %v4280
    %v4335 = vadd.s32 %v4311, %v4330
    %vm4336 = vc.u32 %v4311, %v4330
    %v4337 = vadd.s32 %v4333, 1
    %v4338 = vsel %vm4336, %v4337, %v4333
    %v4339 = vadd.s32 %v4334, %v4338
    %v4340 = vadd.s32 %v4339, 536870912
    %v4341 = vshrl.u32 %v4340, 30
    %v4342 = vshll.u32 %v4341, 30
    %v4343 = vsub.s32 %v4339, %v4342
    %vm4344 = vcmp.lt.s32.totalorder %v4343, 0
    %v4345 = vsub.s32 0, %v4343
    %v4346 = vsel %vm4344, %v4345, %v4343
    %v4347 = vclz %v4346
    %v4348 = vsub.s32 %v4347, 2
    %vm4349 = vcmp.gt.s32.totalorder 0, %v4348
    %v4350 = vsel %vm4349, 0, %v4348
    %v4351 = vsub.s32 32, %v4350
    %v4352 = vshll.u32 %v4343, %v4350
    %v4353 = vshrl.u32 %v4335, %v4351
    %v4354 = vor.u32 %v4352, %v4353
    %v4355 = vsub.s32 4294967266, %v4350
    %v4356 = vadd.s32 %v4355, 127
    %v4357 = vshll.u32 %v4356, 23
    %v4358 = vor.u32 4788187, %v4357
    %v4359 = vand.u32 2147483647, %v4358
    %v4361 = vcvt.s32.f32 %v4354
    %v4362 = vmul.f32 %v4361, %v4359
    %v4363 = vxor.u32 %v4362, 2147483648
    %v4364 = vsel %vm4243, %v4363, %v4362
    %v4365 = vsub.s32 4, %v4341
    %v4366 = vsel %vm4243, %v4365, %v4341
    %v4367 = vsel %vm4242, %v2531, %v4364
    %v4368 = vsel %vm4242, 0, %v4366
    %v4369 = vmul.f32 %v4367, %v4367
    %v4370 = vmul.f32 %v4369, -0.001358992
    %v4371 = vadd.f32 %v4370, 0.041655596
    %v4372 = vmul.f32 %v4369, %v4371
    %v4373 = vadd.f32 %v4372, -0.4999988
    %v4374 = vmul.f32 %v4369, %v4373
    %v4375 = vadd.f32 1.0, %v4374
    %v4376 = vmul.f32 %v4367, %v4367
    %v4377 = vmul.f32 %v4376, -0.00019511016
    %v4378 = vadd.f32 %v4377, 0.008332121
    %v4379 = vmul.f32 %v4376, %v4378
    %v4380 = vadd.f32 %v4379, -0.16666654
    %v4381 = vmul.f32 %v4376, %v4380
    %v4382 = vadd.f32 %v4381, 1.0
    %v4383 = vmul.f32 %v4382, %v4367
    %vm4384 = vweird.f32 %v2531
    %v4385 = vadd.s32 %v4368, 3
    %v4386 = vand.u32 %v4385, 3
    %vm4387 = vcmp.lt.s32.totalorder %v4386, 2
    %vm4388 = vcmp.eq.s32.totalorder %v4386, 0
    %v4389 = vxor.u32 %v4383, 2147483648
    %v4390 = vsel %vm4388, %v4375, %v4389
    %vm4391 = vcmp.eq.s32.totalorder %v4386, 2
    %v4392 = vxor.u32 %v4375, 2147483648
    %v4393 = vsel %vm4391, %v4392, %v4383
    %v4394 = vsel %vm4387, %v4390, %v4393
    %v4395 = vsel %vm4384, nan, %v4394
    %v4396 = vand.u32 2147483647, %v2496
    %vm4397 = vcmp.le.f32.partialorder %v4396, 0.7853982
    %vm4398 = vcmp.lt.s32.totalorder %v2496, 0
    %v4399 = vand.u32 %v2496, 2139095040
    %v4400 = vshrl.u32 %v4399, 23
    %v4401 = vsub.s32 %v4400, 127
    %v4402 = vand.u32 2147483647, %v2496
    %v4403 = vand.u32 %v4402, 8388607
    %v4404 = vor.u32 %v4403, 8388608
    %v4405 = vsub.s32 0, %v4404
    %v4406 = vadd.s32 %v4401, 1
    %vm4407 = vcmp.gt.s32.totalorder %v4406, 0
    %v4408 = vsel %vm4407, %v4406, 0
    %v4409 = vshrl.u32 %v4408, 5
    %v4410 = vand.u32 %v4408, 31
    %v4411 = vsub.s32 32, %v4410
    %v4412 = vshrl.u32 683565275, %v4411
    %v4413 = vshll.u32 683565275, %v4410
    %v4414 = vshrl.u32 2475754826, %v4411
    %v4415 = vor.u32 %v4413, %v4414
    %v4416 = vshll.u32 2475754826, %v4410
    %v4417 = vshrl.u32 2131351028, %v4411
    %v4418 = vor.u32 %v4416, %v4417
    %v4419 = vshll.u32 2131351028, %v4410
    %v4420 = vshrl.u32 2102212464, %v4411
    %v4421 = vor.u32 %v4419, %v4420
    %v4422 = vshll.u32 2102212464, %v4410
    %v4423 = vshrl.u32 920167782, %v4411
    %v4424 = vor.u32 %v4422, %v4423
    %v4425 = vshll.u32 920167782, %v4410
    %v4426 = vshrl.u32 1326507024, %v4411
    %v4427 = vor.u32 %v4425, %v4426
    %vm4428 = vcmp.lt.s32.totalorder %v4409, 1
    %vm4429 = vcmp.lt.s32.totalorder %v4409, 2
    %vm4430 = vcmp.lt.s32.totalorder %v4409, 3
    %vm4431 = vcmp.lt.s32.totalorder %v4409, 4
    %v4432 = vsel %vm4428, %v4412, %v4415
    %v4433 = vsel %vm4431, %v4421, 2102212464
    %v4434 = vsel %vm4430, %v4418, %v4433
    %v4435 = vsel %vm4429, %v4432, %v4434
    %v4436 = vsel %vm4428, %v4415, %v4418
    %v4437 = vsel %vm4431, %v4424, 920167782
    %v4438 = vsel %vm4430, %v4421, %v4437
    %v4439 = vsel %vm4429, %v4436, %v4438
    %v4440 = vsel %vm4428, %v4418, %v4421
    %v4441 = vsel %vm4431, %v4427, 1326507024
    %v4442 = vsel %vm4430, %v4424, %v4441
    %v4443 = vsel %vm4429, %v4440, %v4442
    %v4444 = vshll.u32 %v4404, 8
    %v4445 = vand.u32 %v4444, 65535
    %v4446 = vshrl.u32 %v4444, 16
    %v4447 = vand.u32 %v4443, 65535
    %v4448 = vshrl.u32 %v4443, 16
    %v4449 = vmul.u32 %v4445, %v4447
    %v4450 = vmul.u32 %v4445, %v4448
    %v4451 = vmul.u32 %v4446, %v4447
    %v4452 = vmul.u32 %v4446, %v4448
    %v4453 = vshll.u32 %v4450, 16
    %v4454 = vshrl.u32 %v4450, 16
    %v4455 = vshll.u32 %v4451, 16
    %v4456 = vshrl.u32 %v4451, 16
    %vm4457 = vc.u32 %v4449, %v4453
    %v4458 = vsel %vm4457, 1, 0
    %v4459 = vadd.s32 %v4449, %v4453
    %v4460 = vadd.s32 %v4452, %v4458
    %vm4461 = vc.u32 %v4459, %v4455
    %v4462 = vsel %vm4461, 1, 0
    %v4463 = vadd.s32 %v4459, %v4455
    %v4464 = vadd.s32 %v4460, %v4462
    %v4465 = vadd.s32 %v4464, %v4454
    %v4466 = vadd.s32 %v4465, %v4456
    %v4467 = vand.u32 %v4444, 65535
    %v4468 = vshrl.u32 %v4444, 16
    %v4469 = vand.u32 %v4439, 65535
    %v4470 = vshrl.u32 %v4439, 16
    %v4471 = vmul.u32 %v4467, %v4469
    %v4472 = vmul.u32 %v4467, %v4470
    %v4473 = vmul.u32 %v4468, %v4469
    %v4474 = vmul.u32 %v4468, %v4470
    %v4475 = vshll.u32 %v4472, 16
    %v4476 = vshrl.u32 %v4472, 16
    %v4477 = vshll.u32 %v4473, 16
    %v4478 = vshrl.u32 %v4473, 16
    %vm4479 = vc.u32 %v4471, %v4475
    %v4480 = vsel %vm4479, 1, 0
    %v4481 = vadd.s32 %v4471, %v4475
    %v4482 = vadd.s32 %v4474, %v4480
    %vm4483 = vc.u32 %v4481, %v4477
    %v4484 = vsel %vm4483, 1, 0
    %v4485 = vadd.s32 %v4481, %v4477
    %v4486 = vadd.s32 %v4482, %v4484
    %v4487 = vadd.s32 %v4486, %v4476
    %v4488 = vadd.s32 %v4487, %v4478
    %v4489 = vmul.u32 %v4444, %v4435
    %v4490 = vadd.s32 %v4466, %v4485
    %vm4491 = vc.u32 %v4466, %v4485
    %v4492 = vadd.s32 %v4488, 1
    %v4493 = vsel %vm4491, %v4492, %v4488
    %v4494 = vadd.s32 %v4489, %v4493
    %v4495 = vadd.s32 %v4494, 536870912
    %v4496 = vshrl.u32 %v4495, 30
    %v4497 = vshll.u32 %v4496, 30
    %v4498 = vsub.s32 %v4494, %v4497
    %vm4499 = vcmp.lt.s32.totalorder %v4498, 0
    %v4500 = vsub.s32 0, %v4498
    %v4501 = vsel %vm4499, %v4500, %v4498
    %v4502 = vclz %v4501
    %v4503 = vsub.s32 %v4502, 2
    %vm4504 = vcmp.gt.s32.totalorder 0, %v4503
    %v4505 = vsel %vm4504, 0, %v4503
    %v4506 = vsub.s32 32, %v4505
    %v4507 = vshll.u32 %v4498, %v4505
    %v4508 = vshrl.u32 %v4490, %v4506
    %v4509 = vor.u32 %v4507, %v4508
    %v4510 = vsub.s32 4294967266, %v4505
    %v4511 = vadd.s32 %v4510, 127
    %v4512 = vshll.u32 %v4511, 23
    %v4513 = vor.u32 4788187, %v4512
    %v4514 = vand.u32 2147483647, %v4513
    %v4516 = vcvt.s32.f32 %v4509
    %v4517 = vmul.f32 %v4516, %v4514
    %v4518 = vxor.u32 %v4517, 2147483648
    %v4519 = vsel %vm4398, %v4518, %v4517
    %v4520 = vsub.s32 4, %v4496
    %v4521 = vsel %vm4398, %v4520, %v4496
    %v4522 = vsel %vm4397, %v2496, %v4519
    %v4523 = vsel %vm4397, 0, %v4521
    %v4524 = vmul.f32 %v4522, %v4522
    %v4525 = vmul.f32 %v4524, -0.001358992
    %v4526 = vadd.f32 %v4525, 0.041655596
    %v4527 = vmul.f32 %v4524, %v4526
    %v4528 = vadd.f32 %v4527, -0.4999988
    %v4529 = vmul.f32 %v4524, %v4528
    %v4530 = vadd.f32 1.0, %v4529
    %v4531 = vmul.f32 %v4522, %v4522
    %v4532 = vmul.f32 %v4531, -0.00019511016
    %v4533 = vadd.f32 %v4532, 0.008332121
    %v4534 = vmul.f32 %v4531, %v4533
    %v4535 = vadd.f32 %v4534, -0.16666654
    %v4536 = vmul.f32 %v4531, %v4535
    %v4537 = vadd.f32 %v4536, 1.0
    %v4538 = vmul.f32 %v4537, %v4522
    %vm4539 = vweird.f32 %v2496
    %v4540 = vadd.s32 %v4523, 3
    %v4541 = vand.u32 %v4540, 3
    %vm4542 = vcmp.lt.s32.totalorder %v4541, 2
    %vm4543 = vcmp.eq.s32.totalorder %v4541, 0
    %v4544 = vxor.u32 %v4538, 2147483648
    %v4545 = vsel %vm4543, %v4530, %v4544
    %vm4546 = vcmp.eq.s32.totalorder %v4541, 2
    %v4547 = vxor.u32 %v4530, 2147483648
    %v4548 = vsel %vm4546, %v4547, %v4538
    %v4549 = vsel %vm4542, %v4545, %v4548
    %v4550 = vsel %vm4539, nan, %v4549
    %v4551 = vand.u32 2147483647, %v2534
    %vm4552 = vcmp.le.f32.partialorder %v4551, 0.7853982
    %vm4553 = vcmp.lt.s32.totalorder %v2534, 0
    %v4554 = vand.u32 %v2534, 2139095040
    %v4555 = vshrl.u32 %v4554, 23
    %v4556 = vsub.s32 %v4555, 127
    %v4557 = vand.u32 2147483647, %v2534
    %v4558 = vand.u32 %v4557, 8388607
    %v4559 = vor.u32 %v4558, 8388608
    %v4560 = vsub.s32 0, %v4559
    %v4561 = vadd.s32 %v4556, 1
    %vm4562 = vcmp.gt.s32.totalorder %v4561, 0
    %v4563 = vsel %vm4562, %v4561, 0
    %v4564 = vshrl.u32 %v4563, 5
    %v4565 = vand.u32 %v4563, 31
    %v4566 = vsub.s32 32, %v4565
    %v4567 = vshrl.u32 683565275, %v4566
    %v4568 = vshll.u32 683565275, %v4565
    %v4569 = vshrl.u32 2475754826, %v4566
    %v4570 = vor.u32 %v4568, %v4569
    %v4571 = vshll.u32 2475754826, %v4565
    %v4572 = vshrl.u32 2131351028, %v4566
    %v4573 = vor.u32 %v4571, %v4572
    %v4574 = vshll.u32 2131351028, %v4565
    %v4575 = vshrl.u32 2102212464, %v4566
    %v4576 = vor.u32 %v4574, %v4575
    %v4577 = vshll.u32 2102212464, %v4565
    %v4578 = vshrl.u32 920167782, %v4566
    %v4579 = vor.u32 %v4577, %v4578
    %v4580 = vshll.u32 920167782, %v4565
    %v4581 = vshrl.u32 1326507024, %v4566
    %v4582 = vor.u32 %v4580, %v4581
    %vm4583 = vcmp.lt.s32.totalorder %v4564, 1
    %vm4584 = vcmp.lt.s32.totalorder %v4564, 2
    %vm4585 = vcmp.lt.s32.totalorder %v4564, 3
    %vm4586 = vcmp.lt.s32.totalorder %v4564, 4
    %v4587 = vsel %vm4583, %v4567, %v4570
    %v4588 = vsel %vm4586, %v4576, 2102212464
    %v4589 = vsel %vm4585, %v4573, %v4588
    %v4590 = vsel %vm4584, %v4587, %v4589
    %v4591 = vsel %vm4583, %v4570, %v4573
    %v4592 = vsel %vm4586, %v4579, 920167782
    %v4593 = vsel %vm4585, %v4576, %v4592
    %v4594 = vsel %vm4584, %v4591, %v4593
    %v4595 = vsel %vm4583, %v4573, %v4576
    %v4596 = vsel %vm4586, %v4582, 1326507024
    %v4597 = vsel %vm4585, %v4579, %v4596
    %v4598 = vsel %vm4584, %v4595, %v4597
    %v4599 = vshll.u32 %v4559, 8
    %v4600 = vand.u32 %v4599, 65535
    %v4601 = vshrl.u32 %v4599, 16
    %v4602 = vand.u32 %v4598, 65535
    %v4603 = vshrl.u32 %v4598, 16
    %v4604 = vmul.u32 %v4600, %v4602
    %v4605 = vmul.u32 %v4600, %v4603
    %v4606 = vmul.u32 %v4601, %v4602
    %v4607 = vmul.u32 %v4601, %v4603
    %v4608 = vshll.u32 %v4605, 16
    %v4609 = vshrl.u32 %v4605, 16
    %v4610 = vshll.u32 %v4606, 16
    %v4611 = vshrl.u32 %v4606, 16
    %vm4612 = vc.u32 %v4604, %v4608
    %v4613 = vsel %vm4612, 1, 0
    %v4614 = vadd.s32 %v4604, %v4608
    %v4615 = vadd.s32 %v4607, %v4613
    %vm4616 = vc.u32 %v4614, %v4610
    %v4617 = vsel %vm4616, 1, 0
    %v4618 = vadd.s32 %v4614, %v4610
    %v4619 = vadd.s32 %v4615, %v4617
    %v4620 = vadd.s32 %v4619, %v4609
    %v4621 = vadd.s32 %v4620, %v4611
    %v4622 = vand.u32 %v4599, 65535
    %v4623 = vshrl.u32 %v4599, 16
    %v4624 = vand.u32 %v4594, 65535
    %v4625 = vshrl.u32 %v4594, 16
    %v4626 = vmul.u32 %v4622, %v4624
    %v4627 = vmul.u32 %v4622, %v4625
    %v4628 = vmul.u32 %v4623, %v4624
    %v4629 = vmul.u32 %v4623, %v4625
    %v4630 = vshll.u32 %v4627, 16
    %v4631 = vshrl.u32 %v4627, 16
    %v4632 = vshll.u32 %v4628, 16
    %v4633 = vshrl.u32 %v4628, 16
    %vm4634 = vc.u32 %v4626, %v4630
    %v4635 = vsel %vm4634, 1, 0
    %v4636 = vadd.s32 %v4626, %v4630
    %v4637 = vadd.s32 %v4629, %v4635
    %vm4638 = vc.u32 %v4636, %v4632
    %v4639 = vsel %vm4638, 1, 0
    %v4640 = vadd.s32 %v4636, %v4632
    %v4641 = vadd.s32 %v4637, %v4639
    %v4642 = vadd.s32 %v4641, %v4631
    %v4643 = vadd.s32 %v4642, %v4633
    %v4644 = vmul.u32 %v4599, %v4590
    %v4645 = vadd.s32 %v4621, %v4640
    %vm4646 = vc.u32 %v4621, %v4640
    %v4647 = vadd.s32 %v4643, 1
    %v4648 = vsel %vm4646, %v4647, %v4643
    %v4649 = vadd.s32 %v4644, %v4648
    %v4650 = vadd.s32 %v4649, 536870912
    %v4651 = vshrl.u32 %v4650, 30
    %v4652 = vshll.u32 %v4651, 30
    %v4653 = vsub.s32 %v4649, %v4652
    %vm4654 = vcmp.lt.s32.totalorder %v4653, 0
    %v4655 = vsub.s32 0, %v4653
    %v4656 = vsel %vm4654, %v4655, %v4653
    %v4657 = vclz %v4656
    %v4658 = vsub.s32 %v4657, 2
    %vm4659 = vcmp.gt.s32.totalorder 0, %v4658
    %v4660 = vsel %vm4659, 0, %v4658
    %v4661 = vsub.s32 32, %v4660
    %v4662 = vshll.u32 %v4653, %v4660
    %v4663 = vshrl.u32 %v4645, %v4661
    %v4664 = vor.u32 %v4662, %v4663
    %v4665 = vsub.s32 4294967266, %v4660
    %v4666 = vadd.s32 %v4665, 127
    %v4667 = vshll.u32 %v4666, 23
    %v4668 = vor.u32 4788187, %v4667
    %v4669 = vand.u32 2147483647, %v4668
    %v4671 = vcvt.s32.f32 %v4664
    %v4672 = vmul.f32 %v4671, %v4669
    %v4673 = vxor.u32 %v4672, 2147483648
    %v4674 = vsel %vm4553, %v4673, %v4672
    %v4675 = vsub.s32 4, %v4651
    %v4676 = vsel %vm4553, %v4675, %v4651
    %v4677 = vsel %vm4552, %v2534, %v4674
    %v4678 = vsel %vm4552, 0, %v4676
    %v4679 = vmul.f32 %v4677, %v4677
    %v4680 = vmul.f32 %v4679, -0.001358992
    %v4681 = vadd.f32 %v4680, 0.041655596
    %v4682 = vmul.f32 %v4679, %v4681
    %v4683 = vadd.f32 %v4682, -0.4999988
    %v4684 = vmul.f32 %v4679, %v4683
    %v4685 = vadd.f32 1.0, %v4684
    %v4686 = vmul.f32 %v4677, %v4677
    %v4687 = vmul.f32 %v4686, -0.00019511016
    %v4688 = vadd.f32 %v4687, 0.008332121
    %v4689 = vmul.f32 %v4686, %v4688
    %v4690 = vadd.f32 %v4689, -0.16666654
    %v4691 = vmul.f32 %v4686, %v4690
    %v4692 = vadd.f32 %v4691, 1.0
    %v4693 = vmul.f32 %v4692, %v4677
    %vm4694 = vweird.f32 %v2534
    %v4695 = vadd.s32 %v4678, 3
    %v4696 = vand.u32 %v4695, 3
    %vm4697 = vcmp.lt.s32.totalorder %v4696, 2
    %vm4698 = vcmp.eq.s32.totalorder %v4696, 0
    %v4699 = vxor.u32 %v4693, 2147483648
    %v4700 = vsel %vm4698, %v4685, %v4699
    %vm4701 = vcmp.eq.s32.totalorder %v4696, 2
    %v4702 = vxor.u32 %v4685, 2147483648
    %v4703 = vsel %vm4701, %v4702, %v4693
    %v4704 = vsel %vm4697, %v4700, %v4703
    %v4705 = vsel %vm4694, nan, %v4704
    %v4706 = vld [vmem:[%s6] sm:$0x1]
    %v4707 = vld [vmem:[#allocation2] sm:$0x1]
    %4709 = vset.pattern.permute.xlu0 0
    %4710 = vperm.xlu0 %4709, %v4707
    %v4711 = vpop.permute.xlu0 %4710
    %v4713 = vperm.slane %v4711, 0
    %v4715 = vsel %vm2431, %v4706, 0
    %v4718 = vsel %vm2453, %v4550, 0
    %v4721 = vsel %vm2453, %v4705, 0
    %4723 = vmatpush.msra.mxu0 0.0
    %4724 = vmatpush.msra.mxu0 0.0
    %4725 = vmatpush.msra.mxu0 0.0
    %4726 = vmatpush.msra.mxu0 0.0
    %4727 = vmatpush.msra.mxu0 0.0
    %4728 = vmatpush.msra.mxu0 0.0
    %4729 = vmatpush.msra.mxu0 0.0
    %4730 = vmatpush.msra.mxu0 0.0
    %4731 = vmatpush.msra.mxu0 0.0
    %4732 = vmatpush.msra.mxu0 %v4718
    %4733 = vmatpush.msra.mxu0 %v4240
    %4734 = vmatpush.msra.mxu0 %v3930
    %4735 = vmatpush.msra.mxu0 %v3620
    %4736 = vmatpush.msra.mxu0 %v3310
    %4737 = vmatpush.msra.mxu0 %v3000
    %4738 = vmatpush.msra.mxu0 %v2690
    %4739 = vmatmul.f32.gmra.mxu0 %v4715
    %v4740 = vpop.f32.mrf.mxu0
    %v4741 = vadd.f32 %v4713, %v4740
    %4742 = vdwg.mxu0
    %4743 = vmatpush.msra.mxu0 0.0
    %4744 = vmatpush.msra.mxu0 0.0
    %4745 = vmatpush.msra.mxu0 0.0
    %4746 = vmatpush.msra.mxu0 0.0
    %4747 = vmatpush.msra.mxu0 0.0
    %4748 = vmatpush.msra.mxu0 0.0
    %4749 = vmatpush.msra.mxu0 0.0
    %4750 = vmatpush.msra.mxu0 0.0
    %4751 = vmatpush.msra.mxu0 0.0
    %4752 = vmatpush.msra.mxu0 %v4721
    %4753 = vmatpush.msra.mxu0 %v4395
    %4754 = vmatpush.msra.mxu0 %v4085
    %4755 = vmatpush.msra.mxu0 %v3775
    %4756 = vmatpush.msra.mxu0 %v3465
    %4757 = vmatpush.msra.mxu0 %v3155
    %4758 = vmatpush.msra.mxu0 %v2845
    %4759 = vmatmul.f32.gmra.mxu0 %v4715
    %v4760 = vpop.f32.mrf.mxu0
    %v4761 = vadd.f32 %v4713, %v4760
    %4762 = vdwg.mxu0
    %v4765 = vrot.slane %v4761, 7
    %vm4766 = vcmask 1040384
    %v4767 = vsel %vm4766, %v4741, %v4765
    %v4769 = vlaneseq
    %vm4770 = vcmp.ge.s32.totalorder %v4769, 0
    %vm4771 = vcmp.lt.s32.totalorder %v4769, 256
    %vm4772 = vmand %vm4770, %vm4771
    %4773 = vst.msk [vmem:[#allocation3] sm:$0x3] %vm4772, %v4767
    // Predicated region
    $region34: #{tpu_custom_call.1} parent=1 // pred_check
      _
    $region35: #{tpu_custom_call.1} parent=1 // pred_check_branch
      %4775 = sbr.rel (0) target = $region37
    $region36: #{tpu_custom_call.1} parent=1 // pred_region
      %4777 = vsyncadd [#allocation4], 0
      %s4779 = sshll.u32 [#allocation3], 4
      %s4780 = int_to_ptr.vmem [resolvable:$true] %s4779
      %s4781 = sshll.u32 %s8, 4
      %s4782 = int_to_ptr.hbm [resolvable:$true] %s4781
      %4784 = dma.vmem_to_hbm [thread:$0]  %s4780, 32, %s4782, [#allocation4]
    $region37: #{tpu_custom_call.1} parent=1 // pred_fallthru
      _
    // Predicated region
    $region38: #{tpu_custom_call.1} parent=1 // pred_check
      _
    $region39: #{tpu_custom_call.1} parent=1 // pred_check_branch
      %4786 = sbr.rel (0) target = $region41
    $region40: #{tpu_custom_call.1} parent=1 // pred_region
      %4788 = dma.done [#allocation4], 32
    $region41: #{tpu_custom_call.1} parent=1 // pred_fallthru
      _
    %4789 = vsyncpa [#allocation4], 1

</llo_original>
